<compile_context>
chip_gen: v7x
topology: tpu7x:2x2x1
jax: 0.10.0
libtpu: 0.0.40
codegen_flags: <defaults>
</compile_context>

<pallas_src>
import functools
import math

import jax
import jax.numpy as jnp
from jax.experimental import pallas as pl
from jax.experimental.pallas import tpu as pltpu


_NEG_INF = -1e30  # safe "minus infinity" (diagonal rows are never fully masked)


def _flash_attn_kernel(
    x_q_ref, x_kv_ref, wq_ref, wkv_ref, bq_ref, bkv_ref, wproj_ref, bproj_ref,
    o_ref,
    q_scratch, m_scratch, l_scratch, acc_scratch,
    *, n_head, head_dim, block_q, block_kv, compute_dtype):
  """One (batch, q-tile, kv-tile) grid step of fused causal attention.

  x_q_ref   : (1, block_q,  E)  query-row slab of the input (bf16)
  x_kv_ref  : (1, block_kv, E)  key/value-row slab of the input (bf16)
  wq_ref    : (E, E)            pre-transposed Q projection (bf16, scale folded)
  wkv_ref   : (E, 2E)           pre-transposed fused K|V projection (bf16)
  bq_ref    : (1, E)   f32      Q bias (scale folded)
  bkv_ref   : (1, 2E)  f32      fused K|V bias
  wproj_ref : (E, E)            pre-transposed output projection (bf16)
  bproj_ref : (1, E)   f32      output bias
  o_ref     : (1, block_q, E)   output slab
  scratch   : q heads (H,tq,D) bf16; m,l (H,tq,1) f32; acc (H,tq,D) f32
  """
  H, D = n_head, head_dim
  E = H * D
  i = pl.program_id(1)          # query-tile index
  j = pl.program_id(2)          # key/value-tile index

  q_end = (i + 1) * block_q                         # exclusive global row bound
  processed = j * block_kv < q_end                  # causal: skip upper tiles
  is_last_kv = jnp.logical_and(processed, (j + 1) * block_kv >= q_end)

  def split_heads(x):           # (t, E) -> (H, t, D) via static lane slices
    return jnp.concatenate(
        [x[None, :, h * D:(h + 1) * D] for h in range(H)], axis=0)

  @pl.when(j == 0)
  def _init():
    # Q projection for this query tile: done once per q tile, cached in VMEM.
    x_q = x_q_ref[0].astype(compute_dtype)                          # (tq, E)
    q = jnp.dot(x_q, wq_ref[...], preferred_element_type=jnp.float32)
    q = (q + bq_ref[...]).astype(compute_dtype)                     # (tq, E)
    q_scratch[...] = split_heads(q)                                 # (H, tq, D)
    m_scratch[...] = jnp.full_like(m_scratch, _NEG_INF)
    l_scratch[...] = jnp.zeros_like(l_scratch)
    acc_scratch[...] = jnp.zeros_like(acc_scratch)

  @pl.when(processed)
  def _compute():
    # Fused K|V projection for this kv tile: one (tk, E) @ (E, 2E) matmul.
    x_kv = x_kv_ref[0].astype(compute_dtype)                        # (tk, E)
    kv = jnp.dot(x_kv, wkv_ref[...], preferred_element_type=jnp.float32)
    kv = (kv + bkv_ref[...]).astype(compute_dtype)                  # (tk, 2E)
    k_h = split_heads(kv[:, :E])                                    # (H, tk, D)
    v_h = split_heads(kv[:, E:])                                    # (H, tk, D)
    q_h = q_scratch[...]                                            # (H, tq, D)

    # Scores for all heads in one batched contraction (scale pre-folded in q).
    s = jnp.einsum('htd,hsd->hts', q_h, k_h,
                   preferred_element_type=jnp.float32)              # (H,tq,tk)

    # Causal mask with global indices; only diagonal tiles are affected
    # (strictly-lower tiles pass through; strictly-upper tiles were skipped).
    row = i * block_q + jax.lax.broadcasted_iota(
        jnp.int32, (block_q, block_kv), 0)
    col = j * block_kv + jax.lax.broadcasted_iota(
        jnp.int32, (block_q, block_kv), 1)
    s = jnp.where((col <= row)[None, :, :], s, _NEG_INF)

    # Online softmax update; statistics kept in f32.
    m_prev = m_scratch[...]                                         # (H, tq, 1)
    m_new = jnp.maximum(m_prev, jnp.max(s, axis=-1, keepdims=True))
    alpha = jnp.exp(m_prev - m_new)
    p = jnp.exp(s - m_new)                                          # (H,tq,tk)
    l_scratch[...] = alpha * l_scratch[...] + jnp.sum(p, axis=-1, keepdims=True)
    acc_scratch[...] = alpha * acc_scratch[...] + jnp.einsum(
        'hts,hsd->htd', p.astype(compute_dtype), v_h,
        preferred_element_type=jnp.float32)                         # (H,tq,D)
    m_scratch[...] = m_new

  @pl.when(is_last_kv)
  def _finalize():
    # Normalize AFTER the PV matmul: EUP reciprocal + (tq, D)-sized multiplies
    # instead of dividing the (tq, tk) probability matrix.
    inv_l = pl.reciprocal(l_scratch[...], approx=True)              # (H, tq, 1)
    attn = acc_scratch[...] * inv_l                                 # (H, tq, D)
    # Re-fuse heads on the lane axis (once per q tile) so the output
    # projection is a single full-E-contraction matmul.
    attn = jnp.concatenate([attn[h] for h in range(H)], axis=-1)    # (tq, E)
    out = jnp.dot(attn.astype(compute_dtype), wproj_ref[...],
                  preferred_element_type=jnp.float32)
    out = out + bproj_ref[...]
    o_ref[0] = out.astype(o_ref.dtype)
    # TODO(synk): training-mode dropout (attn_drop / resid_drop) not
    #             implemented; forward matches eval() / dropout_p=0 semantics.


def causal_self_attention(x, w_qkv, b_qkv, w_proj, b_proj, *, n_head,
                          block_q=128, block_kv=128,
                          compute_dtype=jnp.bfloat16):
  """x: (B, T, E) float32 -> (B, T, E) float32 (eval-mode forward)."""
  B, T, E = x.shape
  assert E % n_head == 0
  D = E // n_head
  block_q = min(block_q, T)
  block_kv = min(block_kv, T)
  assert T % block_q == 0 and T % block_kv == 0
  n_q = T // block_q
  n_kv = T // block_kv
  out_dtype = x.dtype

  # Host-side (one-time) weight prep: transpose nn.Linear [out, in] -> [in, out]
  # so no in-kernel transposes, fold 1/sqrt(D) into the Q projection, fuse the
  # K and V projections into one (E, 2E) matrix, and cast matmul operands to
  # bf16 (biases stay f32).
  scale = 1.0 / math.sqrt(D)
  w_qkv = w_qkv.astype(jnp.float32)
  b_qkv = b_qkv.astype(jnp.float32)
  wq_t = (w_qkv[0 * E:1 * E] * scale).T.astype(compute_dtype)    # (E, E)
  wkv_t = w_qkv[1 * E:3 * E].T.astype(compute_dtype)             # (E, 2E)
  wproj_t = w_proj.astype(jnp.float32).T.astype(compute_dtype)   # (E, E)
  bq = (b_qkv[0 * E:1 * E] * scale).reshape(1, E)
  bkv = b_qkv[1 * E:3 * E].reshape(1, 2 * E)
  bproj = b_proj.astype(jnp.float32).reshape(1, E)

  # Cast the activation stream once so repeated kv-tile DMAs move half the bytes.
  x_lo = x.astype(compute_dtype)

  kernel = functools.partial(
      _flash_attn_kernel, n_head=n_head, head_dim=D,
      block_q=block_q, block_kv=block_kv, compute_dtype=compute_dtype)

  def const_spec(shape):
    return pl.BlockSpec(shape, lambda b, i, j: (0,) * len(shape))

  return pl.pallas_call(
      kernel,
      out_shape=jax.ShapeDtypeStruct((B, T, E), out_dtype),
      grid_spec=pltpu.PrefetchScalarGridSpec(
          num_scalar_prefetch=0,
          grid=(B, n_q, n_kv),
          in_specs=[
              pl.BlockSpec((1, block_q, E), lambda b, i, j: (b, i, 0)),   # x (q rows)
              pl.BlockSpec((1, block_kv, E), lambda b, i, j: (b, j, 0)),  # x (kv rows)
              const_spec((E, E)),       # wq_t
              const_spec((E, 2 * E)),   # wkv_t
              const_spec((1, E)),       # bq
              const_spec((1, 2 * E)),   # bkv
              const_spec((E, E)),       # wproj_t
              const_spec((1, E)),       # bproj
          ],
          out_specs=pl.BlockSpec((1, block_q, E), lambda b, i, j: (b, i, 0)),
          scratch_shapes=[
              pltpu.VMEM((n_head, block_q, D), compute_dtype),  # q heads
              pltpu.VMEM((n_head, block_q, 1), jnp.float32),    # m (running max)
              pltpu.VMEM((n_head, block_q, 1), jnp.float32),    # l (running sum)
              pltpu.VMEM((n_head, block_q, D), jnp.float32),    # acc (running PV)
          ]),
      compiler_params=pltpu.CompilerParams(
          dimension_semantics=("parallel", "parallel", "arbitrary")),
  )(x_lo, x_lo, wq_t, wkv_t, bq, bkv, wproj_t, bproj)


def _reference(x, w_qkv, b_qkv, w_proj, b_proj, n_head):
  """Pure-JAX f32 reference mirroring the PyTorch forward (eval mode)."""
  B, T, E = x.shape
  D = E // n_head
  qkv = x @ w_qkv.T + b_qkv
  q, k, v = jnp.split(qkv, 3, axis=-1)
  q = q.reshape(B, T, n_head, D).transpose(0, 2, 1, 3)
  k = k.reshape(B, T, n_head, D).transpose(0, 2, 1, 3)
  v = v.reshape(B, T, n_head, D).transpose(0, 2, 1, 3)
  scores = (q @ jnp.swapaxes(k, -2, -1)) / math.sqrt(D)
  mask = jnp.tril(jnp.ones((T, T), dtype=bool))
  scores = jnp.where(mask[None, None], scores, -jnp.inf)
  p = jax.nn.softmax(scores, axis=-1)
  attn = p @ v
  out = attn.transpose(0, 2, 1, 3).reshape(B, T, E)
  return out @ w_proj.T + b_proj


if __name__ == "__main__":
  # Small GPT-style config: n_embd=128, n_head=4 (head_dim=32), seq_len=128.
  # 64x64 tiles give a (2, 2, 2) grid so the causal tile-skip and the
  # multi-tile online softmax are both exercised.
  B, T, E, H = 2, 128, 128, 4

  key = jax.random.PRNGKey(0)
  kx, k1, k2, k3, k4 = jax.random.split(key, 5)

  bound = 1.0 / math.sqrt(E)
  x = jax.random.normal(kx, (B, T, E), dtype=jnp.float32)
  w_qkv = jax.random.uniform(k1, (3 * E, E), jnp.float32, -bound, bound)
  b_qkv = jax.random.uniform(k2, (3 * E,), jnp.float32, -bound, bound)
  w_proj = jax.random.uniform(k3, (E, E), jnp.float32, -bound, bound)
  b_proj = jax.random.uniform(k4, (E,), jnp.float32, -bound, bound)

  out = causal_self_attention(x, w_qkv, b_qkv, w_proj, b_proj,
                              n_head=H, block_q=64, block_kv=64)
  out = jax.block_until_ready(out)

  ref = _reference(x, w_qkv, b_qkv, w_proj, b_proj, H)
  assert out.shape == (B, T, E)
  max_err = jnp.max(jnp.abs(out - ref))
  # bf16 matmul inputs with f32 accumulation + approx reciprocal -> relaxed tol.
  assert jnp.allclose(out, ref, atol=5e-2, rtol=5e-2), (
      f"max abs err {max_err}")

  print("KERNEL_OK")
</pallas_src>

<mosaic_0001>
module attributes {stable_mosaic.version = 11 : i64} {
  func.func @_flash_attn_kernel(%arg0: i32, %arg1: i32, %arg2: i32, %arg3: memref<1x64x128xbf16, #tpu.memory_space<vmem>>, %arg4: memref<1x64x128xbf16, #tpu.memory_space<vmem>>, %arg5: memref<128x128xbf16, #tpu.memory_space<vmem>>, %arg6: memref<128x256xbf16, #tpu.memory_space<vmem>>, %arg7: memref<1x128xf32, #tpu.memory_space<vmem>>, %arg8: memref<1x256xf32, #tpu.memory_space<vmem>>, %arg9: memref<128x128xbf16, #tpu.memory_space<vmem>>, %arg10: memref<1x128xf32, #tpu.memory_space<vmem>>, %arg11: memref<1x64x128xf32, #tpu.memory_space<vmem>>, %arg12: memref<4x64x32xbf16, #tpu.memory_space<vmem>>, %arg13: memref<4x64x1xf32, #tpu.memory_space<vmem>>, %arg14: memref<4x64x1xf32, #tpu.memory_space<vmem>>, %arg15: memref<4x64x32xf32, #tpu.memory_space<vmem>>) attributes {dimension_semantics = [#tpu.dimension_semantics<parallel>, #tpu.dimension_semantics<parallel>, #tpu.dimension_semantics<arbitrary>], iteration_bounds = array<i64: 2, 2, 2>, scalar_prefetch = 0 : i64, scratch_operands = 4 : i64, tpu.core_type = #tpu.core_type<tc>, window_params = [{transform_indices = @transform_0, window_bounds = array<i64: 1, 64, 128>}, {transform_indices = @transform_1, window_bounds = array<i64: 1, 64, 128>}, {pipeline_mode = #tpu.pipeline_mode<synchronous>, transform_indices = @transform_2, window_bounds = array<i64: 128, 128>}, {pipeline_mode = #tpu.pipeline_mode<synchronous>, transform_indices = @transform_3, window_bounds = array<i64: 128, 256>}, {pipeline_mode = #tpu.pipeline_mode<synchronous>, transform_indices = @transform_4, window_bounds = array<i64: 1, 128>}, {pipeline_mode = #tpu.pipeline_mode<synchronous>, transform_indices = @transform_5, window_bounds = array<i64: 1, 256>}, {pipeline_mode = #tpu.pipeline_mode<synchronous>, transform_indices = @transform_6, window_bounds = array<i64: 128, 128>}, {pipeline_mode = #tpu.pipeline_mode<synchronous>, transform_indices = @transform_7, window_bounds = array<i64: 1, 128>}, {transform_indices = @transform_8, window_bounds = array<i64: 1, 64, 128>}]} {
    %c1_i32 = arith.constant 1 : i32
    %0 = arith.addi %arg1, %c1_i32 : i32
    %c64_i32 = arith.constant 64 : i32
    %1 = arith.muli %0, %c64_i32 : i32
    %c64_i32_0 = arith.constant 64 : i32
    %2 = arith.muli %arg2, %c64_i32_0 : i32
    %3 = arith.cmpi slt, %2, %1 : i32
    %c1_i32_1 = arith.constant 1 : i32
    %4 = arith.addi %arg2, %c1_i32_1 : i32
    %c64_i32_2 = arith.constant 64 : i32
    %5 = arith.muli %4, %c64_i32_2 : i32
    %6 = arith.cmpi sge, %5, %1 : i32
    %7 = arith.andi %3, %6 : i1
    %c0_i32 = arith.constant 0 : i32
    %8 = arith.cmpi eq, %arg2, %c0_i32 : i32
    %9 = arith.extui %8 : i1 to i32
    %c0_i32_3 = arith.constant 0 : i32
    %10 = arith.cmpi ne, %9, %c0_i32_3 : i32
    scf.if %10 {
      %c0 = arith.constant 0 : index
      %c0_6 = arith.constant 0 : index
      %c0_7 = arith.constant 0 : index
      %15 = vector.load %arg3[%c0, %c0_6, %c0_7] : memref<1x64x128xbf16, #tpu.memory_space<vmem>>, vector<1x64x128xbf16>
      %16 = vector.shape_cast %15 : vector<1x64x128xbf16> to vector<64x128xbf16>
      %c0_8 = arith.constant 0 : index
      %c0_9 = arith.constant 0 : index
      %17 = vector.load %arg5[%c0_8, %c0_9] : memref<128x128xbf16, #tpu.memory_space<vmem>>, vector<128x128xbf16>
      %cst = arith.constant dense<0.000000e+00> : vector<64x128xf32>
      %18 = tpu.matmul %16, %17, %cst {dimension_numbers = #tpu.dot_dimension_numbers<[1], [0], [0], [1], [0, 0, 1, 1], [], []>} : vector<64x128xbf16>, vector<128x128xbf16>, vector<64x128xf32> -> vector<64x128xf32>
      %c0_10 = arith.constant 0 : index
      %c0_11 = arith.constant 0 : index
      %19 = vector.load %arg7[%c0_10, %c0_11] : memref<1x128xf32, #tpu.memory_space<vmem>>, vector<1x128xf32>
      %20 = vector.broadcast %19 : vector<1x128xf32> to vector<64x128xf32>
      %21 = arith.addf %18, %20 : vector<64x128xf32>
      %22 = arith.truncf %21 : vector<64x128xf32> to vector<64x128xbf16>
      %23 = vector.extract_strided_slice %22 {offsets = [0, 0], sizes = [64, 32], strides = [1, 1]} : vector<64x128xbf16> to vector<64x32xbf16>
      %24 = vector.shape_cast %23 : vector<64x32xbf16> to vector<1x64x32xbf16>
      %25 = vector.extract_strided_slice %22 {offsets = [0, 32], sizes = [64, 32], strides = [1, 1]} : vector<64x128xbf16> to vector<64x32xbf16>
      %26 = vector.shape_cast %25 : vector<64x32xbf16> to vector<1x64x32xbf16>
      %27 = vector.extract_strided_slice %22 {offsets = [0, 64], sizes = [64, 32], strides = [1, 1]} : vector<64x128xbf16> to vector<64x32xbf16>
      %28 = vector.shape_cast %27 : vector<64x32xbf16> to vector<1x64x32xbf16>
      %29 = vector.extract_strided_slice %22 {offsets = [0, 96], sizes = [64, 32], strides = [1, 1]} : vector<64x128xbf16> to vector<64x32xbf16>
      %30 = vector.shape_cast %29 : vector<64x32xbf16> to vector<1x64x32xbf16>
      %31 = tpu.concatenate %24, %26, %28, %30 in 0 : vector<1x64x32xbf16>, vector<1x64x32xbf16>, vector<1x64x32xbf16>, vector<1x64x32xbf16> -> vector<4x64x32xbf16>
      %c0_12 = arith.constant 0 : index
      %c0_13 = arith.constant 0 : index
      %c0_14 = arith.constant 0 : index
      %32 = vector.load %arg12[%c0_12, %c0_13, %c0_14] : memref<4x64x32xbf16, #tpu.memory_space<vmem>>, vector<4x64x32xbf16>
      tpu.vector_store %arg12[%c0_12, %c0_13, %c0_14], %31 {strides = array<i32>} : memref<4x64x32xbf16, #tpu.memory_space<vmem>>, vector<4x64x32xbf16>,
      %cst_15 = arith.constant -1.000000e+30 : f32
      %33 = vector.broadcast %cst_15 : f32 to vector<4x64x1xf32>
      %c0_16 = arith.constant 0 : index
      %c0_17 = arith.constant 0 : index
      %c0_18 = arith.constant 0 : index
      %34 = vector.load %arg13[%c0_16, %c0_17, %c0_18] : memref<4x64x1xf32, #tpu.memory_space<vmem>>, vector<4x64x1xf32>
      tpu.vector_store %arg13[%c0_16, %c0_17, %c0_18], %33 {strides = array<i32>} : memref<4x64x1xf32, #tpu.memory_space<vmem>>, vector<4x64x1xf32>,
      %cst_19 = arith.constant 0.000000e+00 : f32
      %35 = vector.broadcast %cst_19 : f32 to vector<4x64x1xf32>
      %c0_20 = arith.constant 0 : index
      %c0_21 = arith.constant 0 : index
      %c0_22 = arith.constant 0 : index
      %36 = vector.load %arg14[%c0_20, %c0_21, %c0_22] : memref<4x64x1xf32, #tpu.memory_space<vmem>>, vector<4x64x1xf32>
      tpu.vector_store %arg14[%c0_20, %c0_21, %c0_22], %35 {strides = array<i32>} : memref<4x64x1xf32, #tpu.memory_space<vmem>>, vector<4x64x1xf32>,
      %cst_23 = arith.constant 0.000000e+00 : f32
      %37 = vector.broadcast %cst_23 : f32 to vector<4x64x32xf32>
      %c0_24 = arith.constant 0 : index
      %c0_25 = arith.constant 0 : index
      %c0_26 = arith.constant 0 : index
      %38 = vector.load %arg15[%c0_24, %c0_25, %c0_26] : memref<4x64x32xf32, #tpu.memory_space<vmem>>, vector<4x64x32xf32>
      tpu.vector_store %arg15[%c0_24, %c0_25, %c0_26], %37 {strides = array<i32>} : memref<4x64x32xf32, #tpu.memory_space<vmem>>, vector<4x64x32xf32>,
    } else {
    }
    %11 = arith.extui %3 : i1 to i32
    %c0_i32_4 = arith.constant 0 : i32
    %12 = arith.cmpi ne, %11, %c0_i32_4 : i32
    scf.if %12 {
      %c0 = arith.constant 0 : index
      %c0_6 = arith.constant 0 : index
      %c0_7 = arith.constant 0 : index
      %15 = vector.load %arg4[%c0, %c0_6, %c0_7] : memref<1x64x128xbf16, #tpu.memory_space<vmem>>, vector<1x64x128xbf16>
      %16 = vector.shape_cast %15 : vector<1x64x128xbf16> to vector<64x128xbf16>
      %c0_8 = arith.constant 0 : index
      %c0_9 = arith.constant 0 : index
      %17 = vector.load %arg6[%c0_8, %c0_9] : memref<128x256xbf16, #tpu.memory_space<vmem>>, vector<128x256xbf16>
      %cst = arith.constant dense<0.000000e+00> : vector<64x256xf32>
      %18 = tpu.matmul %16, %17, %cst {dimension_numbers = #tpu.dot_dimension_numbers<[1], [0], [0], [1], [0, 0, 1, 1], [], []>} : vector<64x128xbf16>, vector<128x256xbf16>, vector<64x256xf32> -> vector<64x256xf32>
      %c0_10 = arith.constant 0 : index
      %c0_11 = arith.constant 0 : index
      %19 = vector.load %arg8[%c0_10, %c0_11] : memref<1x256xf32, #tpu.memory_space<vmem>>, vector<1x256xf32>
      %20 = vector.broadcast %19 : vector<1x256xf32> to vector<64x256xf32>
      %21 = arith.addf %18, %20 : vector<64x256xf32>
      %22 = arith.truncf %21 : vector<64x256xf32> to vector<64x256xbf16>
      %23 = vector.extract_strided_slice %22 {offsets = [0, 0], sizes = [64, 128], strides = [1, 1]} : vector<64x256xbf16> to vector<64x128xbf16>
      %24 = vector.extract_strided_slice %23 {offsets = [0, 0], sizes = [64, 32], strides = [1, 1]} : vector<64x128xbf16> to vector<64x32xbf16>
      %25 = vector.shape_cast %24 : vector<64x32xbf16> to vector<1x64x32xbf16>
      %26 = vector.extract_strided_slice %23 {offsets = [0, 32], sizes = [64, 32], strides = [1, 1]} : vector<64x128xbf16> to vector<64x32xbf16>
      %27 = vector.shape_cast %26 : vector<64x32xbf16> to vector<1x64x32xbf16>
      %28 = vector.extract_strided_slice %23 {offsets = [0, 64], sizes = [64, 32], strides = [1, 1]} : vector<64x128xbf16> to vector<64x32xbf16>
      %29 = vector.shape_cast %28 : vector<64x32xbf16> to vector<1x64x32xbf16>
      %30 = vector.extract_strided_slice %23 {offsets = [0, 96], sizes = [64, 32], strides = [1, 1]} : vector<64x128xbf16> to vector<64x32xbf16>
      %31 = vector.shape_cast %30 : vector<64x32xbf16> to vector<1x64x32xbf16>
      %32 = tpu.concatenate %25, %27, %29, %31 in 0 : vector<1x64x32xbf16>, vector<1x64x32xbf16>, vector<1x64x32xbf16>, vector<1x64x32xbf16> -> vector<4x64x32xbf16>
      %33 = vector.extract_strided_slice %22 {offsets = [0, 128], sizes = [64, 128], strides = [1, 1]} : vector<64x256xbf16> to vector<64x128xbf16>
      %34 = vector.extract_strided_slice %33 {offsets = [0, 0], sizes = [64, 32], strides = [1, 1]} : vector<64x128xbf16> to vector<64x32xbf16>
      %35 = vector.shape_cast %34 : vector<64x32xbf16> to vector<1x64x32xbf16>
      %36 = vector.extract_strided_slice %33 {offsets = [0, 32], sizes = [64, 32], strides = [1, 1]} : vector<64x128xbf16> to vector<64x32xbf16>
      %37 = vector.shape_cast %36 : vector<64x32xbf16> to vector<1x64x32xbf16>
      %38 = vector.extract_strided_slice %33 {offsets = [0, 64], sizes = [64, 32], strides = [1, 1]} : vector<64x128xbf16> to vector<64x32xbf16>
      %39 = vector.shape_cast %38 : vector<64x32xbf16> to vector<1x64x32xbf16>
      %40 = vector.extract_strided_slice %33 {offsets = [0, 96], sizes = [64, 32], strides = [1, 1]} : vector<64x128xbf16> to vector<64x32xbf16>
      %41 = vector.shape_cast %40 : vector<64x32xbf16> to vector<1x64x32xbf16>
      %42 = tpu.concatenate %35, %37, %39, %41 in 0 : vector<1x64x32xbf16>, vector<1x64x32xbf16>, vector<1x64x32xbf16>, vector<1x64x32xbf16> -> vector<4x64x32xbf16>
      %c0_12 = arith.constant 0 : index
      %c0_13 = arith.constant 0 : index
      %c0_14 = arith.constant 0 : index
      %43 = vector.load %arg12[%c0_12, %c0_13, %c0_14] : memref<4x64x32xbf16, #tpu.memory_space<vmem>>, vector<4x64x32xbf16>
      "tpu.trace_start"() <{level = 10 : i32, message = "htd,hsd->hts"}> : () -> ()
      %cst_15 = arith.constant dense<0.000000e+00> : vector<4x64x64xf32>
      %44 = tpu.matmul %43, %32, %cst_15 {dimension_numbers = #tpu.dot_dimension_numbers<[2], [2], [1], [1], [0, 0, 0, 1, 1, 1], [0], [0]>} : vector<4x64x32xbf16>, vector<4x64x32xbf16>, vector<4x64x64xf32> -> vector<4x64x64xf32>
      "tpu.trace_stop"() : () -> ()
      %c64_i32_16 = arith.constant 64 : i32
      %45 = arith.muli %arg1, %c64_i32_16 : i32
      %46 = tpu.iota {dimensions = array<i32: 0>} : vector<64x64xi32>
      %47 = vector.broadcast %45 : i32 to vector<64x64xi32>
      %48 = arith.addi %47, %46 : vector<64x64xi32>
      %c64_i32_17 = arith.constant 64 : i32
      %49 = arith.muli %arg2, %c64_i32_17 : i32
      %50 = tpu.iota {dimensions = array<i32: 1>} : vector<64x64xi32>
      %51 = vector.broadcast %49 : i32 to vector<64x64xi32>
      %52 = arith.addi %51, %50 : vector<64x64xi32>
      %53 = arith.cmpi sle, %52, %48 : vector<64x64xi32>
      %54 = vector.shape_cast %53 : vector<64x64xi1> to vector<1x64x64xi1>
      %cst_18 = arith.constant -1.000000e+30 : f32
      %55 = vector.shape_cast %54 : vector<1x64x64xi1> to vector<1x64x64xi1>
      %56 = vector.broadcast %55 : vector<1x64x64xi1> to vector<4x64x64xi1>
      %57 = vector.broadcast %cst_18 : f32 to vector<4x64x64xf32>
      %58 = arith.select %56, %44, %57 : vector<4x64x64xi1>, vector<4x64x64xf32>
      %c0_19 = arith.constant 0 : index
      %c0_20 = arith.constant 0 : index
      %c0_21 = arith.constant 0 : index
      %59 = vector.load %arg13[%c0_19, %c0_20, %c0_21] : memref<4x64x1xf32, #tpu.memory_space<vmem>>, vector<4x64x1xf32>
      %cst_22 = arith.constant dense<0xFF800000> : vector<4x64xf32>
      %60 = vector.multi_reduction <maximumf>, %58, %cst_22 [2] : vector<4x64x64xf32> to vector<4x64xf32>
      %61 = vector.shape_cast %60 : vector<4x64xf32> to vector<4x64x1xf32>
      %62 = arith.maximumf %59, %61 : vector<4x64x1xf32>
      %63 = arith.subf %59, %62 : vector<4x64x1xf32>
      %64 = math.exp %63 : vector<4x64x1xf32>
      %65 = vector.broadcast %62 : vector<4x64x1xf32> to vector<4x64x64xf32>
      %66 = arith.subf %58, %65 : vector<4x64x64xf32>
      %67 = math.exp %66 : vector<4x64x64xf32>
      %c0_23 = arith.constant 0 : index
      %c0_24 = arith.constant 0 : index
      %c0_25 = arith.constant 0 : index
      %68 = vector.load %arg14[%c0_23, %c0_24, %c0_25] : memref<4x64x1xf32, #tpu.memory_space<vmem>>, vector<4x64x1xf32>
      %69 = arith.mulf %64, %68 : vector<4x64x1xf32>
      %cst_26 = arith.constant dense<0.000000e+00> : vector<4x64xf32>
      %70 = vector.multi_reduction <add>, %67, %cst_26 [2] : vector<4x64x64xf32> to vector<4x64xf32>
      %71 = vector.shape_cast %70 : vector<4x64xf32> to vector<4x64x1xf32>
      %72 = arith.addf %69, %71 : vector<4x64x1xf32>
      %c0_27 = arith.constant 0 : index
      %c0_28 = arith.constant 0 : index
      %c0_29 = arith.constant 0 : index
      %73 = vector.load %arg14[%c0_27, %c0_28, %c0_29] : memref<4x64x1xf32, #tpu.memory_space<vmem>>, vector<4x64x1xf32>
      tpu.vector_store %arg14[%c0_27, %c0_28, %c0_29], %72 {strides = array<i32>} : memref<4x64x1xf32, #tpu.memory_space<vmem>>, vector<4x64x1xf32>,
      %c0_30 = arith.constant 0 : index
      %c0_31 = arith.constant 0 : index
      %c0_32 = arith.constant 0 : index
      %74 = vector.load %arg15[%c0_30, %c0_31, %c0_32] : memref<4x64x32xf32, #tpu.memory_space<vmem>>, vector<4x64x32xf32>
      %75 = vector.broadcast %64 : vector<4x64x1xf32> to vector<4x64x32xf32>
      %76 = arith.mulf %75, %74 : vector<4x64x32xf32>
      %77 = arith.truncf %67 : vector<4x64x64xf32> to vector<4x64x64xbf16>
      "tpu.trace_start"() <{level = 10 : i32, message = "hts,hsd->htd"}> : () -> ()
      %cst_33 = arith.constant dense<0.000000e+00> : vector<4x64x32xf32>
      %78 = tpu.matmul %77, %42, %cst_33 {dimension_numbers = #tpu.dot_dimension_numbers<[2], [1], [1], [2], [0, 0, 0, 1, 1, 2], [0], [0]>} : vector<4x64x64xbf16>, vector<4x64x32xbf16>, vector<4x64x32xf32> -> vector<4x64x32xf32>
      "tpu.trace_stop"() : () -> ()
      %79 = arith.addf %76, %78 : vector<4x64x32xf32>
      %c0_34 = arith.constant 0 : index
      %c0_35 = arith.constant 0 : index
      %c0_36 = arith.constant 0 : index
      %80 = vector.load %arg15[%c0_34, %c0_35, %c0_36] : memref<4x64x32xf32, #tpu.memory_space<vmem>>, vector<4x64x32xf32>
      tpu.vector_store %arg15[%c0_34, %c0_35, %c0_36], %79 {strides = array<i32>} : memref<4x64x32xf32, #tpu.memory_space<vmem>>, vector<4x64x32xf32>,
      %c0_37 = arith.constant 0 : index
      %c0_38 = arith.constant 0 : index
      %c0_39 = arith.constant 0 : index
      %81 = vector.load %arg13[%c0_37, %c0_38, %c0_39] : memref<4x64x1xf32, #tpu.memory_space<vmem>>, vector<4x64x1xf32>
      tpu.vector_store %arg13[%c0_37, %c0_38, %c0_39], %62 {strides = array<i32>} : memref<4x64x1xf32, #tpu.memory_space<vmem>>, vector<4x64x1xf32>,
    } else {
    }
    %13 = arith.extui %7 : i1 to i32
    %c0_i32_5 = arith.constant 0 : i32
    %14 = arith.cmpi ne, %13, %c0_i32_5 : i32
    scf.if %14 {
      %c0 = arith.constant 0 : index
      %c0_6 = arith.constant 0 : index
      %c0_7 = arith.constant 0 : index
      %15 = vector.load %arg14[%c0, %c0_6, %c0_7] : memref<4x64x1xf32, #tpu.memory_space<vmem>>, vector<4x64x1xf32>
      %16 = tpu.reciprocal %15 {approx = true} : vector<4x64x1xf32> -> vector<4x64x1xf32>
      %c0_8 = arith.constant 0 : index
      %c0_9 = arith.constant 0 : index
      %c0_10 = arith.constant 0 : index
      %17 = vector.load %arg15[%c0_8, %c0_9, %c0_10] : memref<4x64x32xf32, #tpu.memory_space<vmem>>, vector<4x64x32xf32>
      %18 = vector.broadcast %16 : vector<4x64x1xf32> to vector<4x64x32xf32>
      %19 = arith.mulf %17, %18 : vector<4x64x32xf32>
      %20 = vector.extract_strided_slice %19 {offsets = [0, 0, 0], sizes = [1, 64, 32], strides = [1, 1, 1]} : vector<4x64x32xf32> to vector<1x64x32xf32>
      %21 = vector.shape_cast %20 : vector<1x64x32xf32> to vector<64x32xf32>
      %22 = vector.extract_strided_slice %19 {offsets = [1, 0, 0], sizes = [1, 64, 32], strides = [1, 1, 1]} : vector<4x64x32xf32> to vector<1x64x32xf32>
      %23 = vector.shape_cast %22 : vector<1x64x32xf32> to vector<64x32xf32>
      %24 = vector.extract_strided_slice %19 {offsets = [2, 0, 0], sizes = [1, 64, 32], strides = [1, 1, 1]} : vector<4x64x32xf32> to vector<1x64x32xf32>
      %25 = vector.shape_cast %24 : vector<1x64x32xf32> to vector<64x32xf32>
      %26 = vector.extract_strided_slice %19 {offsets = [3, 0, 0], sizes = [1, 64, 32], strides = [1, 1, 1]} : vector<4x64x32xf32> to vector<1x64x32xf32>
      %27 = vector.shape_cast %26 : vector<1x64x32xf32> to vector<64x32xf32>
      %28 = tpu.concatenate %21, %23, %25, %27 in 1 : vector<64x32xf32>, vector<64x32xf32>, vector<64x32xf32>, vector<64x32xf32> -> vector<64x128xf32>
      %29 = arith.truncf %28 : vector<64x128xf32> to vector<64x128xbf16>
      %c0_11 = arith.constant 0 : index
      %c0_12 = arith.constant 0 : index
      %30 = vector.load %arg9[%c0_11, %c0_12] : memref<128x128xbf16, #tpu.memory_space<vmem>>, vector<128x128xbf16>
      %cst = arith.constant dense<0.000000e+00> : vector<64x128xf32>
      %31 = tpu.matmul %29, %30, %cst {dimension_numbers = #tpu.dot_dimension_numbers<[1], [0], [0], [1], [0, 0, 1, 1], [], []>} : vector<64x128xbf16>, vector<128x128xbf16>, vector<64x128xf32> -> vector<64x128xf32>
      %c0_13 = arith.constant 0 : index
      %c0_14 = arith.constant 0 : index
      %32 = vector.load %arg10[%c0_13, %c0_14] : memref<1x128xf32, #tpu.memory_space<vmem>>, vector<1x128xf32>
      %33 = vector.broadcast %32 : vector<1x128xf32> to vector<64x128xf32>
      %34 = arith.addf %31, %33 : vector<64x128xf32>
      %c0_15 = arith.constant 0 : index
      %c0_16 = arith.constant 0 : index
      %c0_17 = arith.constant 0 : index
      %35 = vector.load %arg11[%c0_15, %c0_16, %c0_17] : memref<1x64x128xf32, #tpu.memory_space<vmem>>, vector<1x64x128xf32>
      %36 = vector.shape_cast %35 : vector<1x64x128xf32> to vector<64x128xf32>
      %37 = vector.shape_cast %34 : vector<64x128xf32> to vector<1x64x128xf32>
      tpu.vector_store %arg11[%c0_15, %c0_16, %c0_17], %37 {strides = array<i32>} : memref<1x64x128xf32, #tpu.memory_space<vmem>>, vector<1x64x128xf32>,
    } else {
    }
    return
  }
  func.func @transform_0(%arg0: i32, %arg1: i32, %arg2: i32) -> (i32, i32, i32) {
    %c0_i32 = arith.constant 0 : i32
    %c0_i32_0 = arith.constant 0 : i32
    return %arg0, %arg1, %c0_i32 : i32, i32, i32
  }
  func.func @transform_1(%arg0: i32, %arg1: i32, %arg2: i32) -> (i32, i32, i32) {
    %c0_i32 = arith.constant 0 : i32
    %c0_i32_0 = arith.constant 0 : i32
    return %arg0, %arg2, %c0_i32 : i32, i32, i32
  }
  func.func @transform_2(%arg0: i32, %arg1: i32, %arg2: i32) -> (i32, i32) {
    %c0_i32 = arith.constant 0 : i32
    %c0_i32_0 = arith.constant 0 : i32
    %c0_i32_1 = arith.constant 0 : i32
    return %c0_i32, %c0_i32_0 : i32, i32
  }
  func.func @transform_3(%arg0: i32, %arg1: i32, %arg2: i32) -> (i32, i32) {
    %c0_i32 = arith.constant 0 : i32
    %c0_i32_0 = arith.constant 0 : i32
    %c0_i32_1 = arith.constant 0 : i32
    return %c0_i32, %c0_i32_0 : i32, i32
  }
  func.func @transform_4(%arg0: i32, %arg1: i32, %arg2: i32) -> (i32, i32) {
    %c0_i32 = arith.constant 0 : i32
    %c0_i32_0 = arith.constant 0 : i32
    %c0_i32_1 = arith.constant 0 : i32
    return %c0_i32, %c0_i32_0 : i32, i32
  }
  func.func @transform_5(%arg0: i32, %arg1: i32, %arg2: i32) -> (i32, i32) {
    %c0_i32 = arith.constant 0 : i32
    %c0_i32_0 = arith.constant 0 : i32
    %c0_i32_1 = arith.constant 0 : i32
    return %c0_i32, %c0_i32_0 : i32, i32
  }
  func.func @transform_6(%arg0: i32, %arg1: i32, %arg2: i32) -> (i32, i32) {
    %c0_i32 = arith.constant 0 : i32
    %c0_i32_0 = arith.constant 0 : i32
    %c0_i32_1 = arith.constant 0 : i32
    return %c0_i32, %c0_i32_0 : i32, i32
  }
  func.func @transform_7(%arg0: i32, %arg1: i32, %arg2: i32) -> (i32, i32) {
    %c0_i32 = arith.constant 0 : i32
    %c0_i32_0 = arith.constant 0 : i32
    %c0_i32_1 = arith.constant 0 : i32
    return %c0_i32, %c0_i32_0 : i32, i32
  }
  func.func @transform_8(%arg0: i32, %arg1: i32, %arg2: i32) -> (i32, i32, i32) {
    %c0_i32 = arith.constant 0 : i32
    %c0_i32_0 = arith.constant 0 : i32
    return %arg0, %arg1, %c0_i32 : i32, i32, i32
  }
}

</mosaic_0001>

<llo_original>
// kernel: tpu_custom_call.1
$region0: #{tpu_custom_call.1}
  #allocation0 [shape = 'u32[]', space=smem, size = 0x4, offset = 0x4, fixed_abs, tag = 'smem constant byte address 0x4 - core index']
  #allocation1 [shape = 'u32[144,128]{1,0:T(1,128)}', space=vmem, size = 0x12000, scoped, tag = 'internal scratch']
  #allocation2 [shape = 'bf16[4,64,32]{2,1,0:T(16,128)(2,1)}', space=vmem, size = 0x10000, scoped, tag = 'scratch operand']
  #allocation3 [shape = 'f32[4,64,1]{2,1,0:T(8,128)}', space=vmem, size = 0x20000, scoped, tag = 'scratch operand']
  #allocation4 [shape = 'f32[4,64,1]{2,1,0:T(8,128)}', space=vmem, size = 0x20000, scoped, tag = 'scratch operand']
  #allocation5 [shape = 'f32[4,64,32]{2,1,0:T(8,128)}', space=vmem, size = 0x20000, scoped, tag = 'scratch operand']
  %s0 = inlined_call_operand.hbm [shape: bf16[2,128,128], index: 0, kind: input, shape index: {}]
  %s1 = inlined_call_operand.hbm [shape: bf16[2,128,128], index: 1, kind: input, shape index: {}]
  %s2 = inlined_call_operand.hbm [shape: bf16[128,128], index: 2, kind: input, shape index: {}]
  %s3 = inlined_call_operand.hbm [shape: bf16[128,256], index: 3, kind: input, shape index: {}]
  %s4 = inlined_call_operand.vmem [shape: f32[1,128], index: 4, kind: input, shape index: {}]
  %s5 = inlined_call_operand.vmem [shape: f32[1,256], index: 5, kind: input, shape index: {}]
  %s6 = inlined_call_operand.hbm [shape: bf16[128,128], index: 6, kind: input, shape index: {}]
  %s7 = inlined_call_operand.vmem [shape: f32[1,128], index: 7, kind: input, shape index: {}]
  %s8 = inlined_call_operand.hbm [shape: f32[2,128,128], index: 8, kind: output, shape index: {}]
  %s9 = sld [smem:[#allocation0]]
  $region97: #{tpu_custom_call.1} parent=0
    _
  %s11 = ssub.s32 1, %s9
  %s12 = scalar_select 0, %s11, %s9
  $region1: #{tpu_custom_call.1} parent=0
    #allocation6 [shape = 'u8[32768]{0}', space=vmem, size = 0x8000, scoped, tag = 'input window, operand 0']
    #allocation7 [shape = 's32[2]{0}', space=sflag, size = 0x8, scoped, tag = 'scoped memory for tpu_custom_call.1']
    #allocation8 [shape = 's32[2]{0}', space=sflag, size = 0x8, scoped, tag = 'scoped memory for tpu_custom_call.1']
    #allocation9 [shape = 'u8[32768]{0}', space=vmem, size = 0x8000, scoped, tag = 'input window, operand 1']
    #allocation10 [shape = 's32[2]{0}', space=sflag, size = 0x8, scoped, tag = 'scoped memory for tpu_custom_call.1']
    #allocation11 [shape = 'u8[32768]{0}', space=vmem, size = 0x8000, scoped, tag = 'input window, operand 2, single buffered']
    #allocation12 [shape = 'u8[65536]{0}', space=vmem, size = 0x10000, scoped, tag = 'input window, operand 3, single buffered']
    #allocation13 [shape = 's32[1]{0}', space=sflag, size = 0x4, scoped, tag = 'scoped memory for tpu_custom_call.1']
    #allocation14 [shape = 'u8[32768]{0}', space=vmem, size = 0x8000, scoped, tag = 'input window, operand 6, single buffered']
    #allocation15 [shape = 'u8[65536]{0}', space=vmem, size = 0x10000, scoped, tag = 'output window, operand 0']
    %13 = vsyncpa [#allocation7], 0
    %s14 = scalar_lea.sflag [#allocation7], 1
    %15 = vsyncpa %s14, 0
    %16 = vsyncpa [#allocation10], 0
    %s17 = scalar_lea.sflag [#allocation10], 1
    %18 = vsyncpa %s17, 0
    %19 = vsyncpa [#allocation13], 0
    %20 = vsyncpa [#allocation8], 0
    %s21 = scalar_lea.sflag [#allocation8], 1
    %22 = vsyncpa %s21, 0
    loop: start=0, step=1, limit=10
    $region2: #{tpu_custom_call.1} parent=1 // loop_pre_header
      _
    $region3: #{tpu_custom_call.1} parent=1 // loop_header
      %s24 = sphi 0, %s28
      %p25 = scmp.ge.s32.totalorder %s24, 10
      %s31 = sphi 0, %s50
      %s32 = sphi 0, %s46
      %s33 = sphi 0, %s42
      %s34 = sphi 0, %s31
      %s35 = sphi 0, %s32
      %s36 = sphi 0, %s33
      %s37 = sphi 0, %s34
      %s38 = sphi 0, %s35
      %s39 = sphi 0, %s36
      %s55 = sphi 0, %s57
      %s58 = sphi 0, %s55
      %s59 = sphi 0, %s58
      %s75 = sphi 0, %s59
      %s83 = sphi 0, %s85
      %s86 = sphi 0, %s83
      %s87 = sphi 0, %s86
      %s103 = sphi 0, %s87
      %s107 = sphi 0, %s107
      %s109 = sphi 0, %s107
      %s110 = sphi 0, %s109
      %s124 = sphi 0, %s110
      %s128 = sphi 0, %s128
      %s130 = sphi 0, %s128
      %s131 = sphi 0, %s130
      %s145 = sphi 0, %s131
      %s149 = sphi 0, %s149
      %s151 = sphi 0, %s149
      %s152 = sphi 0, %s151
      %s166 = sphi 0, %s152
      %s170 = sphi 0, %s170
      %s172 = sphi 0, %s170
      %s173 = sphi 0, %s172
      %s187 = sphi 0, %s173
      %s191 = sphi 0, %s191
      %s193 = sphi 0, %s191
      %s194 = sphi 0, %s193
      %s208 = sphi 0, %s194
      %s212 = sphi 0, %s212
      %s214 = sphi 0, %s212
      %s215 = sphi 0, %s214
      %s229 = sphi 0, %s215
      %s237 = sphi 0, %s239
      %s240 = sphi 0, %s237
      %s241 = sphi 0, %s240
      %s257 = sphi 0, %s241
    $region4: #{tpu_custom_call.1} parent=1 // loop_header_branch
      %27 = sbr.rel (%p25) target = $region8
    $region5: #{tpu_custom_call.1} parent=1 // loop_body
      %s29 = ssub.s32 %s24, 1
      %s30 = ssub.s32 %s24, 2
      %s40 = sadd.s32 1, %s33
      %p41 = scmp.ge.s32.totalorder %s40, 2
      %s42 = scalar_select %p41, 0, %s40
      %s43 = sadd.s32 1, %s32
      %s44 = scalar_select %p41, %s43, %s32
      %p45 = scmp.ge.s32.totalorder %s44, 2
      %s46 = scalar_select %p45, 0, %s44
      %s47 = sadd.s32 1, %s31
      %s48 = scalar_select %p45, %s47, %s31
      %p49 = scmp.ge.s32.totalorder %s48, 2
      %s50 = scalar_select %p49, 0, %s48
      %s51 = ssub.s32 %s31, %s50
      %s52 = ssub.s32 %s32, %s46
      %s53 = sor.u32 %s51, %s52
      %p54 = scmp.eq.s32.totalorder %s53, 0
      %s56 = sadd.s32 %s55, 1
      %s57 = scalar_select %p54, %s55, %s56
      %p60 = pneg %p54
      %p61 = scmp.eq.s32.totalorder %s24, 7
      %p62 = por %p60, %p61
      %p63 = scmp.ne.s32.totalorder %s55, %s58
      %p64 = scmp.eq.s32.totalorder %s24, 0
      %p65 = por %p63, %p64
      %p66 = scmp.ne.s32.totalorder %s55, %s58
      %p67 = scmp.eq.s32.totalorder %s29, 7
      %p68 = por %p66, %p67
      %p69 = scmp.ne.s32.totalorder %s58, %s59
      %p70 = scmp.eq.s32.totalorder %s29, 0
      %p71 = por %p69, %p70
      %p72 = scmp.ne.s32.totalorder %s58, %s59
      %p73 = scmp.eq.s32.totalorder %s30, 7
      %p74 = por %p72, %p73
      %p76 = scmp.ne.s32.totalorder %s59, %s75
      %p77 = scmp.eq.s32.totalorder %s30, 0
      %p78 = por %p76, %p77
      %s79 = ssub.s32 %s31, %s50
      %s80 = ssub.s32 %s33, %s42
      %s81 = sor.u32 %s79, %s80
      %p82 = scmp.eq.s32.totalorder %s81, 0
      %s84 = sadd.s32 %s83, 1
      %s85 = scalar_select %p82, %s83, %s84
      %p88 = pneg %p82
      %p89 = scmp.eq.s32.totalorder %s24, 7
      %p90 = por %p88, %p89
      %p91 = scmp.ne.s32.totalorder %s83, %s86
      %p92 = scmp.eq.s32.totalorder %s24, 0
      %p93 = por %p91, %p92
      %p94 = scmp.ne.s32.totalorder %s83, %s86
      %p95 = scmp.eq.s32.totalorder %s29, 7
      %p96 = por %p94, %p95
      %p97 = scmp.ne.s32.totalorder %s86, %s87
      %p98 = scmp.eq.s32.totalorder %s29, 0
      %p99 = por %p97, %p98
      %p100 = scmp.ne.s32.totalorder %s86, %s87
      %p101 = scmp.eq.s32.totalorder %s30, 7
      %p102 = por %p100, %p101
      %p104 = scmp.ne.s32.totalorder %s87, %s103
      %p105 = scmp.eq.s32.totalorder %s30, 0
      %p106 = por %p104, %p105
      %s108 = sadd.s32 %s107, 1
      %p111 = scmp.eq.s32.totalorder %s24, 7
      %p112 = scmp.ne.s32.totalorder %s107, %s109
      %p113 = scmp.eq.s32.totalorder %s24, 0
      %p114 = por %p112, %p113
      %p115 = scmp.ne.s32.totalorder %s107, %s109
      %p116 = scmp.eq.s32.totalorder %s29, 7
      %p117 = por %p115, %p116
      %p118 = scmp.ne.s32.totalorder %s109, %s110
      %p119 = scmp.eq.s32.totalorder %s29, 0
      %p120 = por %p118, %p119
      %p121 = scmp.ne.s32.totalorder %s109, %s110
      %p122 = scmp.eq.s32.totalorder %s30, 7
      %p123 = por %p121, %p122
      %p125 = scmp.ne.s32.totalorder %s110, %s124
      %p126 = scmp.eq.s32.totalorder %s30, 0
      %p127 = por %p125, %p126
      %s129 = sadd.s32 %s128, 1
      %p132 = scmp.eq.s32.totalorder %s24, 7
      %p133 = scmp.ne.s32.totalorder %s128, %s130
      %p134 = scmp.eq.s32.totalorder %s24, 0
      %p135 = por %p133, %p134
      %p136 = scmp.ne.s32.totalorder %s128, %s130
      %p137 = scmp.eq.s32.totalorder %s29, 7
      %p138 = por %p136, %p137
      %p139 = scmp.ne.s32.totalorder %s130, %s131
      %p140 = scmp.eq.s32.totalorder %s29, 0
      %p141 = por %p139, %p140
      %p142 = scmp.ne.s32.totalorder %s130, %s131
      %p143 = scmp.eq.s32.totalorder %s30, 7
      %p144 = por %p142, %p143
      %p146 = scmp.ne.s32.totalorder %s131, %s145
      %p147 = scmp.eq.s32.totalorder %s30, 0
      %p148 = por %p146, %p147
      %s150 = sadd.s32 %s149, 1
      %p153 = scmp.eq.s32.totalorder %s24, 7
      %p154 = scmp.ne.s32.totalorder %s149, %s151
      %p155 = scmp.eq.s32.totalorder %s24, 0
      %p156 = por %p154, %p155
      %p157 = scmp.ne.s32.totalorder %s149, %s151
      %p158 = scmp.eq.s32.totalorder %s29, 7
      %p159 = por %p157, %p158
      %p160 = scmp.ne.s32.totalorder %s151, %s152
      %p161 = scmp.eq.s32.totalorder %s29, 0
      %p162 = por %p160, %p161
      %p163 = scmp.ne.s32.totalorder %s151, %s152
      %p164 = scmp.eq.s32.totalorder %s30, 7
      %p165 = por %p163, %p164
      %p167 = scmp.ne.s32.totalorder %s152, %s166
      %p168 = scmp.eq.s32.totalorder %s30, 0
      %p169 = por %p167, %p168
      %s171 = sadd.s32 %s170, 1
      %p174 = scmp.eq.s32.totalorder %s24, 7
      %p175 = scmp.ne.s32.totalorder %s170, %s172
      %p176 = scmp.eq.s32.totalorder %s24, 0
      %p177 = por %p175, %p176
      %p178 = scmp.ne.s32.totalorder %s170, %s172
      %p179 = scmp.eq.s32.totalorder %s29, 7
      %p180 = por %p178, %p179
      %p181 = scmp.ne.s32.totalorder %s172, %s173
      %p182 = scmp.eq.s32.totalorder %s29, 0
      %p183 = por %p181, %p182
      %p184 = scmp.ne.s32.totalorder %s172, %s173
      %p185 = scmp.eq.s32.totalorder %s30, 7
      %p186 = por %p184, %p185
      %p188 = scmp.ne.s32.totalorder %s173, %s187
      %p189 = scmp.eq.s32.totalorder %s30, 0
      %p190 = por %p188, %p189
      %s192 = sadd.s32 %s191, 1
      %p195 = scmp.eq.s32.totalorder %s24, 7
      %p196 = scmp.ne.s32.totalorder %s191, %s193
      %p197 = scmp.eq.s32.totalorder %s24, 0
      %p198 = por %p196, %p197
      %p199 = scmp.ne.s32.totalorder %s191, %s193
      %p200 = scmp.eq.s32.totalorder %s29, 7
      %p201 = por %p199, %p200
      %p202 = scmp.ne.s32.totalorder %s193, %s194
      %p203 = scmp.eq.s32.totalorder %s29, 0
      %p204 = por %p202, %p203
      %p205 = scmp.ne.s32.totalorder %s193, %s194
      %p206 = scmp.eq.s32.totalorder %s30, 7
      %p207 = por %p205, %p206
      %p209 = scmp.ne.s32.totalorder %s194, %s208
      %p210 = scmp.eq.s32.totalorder %s30, 0
      %p211 = por %p209, %p210
      %s213 = sadd.s32 %s212, 1
      %p216 = scmp.eq.s32.totalorder %s24, 7
      %p217 = scmp.ne.s32.totalorder %s212, %s214
      %p218 = scmp.eq.s32.totalorder %s24, 0
      %p219 = por %p217, %p218
      %p220 = scmp.ne.s32.totalorder %s212, %s214
      %p221 = scmp.eq.s32.totalorder %s29, 7
      %p222 = por %p220, %p221
      %p223 = scmp.ne.s32.totalorder %s214, %s215
      %p224 = scmp.eq.s32.totalorder %s29, 0
      %p225 = por %p223, %p224
      %p226 = scmp.ne.s32.totalorder %s214, %s215
      %p227 = scmp.eq.s32.totalorder %s30, 7
      %p228 = por %p226, %p227
      %p230 = scmp.ne.s32.totalorder %s215, %s229
      %p231 = scmp.eq.s32.totalorder %s30, 0
      %p232 = por %p230, %p231
      %s233 = ssub.s32 %s31, %s50
      %s234 = ssub.s32 %s32, %s46
      %s235 = sor.u32 %s233, %s234
      %p236 = scmp.eq.s32.totalorder %s235, 0
      %s238 = sadd.s32 %s237, 1
      %s239 = scalar_select %p236, %s237, %s238
      %p242 = pneg %p236
      %p243 = scmp.eq.s32.totalorder %s24, 7
      %p244 = por %p242, %p243
      %p245 = scmp.ne.s32.totalorder %s237, %s240
      %p246 = scmp.eq.s32.totalorder %s24, 0
      %p247 = por %p245, %p246
      %p248 = scmp.ne.s32.totalorder %s237, %s240
      %p249 = scmp.eq.s32.totalorder %s29, 7
      %p250 = por %p248, %p249
      %p251 = scmp.ne.s32.totalorder %s240, %s241
      %p252 = scmp.eq.s32.totalorder %s29, 0
      %p253 = por %p251, %p252
      %p254 = scmp.ne.s32.totalorder %s240, %s241
      %p255 = scmp.eq.s32.totalorder %s30, 7
      %p256 = por %p254, %p255
      %p258 = scmp.ne.s32.totalorder %s241, %s257
      %p259 = scmp.eq.s32.totalorder %s30, 0
      %p260 = por %p258, %p259
      %p261 = scmp.le.s32.totalorder 1, %s24
      %p262 = scmp.lt.s32.totalorder %s24, 9
      %p263 = pnand %p261, %p262
      %p264 = pneg %p263
      // Predicated region
      $region9: #{tpu_custom_call.1} parent=5 // pred_check
        _
      $region10: #{tpu_custom_call.1} parent=5 // pred_check_branch
        %266 = sbr.rel (%p263) target = $region12
      $region11: #{tpu_custom_call.1} parent=5 // pred_region
        %s267 = ssub.s32 %s24, 1
        // Predicated region
        $region13: #{tpu_custom_call.1} parent=11 // pred_check
          %p268 = pneg %p120
        $region14: #{tpu_custom_call.1} parent=11 // pred_check_branch
          %270 = sbr.rel (%p268) target = $region16
        $region15: #{tpu_custom_call.1} parent=11 // pred_region
          %s272 = ssub.s32 1024, 1024
          %273 = vsyncadd [#allocation10], %s272
          %s274 = sshll.u32 [#allocation11], 4
          %s275 = int_to_ptr.vmem [resolvable:$true] %s274
          %280 = dma.hbm_to_vmem [thread:$0]  %s2, 1024, %s275, [#allocation10], 64, 64, 4
        $region16: #{tpu_custom_call.1} parent=11 // pred_fallthru
          _
        // Predicated region
        $region17: #{tpu_custom_call.1} parent=11 // pred_check
          %p281 = pneg %p141
        $region18: #{tpu_custom_call.1} parent=11 // pred_check_branch
          %283 = sbr.rel (%p281) target = $region20
        $region19: #{tpu_custom_call.1} parent=11 // pred_region
          %s285 = ssub.s32 2048, 2048
          %286 = vsyncadd [#allocation13], %s285
          %s287 = sshll.u32 [#allocation12], 4
          %s288 = int_to_ptr.vmem [resolvable:$true] %s287
          %293 = dma.hbm_to_vmem [thread:$0]  %s3, 2048, %s288, [#allocation13], 128, 128, 8
        $region20: #{tpu_custom_call.1} parent=11 // pred_fallthru
          _
        // Predicated region
        $region21: #{tpu_custom_call.1} parent=11 // pred_check
          %p294 = pneg %p162
        $region22: #{tpu_custom_call.1} parent=11 // pred_check_branch
          %296 = sbr.rel (%p294) target = $region24
        $region23: #{tpu_custom_call.1} parent=11 // pred_region
          _
        $region24: #{tpu_custom_call.1} parent=11 // pred_fallthru
          _
        // Predicated region
        $region25: #{tpu_custom_call.1} parent=11 // pred_check
          %p297 = pneg %p183
        $region26: #{tpu_custom_call.1} parent=11 // pred_check_branch
          %299 = sbr.rel (%p297) target = $region28
        $region27: #{tpu_custom_call.1} parent=11 // pred_region
          _
        $region28: #{tpu_custom_call.1} parent=11 // pred_fallthru
          _
        // Predicated region
        $region29: #{tpu_custom_call.1} parent=11 // pred_check
          %p300 = pneg %p204
        $region30: #{tpu_custom_call.1} parent=11 // pred_check_branch
          %302 = sbr.rel (%p300) target = $region32
        $region31: #{tpu_custom_call.1} parent=11 // pred_region
          %s304 = ssub.s32 1024, 1024
          %305 = vsyncadd [#allocation13], %s304
          %s306 = sshll.u32 [#allocation14], 4
          %s307 = int_to_ptr.vmem [resolvable:$true] %s306
          %312 = dma.hbm_to_vmem [thread:$0]  %s6, 1024, %s307, [#allocation13], 64, 64, 4
        $region32: #{tpu_custom_call.1} parent=11 // pred_fallthru
          _
        // Predicated region
        $region33: #{tpu_custom_call.1} parent=11 // pred_check
          %p313 = pneg %p225
        $region34: #{tpu_custom_call.1} parent=11 // pred_check_branch
          %315 = sbr.rel (%p313) target = $region36
        $region35: #{tpu_custom_call.1} parent=11 // pred_region
          _
        $region36: #{tpu_custom_call.1} parent=11 // pred_fallthru
          _
      $region12: #{tpu_custom_call.1} parent=5 // pred_fallthru
        _
      %p316 = scmp.lt.s32.totalorder %s24, 8
      // Predicated region
      $region37: #{tpu_custom_call.1} parent=5 // pred_check
        %p317 = pneg %p316
      $region38: #{tpu_custom_call.1} parent=5 // pred_check_branch
        %319 = sbr.rel (%p317) target = $region40
      $region39: #{tpu_custom_call.1} parent=5 // pred_region
        // Predicated region
        $region41: #{tpu_custom_call.1} parent=39 // pred_check
          %p320 = pneg %p65
        $region42: #{tpu_custom_call.1} parent=39 // pred_check_branch
          %322 = sbr.rel (%p320) target = $region44
        $region43: #{tpu_custom_call.1} parent=39 // pred_region
          %s323 = sand.u32 %s55, 1
          %s324 = scalar_lea.sflag [#allocation7], %s323
          %s325 = sand.u32 %s55, 1
          %s326 = smul.addr %s325, 32
          %s327 = scalar_lea.vmem [#allocation6], %s326
          %s328 = smul.u32 8, %s32
          %s330 = ssub.s32 512, 512
          %331 = vsyncadd %s324, %s330
          %s332 = smul.addr %s31, 16
          %s333 = sadd.s32 %s328, %s332
          %s334 = smul.addr %s333, 64
          %s335 = scalar_lea.hbm %s0, %s334
          %s336 = sshll.u32 %s327, 4
          %s337 = int_to_ptr.vmem [resolvable:$true] %s336
          %342 = dma.hbm_to_vmem [thread:$0]  %s335, 512, %s337, %s324, 64, 64, 4
        $region44: #{tpu_custom_call.1} parent=39 // pred_fallthru
          _
        // Predicated region
        $region45: #{tpu_custom_call.1} parent=39 // pred_check
          %p343 = pneg %p93
        $region46: #{tpu_custom_call.1} parent=39 // pred_check_branch
          %345 = sbr.rel (%p343) target = $region48
        $region47: #{tpu_custom_call.1} parent=39 // pred_region
          %s346 = sand.u32 %s24, 1
          %s347 = scalar_lea.sflag [#allocation10], %s346
          %s348 = sand.u32 %s83, 1
          %s349 = smul.addr %s348, 32
          %s350 = scalar_lea.vmem [#allocation9], %s349
          %s351 = smul.u32 8, %s33
          %s353 = ssub.s32 512, 512
          %354 = vsyncadd %s347, %s353
          %s355 = smul.addr %s31, 16
          %s356 = sadd.s32 %s351, %s355
          %s357 = smul.addr %s356, 64
          %s358 = scalar_lea.hbm %s1, %s357
          %s359 = sshll.u32 %s350, 4
          %s360 = int_to_ptr.vmem [resolvable:$true] %s359
          %365 = dma.hbm_to_vmem [thread:$0]  %s358, 512, %s360, %s347, 64, 64, 4
        $region48: #{tpu_custom_call.1} parent=39 // pred_fallthru
          _
      $region40: #{tpu_custom_call.1} parent=5 // pred_fallthru
        _
      %p366 = scmp.le.s32.totalorder 1, %s24
      %p367 = scmp.lt.s32.totalorder %s24, 9
      %p368 = pnand %p366, %p367
      %p369 = pneg %p368
      // Predicated region
      $region49: #{tpu_custom_call.1} parent=5 // pred_check
        _
      $region50: #{tpu_custom_call.1} parent=5 // pred_check_branch
        %371 = sbr.rel (%p368) target = $region52
      $region51: #{tpu_custom_call.1} parent=5 // pred_region
        %s372 = ssub.s32 %s24, 1
        %s373 = sand.u32 %s58, 1
        %s374 = scalar_lea.sflag [#allocation7], %s373
        %s375 = sand.u32 %s58, 1
        %s376 = smul.addr %s375, 32
        %s377 = scalar_lea.vmem [#allocation6], %s376
        // Predicated region
        $region53: #{tpu_custom_call.1} parent=51 // pred_check
          %p378 = pneg %p71
        $region54: #{tpu_custom_call.1} parent=51 // pred_check_branch
          %380 = sbr.rel (%p378) target = $region56
        $region55: #{tpu_custom_call.1} parent=51 // pred_region
          %381 = dma.done %s374, 512
        $region56: #{tpu_custom_call.1} parent=51 // pred_fallthru
          _
        %s382 = sand.u32 %s29, 1
        %s383 = scalar_lea.sflag [#allocation10], %s382
        %s384 = sand.u32 %s86, 1
        %s385 = smul.addr %s384, 32
        %s386 = scalar_lea.vmem [#allocation9], %s385
        // Predicated region
        $region57: #{tpu_custom_call.1} parent=51 // pred_check
          %p387 = pneg %p99
        $region58: #{tpu_custom_call.1} parent=51 // pred_check_branch
          %389 = sbr.rel (%p387) target = $region60
        $region59: #{tpu_custom_call.1} parent=51 // pred_region
          %390 = dma.done %s383, 512
        $region60: #{tpu_custom_call.1} parent=51 // pred_fallthru
          _
        // Predicated region
        $region61: #{tpu_custom_call.1} parent=51 // pred_check
          %p391 = pneg %p120
        $region62: #{tpu_custom_call.1} parent=51 // pred_check_branch
          %393 = sbr.rel (%p391) target = $region64
        $region63: #{tpu_custom_call.1} parent=51 // pred_region
          %394 = dma.done [#allocation10], 1024
        $region64: #{tpu_custom_call.1} parent=51 // pred_fallthru
          _
        // Predicated region
        $region65: #{tpu_custom_call.1} parent=51 // pred_check
          %p395 = pneg %p141
        $region66: #{tpu_custom_call.1} parent=51 // pred_check_branch
          %397 = sbr.rel (%p395) target = $region68
        $region67: #{tpu_custom_call.1} parent=51 // pred_region
          %398 = dma.done [#allocation13], 2048
        $region68: #{tpu_custom_call.1} parent=51 // pred_fallthru
          _
        // Predicated region
        $region69: #{tpu_custom_call.1} parent=51 // pred_check
          %p399 = pneg %p204
        $region70: #{tpu_custom_call.1} parent=51 // pred_check_branch
          %401 = sbr.rel (%p399) target = $region72
        $region71: #{tpu_custom_call.1} parent=51 // pred_region
          %402 = dma.done [#allocation13], 1024
        $region72: #{tpu_custom_call.1} parent=51 // pred_fallthru
          _
        %s403 = sand.u32 %s58, 1
        %s404 = scalar_lea.sflag [#allocation7], %s403
        %s405 = sand.u32 %s58, 1
        %s406 = smul.addr %s405, 32
        %s407 = scalar_lea.vmem [#allocation6], %s406
        %p408 = pneg %p71
        %p409 = pneg %p68
        %s410 = sand.u32 %s29, 1
        %s411 = scalar_lea.sflag [#allocation10], %s410
        %s412 = sand.u32 %s86, 1
        %s413 = smul.addr %s412, 32
        %s414 = scalar_lea.vmem [#allocation9], %s413
        %p415 = pneg %p99
        %p416 = pneg %p96
        %p417 = pneg %p120
        %p418 = pneg %p117
        %p419 = pneg %p141
        %p420 = pneg %p138
        %p421 = pneg %p162
        %p422 = pneg %p159
        %p423 = pneg %p183
        %p424 = pneg %p180
        %p425 = pneg %p204
        %p426 = pneg %p201
        %p427 = pneg %p225
        %p428 = pneg %p222
        %p429 = pneg %p253
        %p430 = pneg %p250
        %s431 = sand.u32 %s240, 1
        %s432 = scalar_lea.sflag [#allocation8], %s431
        %s433 = sand.u32 %s240, 1
        %s434 = smul.addr %s433, 64
        %s435 = scalar_lea.vmem [#allocation15], %s434
        %s436 = smul.u32 8, %s35
        %s437 = smul.u32 8, %s36
        %s438 = smul.u32 8, %s35
        %s440 = sadd.s32 %s35, 1
        %s441 = smul.u32 %s440, 64
        %s442 = smul.u32 %s36, 64
        %p443 = scmp.lt.s32.totalorder %s442, %s441
        %s444 = sadd.s32 %s36, 1
        %s445 = smul.u32 %s444, 64
        %p446 = scmp.ge.s32.totalorder %s445, %s441
        %p447 = pnand %p443, %p446
        %p448 = pneg %p447
        %p449 = scmp.eq.s32.totalorder %s36, 0
        // Predicated region
        $region73: #{tpu_custom_call.1} parent=51 // pred_check
          %p450 = pneg %p449
        $region74: #{tpu_custom_call.1} parent=51 // pred_check_branch
          %452 = sbr.rel (%p450) target = $region76
        $region75: #{tpu_custom_call.1} parent=51 // pred_region
          %v453 = vld [vmem:[%s377] sm:$0xf]
          %v454 = vld [vmem:[%s377 + $0x4] sm:$0xf]
          %v455 = vld [vmem:[%s377 + $0x8] sm:$0xf]
          %v456 = vld [vmem:[%s377 + $0xc] sm:$0xf]
          %v457 = vld [vmem:[%s377 + $0x10] sm:$0xf]
          %v458 = vld [vmem:[%s377 + $0x14] sm:$0xf]
          %v459 = vld [vmem:[%s377 + $0x18] sm:$0xf]
          %v460 = vld [vmem:[%s377 + $0x1c] sm:$0xf]
          %v461 = vld [vmem:[#allocation11] sm:$0xf]
          %v462 = vld [vmem:[#allocation11 + $0x4] sm:$0xf]
          %v463 = vld [vmem:[#allocation11 + $0x8] sm:$0xf]
          %v464 = vld [vmem:[#allocation11 + $0xc] sm:$0xf]
          %v465 = vld [vmem:[#allocation11 + $0x10] sm:$0xf]
          %v466 = vld [vmem:[#allocation11 + $0x14] sm:$0xf]
          %v467 = vld [vmem:[#allocation11 + $0x18] sm:$0xf]
          %v468 = vld [vmem:[#allocation11 + $0x1c] sm:$0xf]
          %v469 = vld [vmem:[#allocation11 + $0x20] sm:$0xf]
          %v470 = vld [vmem:[#allocation11 + $0x24] sm:$0xf]
          %v471 = vld [vmem:[#allocation11 + $0x28] sm:$0xf]
          %v472 = vld [vmem:[#allocation11 + $0x2c] sm:$0xf]
          %v473 = vld [vmem:[#allocation11 + $0x30] sm:$0xf]
          %v474 = vld [vmem:[#allocation11 + $0x34] sm:$0xf]
          %v475 = vld [vmem:[#allocation11 + $0x38] sm:$0xf]
          %v476 = vld [vmem:[#allocation11 + $0x3c] sm:$0xf]
          %v477 = vld [vmem:[%s4] sm:$0x1]
          %v479 = vlaneseq
          %v480 = vshrl.u32 %v479, 7
          %v481 = vsub.s32 0, %v480
          %v482 = vrot.slane %v477, %v481
          %v492 = vunpack.c.l.b16 %v453
          %v493 = vunpack.c.l.b16 %v454
          %v494 = vunpack.c.l.b16 %v455
          %v495 = vunpack.c.l.b16 %v456
          %v496 = vunpack.c.l.b16 %v457
          %v497 = vunpack.c.l.b16 %v458
          %v498 = vunpack.c.l.b16 %v459
          %v499 = vunpack.c.l.b16 %v460
          %v500 = vpack.c.b16 %v493, %v492
          %v501 = vpack.c.b16 %v495, %v494
          %v502 = vpack.c.b16 %v497, %v496
          %v503 = vpack.c.b16 %v499, %v498
          %v524 = vunpack.c.l.b16 %v461
          %v525 = vunpack.c.l.b16 %v462
          %v526 = vunpack.c.l.b16 %v463
          %v527 = vunpack.c.l.b16 %v464
          %v528 = vunpack.c.l.b16 %v465
          %v529 = vunpack.c.l.b16 %v466
          %v530 = vunpack.c.l.b16 %v467
          %v531 = vunpack.c.l.b16 %v468
          %v532 = vunpack.c.l.b16 %v469
          %v533 = vunpack.c.l.b16 %v470
          %v534 = vunpack.c.l.b16 %v471
          %v535 = vunpack.c.l.b16 %v472
          %v536 = vunpack.c.l.b16 %v473
          %v537 = vunpack.c.l.b16 %v474
          %v538 = vunpack.c.l.b16 %v475
          %v539 = vunpack.c.l.b16 %v476
          %v540 = vpack.c.b16 %v525, %v524
          %v541 = vpack.c.b16 %v527, %v526
          %v542 = vpack.c.b16 %v529, %v528
          %v543 = vpack.c.b16 %v531, %v530
          %v544 = vpack.c.b16 %v533, %v532
          %v545 = vpack.c.b16 %v535, %v534
          %v546 = vpack.c.b16 %v537, %v536
          %v547 = vpack.c.b16 %v539, %v538
          %556 = vmatprep.subr.bf16.mxu0 0
          %557 = vmatpush1.bf16.msra.mxu0 %v540
          %558 = vmatprep.subr.bf16.mxu0 0
          %559 = vmatpush1.bf16.msra.mxu0 %v541
          %560 = vmatprep.subr.bf16.mxu0 0
          %561 = vmatpush1.bf16.msra.mxu0 %v542
          %562 = vmatprep.subr.bf16.mxu0 0
          %563 = vmatpush1.bf16.msra.mxu0 %v543
          %564 = vmatprep.subr.bf16.mxu0 0
          %565 = vmatpush1.bf16.msra.mxu0 %v544
          %566 = vmatprep.subr.bf16.mxu0 0
          %567 = vmatpush1.bf16.msra.mxu0 %v545
          %568 = vmatprep.subr.bf16.mxu0 0
          %569 = vmatpush1.bf16.msra.mxu0 %v546
          %570 = vmatprep.subr.bf16.mxu0 0
          %571 = vmatpush1.bf16.msra.mxu0 %v547
          %572 = vmatprep.subr.bf16.mxu0 0
          %573 = vmatpush1.bf16.msra.mxu0 0
          %574 = vmatprep.subr.bf16.mxu0 0
          %575 = vmatpush1.bf16.msra.mxu0 0
          %576 = vmatprep.subr.bf16.mxu0 0
          %577 = vmatpush1.bf16.msra.mxu0 0
          %578 = vmatprep.subr.bf16.mxu0 0
          %579 = vmatpush1.bf16.msra.mxu0 0
          %580 = vmatprep.subr.bf16.mxu0 0
          %581 = vmatpush1.bf16.msra.mxu0 0
          %582 = vmatprep.subr.bf16.mxu0 0
          %583 = vmatpush1.bf16.msra.mxu0 0
          %584 = vmatprep.subr.bf16.mxu0 0
          %585 = vmatpush1.bf16.msra.mxu0 0
          %586 = vmatprep.subr.bf16.mxu0 0
          %587 = vmatpush1.bf16.msra.mxu0 0
          %588 = vmatprep.mubr.bf16.mxu0 0
          %589 = vmatmul.mubr.bf16.gmra.mrb[0].mxu0 %v500
          %v590 = vpop.f32.mrb[0].mxu0
          %v591 = vadd.f32 %v482, %v590
          %v592 = vpop.f32.mrb[0].mxu0
          %v593 = vpop.f32.mrb[0].mxu0
          %v594 = vadd.f32 %v482, %v593
          %v595 = vpop.f32.mrb[0].mxu0
          %596 = vmatprep.mubr.bf16.mxu0 0
          %597 = vmatmul.mubr.bf16.gmra.mrb[0].mxu0 %v501
          %v598 = vpop.f32.mrb[0].mxu0
          %v599 = vadd.f32 %v482, %v598
          %v600 = vpop.f32.mrb[0].mxu0
          %v601 = vpop.f32.mrb[0].mxu0
          %v602 = vadd.f32 %v482, %v601
          %v603 = vpop.f32.mrb[0].mxu0
          %604 = vmatprep.mubr.bf16.mxu0 0
          %605 = vmatmul.mubr.bf16.gmra.mrb[0].mxu0 %v502
          %v606 = vpop.f32.mrb[0].mxu0
          %v607 = vadd.f32 %v482, %v606
          %v608 = vpop.f32.mrb[0].mxu0
          %v609 = vpop.f32.mrb[0].mxu0
          %v610 = vadd.f32 %v482, %v609
          %v611 = vpop.f32.mrb[0].mxu0
          %612 = vmatprep.mubr.bf16.mxu0 0
          %613 = vmatmul.mubr.bf16.gmra.mrb[0].mxu0 %v503
          %v614 = vpop.f32.mrb[0].mxu0
          %v615 = vadd.f32 %v482, %v614
          %v616 = vpop.f32.mrb[0].mxu0
          %v617 = vpop.f32.mrb[0].mxu0
          %v618 = vadd.f32 %v482, %v617
          %v619 = vpop.f32.mrb[0].mxu0
          %620 = vdwg.mxu0
          %v621 = vpack.c.bf16 %v594, %v591
          %v622 = vpack.c.bf16 %v602, %v599
          %v623 = vpack.c.bf16 %v610, %v607
          %v624 = vpack.c.bf16 %v618, %v615
          %629 = vrot.lane.b32.xlu0 %v621, 96
          %v630 = vpop.permute.xlu0 %629
          %631 = vrot.lane.b32.xlu0 %v622, 96
          %v632 = vpop.permute.xlu0 %631
          %633 = vrot.lane.b32.xlu0 %v623, 96
          %v634 = vpop.permute.xlu0 %633
          %635 = vrot.lane.b32.xlu0 %v624, 96
          %v636 = vpop.permute.xlu0 %635
          %641 = vrot.lane.b32.xlu0 %v621, 64
          %v642 = vpop.permute.xlu0 %641
          %643 = vrot.lane.b32.xlu0 %v622, 64
          %v644 = vpop.permute.xlu0 %643
          %645 = vrot.lane.b32.xlu0 %v623, 64
          %v646 = vpop.permute.xlu0 %645
          %647 = vrot.lane.b32.xlu0 %v624, 64
          %v648 = vpop.permute.xlu0 %647
          %653 = vrot.lane.b32.xlu0 %v621, 32
          %v654 = vpop.permute.xlu0 %653
          %655 = vrot.lane.b32.xlu0 %v622, 32
          %v656 = vpop.permute.xlu0 %655
          %657 = vrot.lane.b32.xlu0 %v623, 32
          %v658 = vpop.permute.xlu0 %657
          %659 = vrot.lane.b32.xlu0 %v624, 32
          %v660 = vpop.permute.xlu0 %659
          %vm665 = vcmask 261120
          %666 = vst.msk [vmem:[#allocation2] sm:$0xff] %vm665, %v621
          %667 = vst.msk [vmem:[#allocation2 + $0x8] sm:$0xff] %vm665, %v622
          %668 = vst.msk [vmem:[#allocation2 + $0x10] sm:$0xff] %vm665, %v623
          %669 = vst.msk [vmem:[#allocation2 + $0x18] sm:$0xff] %vm665, %v624
          %670 = vst.msk [vmem:[#allocation2 + $0x20] sm:$0xff] %vm665, %v630
          %671 = vst.msk [vmem:[#allocation2 + $0x28] sm:$0xff] %vm665, %v632
          %672 = vst.msk [vmem:[#allocation2 + $0x30] sm:$0xff] %vm665, %v634
          %673 = vst.msk [vmem:[#allocation2 + $0x38] sm:$0xff] %vm665, %v636
          %674 = vst.msk [vmem:[#allocation2 + $0x40] sm:$0xff] %vm665, %v642
          %675 = vst.msk [vmem:[#allocation2 + $0x48] sm:$0xff] %vm665, %v644
          %676 = vst.msk [vmem:[#allocation2 + $0x50] sm:$0xff] %vm665, %v646
          %677 = vst.msk [vmem:[#allocation2 + $0x58] sm:$0xff] %vm665, %v648
          %678 = vst.msk [vmem:[#allocation2 + $0x60] sm:$0xff] %vm665, %v654
          %679 = vst.msk [vmem:[#allocation2 + $0x68] sm:$0xff] %vm665, %v656
          %680 = vst.msk [vmem:[#allocation2 + $0x70] sm:$0xff] %vm665, %v658
          %681 = vst.msk [vmem:[#allocation2 + $0x78] sm:$0xff] %vm665, %v660
          %vm682 = vcmask 7168
          %683 = vst.msk [vmem:[#allocation3] sm:$0xff] %vm682, -1e+30
          %684 = vst.msk [vmem:[#allocation3 + $0x8] sm:$0xff] %vm682, -1e+30
          %685 = vst.msk [vmem:[#allocation3 + $0x10] sm:$0xff] %vm682, -1e+30
          %686 = vst.msk [vmem:[#allocation3 + $0x18] sm:$0xff] %vm682, -1e+30
          %687 = vst.msk [vmem:[#allocation3 + $0x20] sm:$0xff] %vm682, -1e+30
          %688 = vst.msk [vmem:[#allocation3 + $0x28] sm:$0xff] %vm682, -1e+30
          %689 = vst.msk [vmem:[#allocation3 + $0x30] sm:$0xff] %vm682, -1e+30
          %690 = vst.msk [vmem:[#allocation3 + $0x38] sm:$0xff] %vm682, -1e+30
          %691 = vst.msk [vmem:[#allocation3 + $0x40] sm:$0xff] %vm682, -1e+30
          %692 = vst.msk [vmem:[#allocation3 + $0x48] sm:$0xff] %vm682, -1e+30
          %693 = vst.msk [vmem:[#allocation3 + $0x50] sm:$0xff] %vm682, -1e+30
          %694 = vst.msk [vmem:[#allocation3 + $0x58] sm:$0xff] %vm682, -1e+30
          %695 = vst.msk [vmem:[#allocation3 + $0x60] sm:$0xff] %vm682, -1e+30
          %696 = vst.msk [vmem:[#allocation3 + $0x68] sm:$0xff] %vm682, -1e+30
          %697 = vst.msk [vmem:[#allocation3 + $0x70] sm:$0xff] %vm682, -1e+30
          %698 = vst.msk [vmem:[#allocation3 + $0x78] sm:$0xff] %vm682, -1e+30
          %699 = vst.msk [vmem:[#allocation3 + $0x80] sm:$0xff] %vm682, -1e+30
          %700 = vst.msk [vmem:[#allocation3 + $0x88] sm:$0xff] %vm682, -1e+30
          %701 = vst.msk [vmem:[#allocation3 + $0x90] sm:$0xff] %vm682, -1e+30
          %702 = vst.msk [vmem:[#allocation3 + $0x98] sm:$0xff] %vm682, -1e+30
          %703 = vst.msk [vmem:[#allocation3 + $0xa0] sm:$0xff] %vm682, -1e+30
          %704 = vst.msk [vmem:[#allocation3 + $0xa8] sm:$0xff] %vm682, -1e+30
          %705 = vst.msk [vmem:[#allocation3 + $0xb0] sm:$0xff] %vm682, -1e+30
          %706 = vst.msk [vmem:[#allocation3 + $0xb8] sm:$0xff] %vm682, -1e+30
          %707 = vst.msk [vmem:[#allocation3 + $0xc0] sm:$0xff] %vm682, -1e+30
          %708 = vst.msk [vmem:[#allocation3 + $0xc8] sm:$0xff] %vm682, -1e+30
          %709 = vst.msk [vmem:[#allocation3 + $0xd0] sm:$0xff] %vm682, -1e+30
          %710 = vst.msk [vmem:[#allocation3 + $0xd8] sm:$0xff] %vm682, -1e+30
          %711 = vst.msk [vmem:[#allocation3 + $0xe0] sm:$0xff] %vm682, -1e+30
          %712 = vst.msk [vmem:[#allocation3 + $0xe8] sm:$0xff] %vm682, -1e+30
          %713 = vst.msk [vmem:[#allocation3 + $0xf0] sm:$0xff] %vm682, -1e+30
          %714 = vst.msk [vmem:[#allocation3 + $0xf8] sm:$0xff] %vm682, -1e+30
          %715 = vst.msk [vmem:[#allocation4] sm:$0xff] %vm682, 0.0
          %716 = vst.msk [vmem:[#allocation4 + $0x8] sm:$0xff] %vm682, 0.0
          %717 = vst.msk [vmem:[#allocation4 + $0x10] sm:$0xff] %vm682, 0.0
          %718 = vst.msk [vmem:[#allocation4 + $0x18] sm:$0xff] %vm682, 0.0
          %719 = vst.msk [vmem:[#allocation4 + $0x20] sm:$0xff] %vm682, 0.0
          %720 = vst.msk [vmem:[#allocation4 + $0x28] sm:$0xff] %vm682, 0.0
          %721 = vst.msk [vmem:[#allocation4 + $0x30] sm:$0xff] %vm682, 0.0
          %722 = vst.msk [vmem:[#allocation4 + $0x38] sm:$0xff] %vm682, 0.0
          %723 = vst.msk [vmem:[#allocation4 + $0x40] sm:$0xff] %vm682, 0.0
          %724 = vst.msk [vmem:[#allocation4 + $0x48] sm:$0xff] %vm682, 0.0
          %725 = vst.msk [vmem:[#allocation4 + $0x50] sm:$0xff] %vm682, 0.0
          %726 = vst.msk [vmem:[#allocation4 + $0x58] sm:$0xff] %vm682, 0.0
          %727 = vst.msk [vmem:[#allocation4 + $0x60] sm:$0xff] %vm682, 0.0
          %728 = vst.msk [vmem:[#allocation4 + $0x68] sm:$0xff] %vm682, 0.0
          %729 = vst.msk [vmem:[#allocation4 + $0x70] sm:$0xff] %vm682, 0.0
          %730 = vst.msk [vmem:[#allocation4 + $0x78] sm:$0xff] %vm682, 0.0
          %731 = vst.msk [vmem:[#allocation4 + $0x80] sm:$0xff] %vm682, 0.0
          %732 = vst.msk [vmem:[#allocation4 + $0x88] sm:$0xff] %vm682, 0.0
          %733 = vst.msk [vmem:[#allocation4 + $0x90] sm:$0xff] %vm682, 0.0
          %734 = vst.msk [vmem:[#allocation4 + $0x98] sm:$0xff] %vm682, 0.0
          %735 = vst.msk [vmem:[#allocation4 + $0xa0] sm:$0xff] %vm682, 0.0
          %736 = vst.msk [vmem:[#allocation4 + $0xa8] sm:$0xff] %vm682, 0.0
          %737 = vst.msk [vmem:[#allocation4 + $0xb0] sm:$0xff] %vm682, 0.0
          %738 = vst.msk [vmem:[#allocation4 + $0xb8] sm:$0xff] %vm682, 0.0
          %739 = vst.msk [vmem:[#allocation4 + $0xc0] sm:$0xff] %vm682, 0.0
          %740 = vst.msk [vmem:[#allocation4 + $0xc8] sm:$0xff] %vm682, 0.0
          %741 = vst.msk [vmem:[#allocation4 + $0xd0] sm:$0xff] %vm682, 0.0
          %742 = vst.msk [vmem:[#allocation4 + $0xd8] sm:$0xff] %vm682, 0.0
          %743 = vst.msk [vmem:[#allocation4 + $0xe0] sm:$0xff] %vm682, 0.0
          %744 = vst.msk [vmem:[#allocation4 + $0xe8] sm:$0xff] %vm682, 0.0
          %745 = vst.msk [vmem:[#allocation4 + $0xf0] sm:$0xff] %vm682, 0.0
          %746 = vst.msk [vmem:[#allocation4 + $0xf8] sm:$0xff] %vm682, 0.0
          %747 = vst.msk [vmem:[#allocation5] sm:$0xff] %vm665, 0.0
          %748 = vst.msk [vmem:[#allocation5 + $0x8] sm:$0xff] %vm665, 0.0
          %749 = vst.msk [vmem:[#allocation5 + $0x10] sm:$0xff] %vm665, 0.0
          %750 = vst.msk [vmem:[#allocation5 + $0x18] sm:$0xff] %vm665, 0.0
          %751 = vst.msk [vmem:[#allocation5 + $0x20] sm:$0xff] %vm665, 0.0
          %752 = vst.msk [vmem:[#allocation5 + $0x28] sm:$0xff] %vm665, 0.0
          %753 = vst.msk [vmem:[#allocation5 + $0x30] sm:$0xff] %vm665, 0.0
          %754 = vst.msk [vmem:[#allocation5 + $0x38] sm:$0xff] %vm665, 0.0
          %755 = vst.msk [vmem:[#allocation5 + $0x40] sm:$0xff] %vm665, 0.0
          %756 = vst.msk [vmem:[#allocation5 + $0x48] sm:$0xff] %vm665, 0.0
          %757 = vst.msk [vmem:[#allocation5 + $0x50] sm:$0xff] %vm665, 0.0
          %758 = vst.msk [vmem:[#allocation5 + $0x58] sm:$0xff] %vm665, 0.0
          %759 = vst.msk [vmem:[#allocation5 + $0x60] sm:$0xff] %vm665, 0.0
          %760 = vst.msk [vmem:[#allocation5 + $0x68] sm:$0xff] %vm665, 0.0
          %761 = vst.msk [vmem:[#allocation5 + $0x70] sm:$0xff] %vm665, 0.0
          %762 = vst.msk [vmem:[#allocation5 + $0x78] sm:$0xff] %vm665, 0.0
          %763 = vst.msk [vmem:[#allocation5 + $0x80] sm:$0xff] %vm665, 0.0
          %764 = vst.msk [vmem:[#allocation5 + $0x88] sm:$0xff] %vm665, 0.0
          %765 = vst.msk [vmem:[#allocation5 + $0x90] sm:$0xff] %vm665, 0.0
          %766 = vst.msk [vmem:[#allocation5 + $0x98] sm:$0xff] %vm665, 0.0
          %767 = vst.msk [vmem:[#allocation5 + $0xa0] sm:$0xff] %vm665, 0.0
          %768 = vst.msk [vmem:[#allocation5 + $0xa8] sm:$0xff] %vm665, 0.0
          %769 = vst.msk [vmem:[#allocation5 + $0xb0] sm:$0xff] %vm665, 0.0
          %770 = vst.msk [vmem:[#allocation5 + $0xb8] sm:$0xff] %vm665, 0.0
          %771 = vst.msk [vmem:[#allocation5 + $0xc0] sm:$0xff] %vm665, 0.0
          %772 = vst.msk [vmem:[#allocation5 + $0xc8] sm:$0xff] %vm665, 0.0
          %773 = vst.msk [vmem:[#allocation5 + $0xd0] sm:$0xff] %vm665, 0.0
          %774 = vst.msk [vmem:[#allocation5 + $0xd8] sm:$0xff] %vm665, 0.0
          %775 = vst.msk [vmem:[#allocation5 + $0xe0] sm:$0xff] %vm665, 0.0
          %776 = vst.msk [vmem:[#allocation5 + $0xe8] sm:$0xff] %vm665, 0.0
          %777 = vst.msk [vmem:[#allocation5 + $0xf0] sm:$0xff] %vm665, 0.0
          %778 = vst.msk [vmem:[#allocation5 + $0xf8] sm:$0xff] %vm665, 0.0
        $region76: #{tpu_custom_call.1} parent=51 // pred_fallthru
          _
        // Predicated region
        $region77: #{tpu_custom_call.1} parent=51 // pred_check
          %p779 = pneg %p443
        $region78: #{tpu_custom_call.1} parent=51 // pred_check_branch
          %781 = sbr.rel (%p779) target = $region80
        $region79: #{tpu_custom_call.1} parent=51 // pred_region
          %v782 = vld [vmem:[%s386] sm:$0xf]
          %v783 = vld [vmem:[%s386 + $0x4] sm:$0xf]
          %v784 = vld [vmem:[%s386 + $0x8] sm:$0xf]
          %v785 = vld [vmem:[%s386 + $0xc] sm:$0xf]
          %v786 = vld [vmem:[%s386 + $0x10] sm:$0xf]
          %v787 = vld [vmem:[%s386 + $0x14] sm:$0xf]
          %v788 = vld [vmem:[%s386 + $0x18] sm:$0xf]
          %v789 = vld [vmem:[%s386 + $0x1c] sm:$0xf]
          %v790 = vld [vmem:[#allocation12] sm:$0xff]
          %v791 = vld [vmem:[#allocation12 + $0x8] sm:$0xff]
          %v792 = vld [vmem:[#allocation12 + $0x10] sm:$0xff]
          %v793 = vld [vmem:[#allocation12 + $0x18] sm:$0xff]
          %v794 = vld [vmem:[#allocation12 + $0x20] sm:$0xff]
          %v795 = vld [vmem:[#allocation12 + $0x28] sm:$0xff]
          %v796 = vld [vmem:[#allocation12 + $0x30] sm:$0xff]
          %v797 = vld [vmem:[#allocation12 + $0x38] sm:$0xff]
          %v798 = vld [vmem:[#allocation12 + $0x40] sm:$0xff]
          %v799 = vld [vmem:[#allocation12 + $0x48] sm:$0xff]
          %v800 = vld [vmem:[#allocation12 + $0x50] sm:$0xff]
          %v801 = vld [vmem:[#allocation12 + $0x58] sm:$0xff]
          %v802 = vld [vmem:[#allocation12 + $0x60] sm:$0xff]
          %v803 = vld [vmem:[#allocation12 + $0x68] sm:$0xff]
          %v804 = vld [vmem:[#allocation12 + $0x70] sm:$0xff]
          %v805 = vld [vmem:[#allocation12 + $0x78] sm:$0xff]
          %v806 = vld [vmem:[%s5] sm:$0x3]
          %v808 = vlaneseq
          %v809 = vshrl.u32 %v808, 7
          %v810 = vsub.s32 0, %v809
          %v811 = vrot.slane %v806, %v810
          %v812 = vlaneseq
          %v813 = vshrl.u32 %v812, 7
          %v814 = vsub.s32 1, %v813
          %v815 = vrot.slane %v806, %v814
          %v826 = vunpack.c.l.b16 %v782
          %v827 = vunpack.c.l.b16 %v783
          %v828 = vunpack.c.l.b16 %v784
          %v829 = vunpack.c.l.b16 %v785
          %v830 = vunpack.c.l.b16 %v786
          %v831 = vunpack.c.l.b16 %v787
          %v832 = vunpack.c.l.b16 %v788
          %v833 = vunpack.c.l.b16 %v789
          %v834 = vpack.c.b16 %v827, %v826
          %v835 = vpack.c.b16 %v829, %v828
          %v836 = vpack.c.b16 %v831, %v830
          %v837 = vpack.c.b16 %v833, %v832
          %v858 = vunpack.c.l.b16 %v790
          %v859 = vunpack.c.h.b16 %v790
          %v860 = vunpack.c.l.b16 %v791
          %v861 = vunpack.c.h.b16 %v791
          %v862 = vunpack.c.l.b16 %v792
          %v863 = vunpack.c.h.b16 %v792
          %v864 = vunpack.c.l.b16 %v793
          %v865 = vunpack.c.h.b16 %v793
          %v866 = vunpack.c.l.b16 %v794
          %v867 = vunpack.c.h.b16 %v794
          %v868 = vunpack.c.l.b16 %v795
          %v869 = vunpack.c.h.b16 %v795
          %v870 = vunpack.c.l.b16 %v796
          %v871 = vunpack.c.h.b16 %v796
          %v872 = vunpack.c.l.b16 %v797
          %v873 = vunpack.c.h.b16 %v797
          %v874 = vunpack.c.l.b16 %v798
          %v875 = vunpack.c.h.b16 %v798
          %v876 = vunpack.c.l.b16 %v799
          %v877 = vunpack.c.h.b16 %v799
          %v878 = vunpack.c.l.b16 %v800
          %v879 = vunpack.c.h.b16 %v800
          %v880 = vunpack.c.l.b16 %v801
          %v881 = vunpack.c.h.b16 %v801
          %v882 = vunpack.c.l.b16 %v802
          %v883 = vunpack.c.h.b16 %v802
          %v884 = vunpack.c.l.b16 %v803
          %v885 = vunpack.c.h.b16 %v803
          %v886 = vunpack.c.l.b16 %v804
          %v887 = vunpack.c.h.b16 %v804
          %v888 = vunpack.c.l.b16 %v805
          %v889 = vunpack.c.h.b16 %v805
          %v890 = vpack.c.b16 %v860, %v858
          %v891 = vpack.c.b16 %v861, %v859
          %v892 = vpack.c.b16 %v864, %v862
          %v893 = vpack.c.b16 %v865, %v863
          %v894 = vpack.c.b16 %v868, %v866
          %v895 = vpack.c.b16 %v869, %v867
          %v896 = vpack.c.b16 %v872, %v870
          %v897 = vpack.c.b16 %v873, %v871
          %v898 = vpack.c.b16 %v876, %v874
          %v899 = vpack.c.b16 %v877, %v875
          %v900 = vpack.c.b16 %v880, %v878
          %v901 = vpack.c.b16 %v881, %v879
          %v902 = vpack.c.b16 %v884, %v882
          %v903 = vpack.c.b16 %v885, %v883
          %v904 = vpack.c.b16 %v888, %v886
          %v905 = vpack.c.b16 %v889, %v887
          %922 = vmatprep.subr.bf16.mxu0 %v891
          %923 = vmatpush1.bf16.msra.mxu0 %v890
          %924 = vmatprep.subr.bf16.mxu0 %v893
          %925 = vmatpush1.bf16.msra.mxu0 %v892
          %926 = vmatprep.subr.bf16.mxu0 %v895
          %927 = vmatpush1.bf16.msra.mxu0 %v894
          %928 = vmatprep.subr.bf16.mxu0 %v897
          %929 = vmatpush1.bf16.msra.mxu0 %v896
          %930 = vmatprep.subr.bf16.mxu0 %v899
          %931 = vmatpush1.bf16.msra.mxu0 %v898
          %932 = vmatprep.subr.bf16.mxu0 %v901
          %933 = vmatpush1.bf16.msra.mxu0 %v900
          %934 = vmatprep.subr.bf16.mxu0 %v903
          %935 = vmatpush1.bf16.msra.mxu0 %v902
          %936 = vmatprep.subr.bf16.mxu0 %v905
          %937 = vmatpush1.bf16.msra.mxu0 %v904
          %938 = vmatprep.subr.bf16.mxu0 0
          %939 = vmatpush1.bf16.msra.mxu0 0
          %940 = vmatprep.subr.bf16.mxu0 0
          %941 = vmatpush1.bf16.msra.mxu0 0
          %942 = vmatprep.subr.bf16.mxu0 0
          %943 = vmatpush1.bf16.msra.mxu0 0
          %944 = vmatprep.subr.bf16.mxu0 0
          %945 = vmatpush1.bf16.msra.mxu0 0
          %946 = vmatprep.subr.bf16.mxu0 0
          %947 = vmatpush1.bf16.msra.mxu0 0
          %948 = vmatprep.subr.bf16.mxu0 0
          %949 = vmatpush1.bf16.msra.mxu0 0
          %950 = vmatprep.subr.bf16.mxu0 0
          %951 = vmatpush1.bf16.msra.mxu0 0
          %952 = vmatprep.subr.bf16.mxu0 0
          %953 = vmatpush1.bf16.msra.mxu0 0
          %954 = vmatprep.mubr.bf16.mxu0 0
          %955 = vmatmul.mubr.bf16.gmra.mrb[0].mxu0 %v834
          %v956 = vpop.f32.mrb[0].mxu0
          %v957 = vadd.f32 %v811, %v956
          %v958 = vpop.f32.mrb[0].mxu0
          %v959 = vadd.f32 %v815, %v958
          %v960 = vpop.f32.mrb[0].mxu0
          %v961 = vadd.f32 %v811, %v960
          %v962 = vpop.f32.mrb[0].mxu0
          %v963 = vadd.f32 %v815, %v962
          %964 = vmatprep.mubr.bf16.mxu0 0
          %965 = vmatmul.mubr.bf16.gmra.mrb[0].mxu0 %v835
          %v966 = vpop.f32.mrb[0].mxu0
          %v967 = vadd.f32 %v811, %v966
          %v968 = vpop.f32.mrb[0].mxu0
          %v969 = vadd.f32 %v815, %v968
          %v970 = vpop.f32.mrb[0].mxu0
          %v971 = vadd.f32 %v811, %v970
          %v972 = vpop.f32.mrb[0].mxu0
          %v973 = vadd.f32 %v815, %v972
          %974 = vmatprep.mubr.bf16.mxu0 0
          %975 = vmatmul.mubr.bf16.gmra.mrb[0].mxu0 %v836
          %v976 = vpop.f32.mrb[0].mxu0
          %v977 = vadd.f32 %v811, %v976
          %v978 = vpop.f32.mrb[0].mxu0
          %v979 = vadd.f32 %v815, %v978
          %v980 = vpop.f32.mrb[0].mxu0
          %v981 = vadd.f32 %v811, %v980
          %v982 = vpop.f32.mrb[0].mxu0
          %v983 = vadd.f32 %v815, %v982
          %984 = vmatprep.mubr.bf16.mxu0 0
          %985 = vmatmul.mubr.bf16.gmra.mrb[0].mxu0 %v837
          %v986 = vpop.f32.mrb[0].mxu0
          %v987 = vadd.f32 %v811, %v986
          %v988 = vpop.f32.mrb[0].mxu0
          %v989 = vadd.f32 %v815, %v988
          %v990 = vpop.f32.mrb[0].mxu0
          %v991 = vadd.f32 %v811, %v990
          %v992 = vpop.f32.mrb[0].mxu0
          %v993 = vadd.f32 %v815, %v992
          %994 = vdwg.mxu0
          %v995 = vpack.c.bf16 %v961, %v957
          %v996 = vpack.c.bf16 %v963, %v959
          %v997 = vpack.c.bf16 %v971, %v967
          %v998 = vpack.c.bf16 %v973, %v969
          %v999 = vpack.c.bf16 %v981, %v977
          %v1000 = vpack.c.bf16 %v983, %v979
          %v1001 = vpack.c.bf16 %v991, %v987
          %v1002 = vpack.c.bf16 %v993, %v989
          %1007 = vrot.lane.b32.xlu0 %v995, 96
          %v1008 = vpop.permute.xlu0 %1007
          %1009 = vrot.lane.b32.xlu0 %v997, 96
          %v1010 = vpop.permute.xlu0 %1009
          %1011 = vrot.lane.b32.xlu0 %v999, 96
          %v1012 = vpop.permute.xlu0 %1011
          %1013 = vrot.lane.b32.xlu0 %v1001, 96
          %v1014 = vpop.permute.xlu0 %1013
          %1015 = vrot.lane.b32.xlu0 %v995, 64
          %v1016 = vpop.permute.xlu0 %1015
          %1017 = vrot.lane.b32.xlu0 %v997, 64
          %v1018 = vpop.permute.xlu0 %1017
          %1019 = vrot.lane.b32.xlu0 %v999, 64
          %v1020 = vpop.permute.xlu0 %1019
          %1021 = vrot.lane.b32.xlu0 %v1001, 64
          %v1022 = vpop.permute.xlu0 %1021
          %1023 = vrot.lane.b32.xlu0 %v995, 32
          %v1024 = vpop.permute.xlu0 %1023
          %1025 = vrot.lane.b32.xlu0 %v997, 32
          %v1026 = vpop.permute.xlu0 %1025
          %1027 = vrot.lane.b32.xlu0 %v999, 32
          %v1028 = vpop.permute.xlu0 %1027
          %1029 = vrot.lane.b32.xlu0 %v1001, 32
          %v1030 = vpop.permute.xlu0 %1029
          %1035 = vrot.lane.b32.xlu0 %v996, 96
          %v1036 = vpop.permute.xlu0 %1035
          %1037 = vrot.lane.b32.xlu0 %v998, 96
          %v1038 = vpop.permute.xlu0 %1037
          %1039 = vrot.lane.b32.xlu0 %v1000, 96
          %v1040 = vpop.permute.xlu0 %1039
          %1041 = vrot.lane.b32.xlu0 %v1002, 96
          %v1042 = vpop.permute.xlu0 %1041
          %1047 = vrot.lane.b32.xlu0 %v996, 64
          %v1048 = vpop.permute.xlu0 %1047
          %1049 = vrot.lane.b32.xlu0 %v998, 64
          %v1050 = vpop.permute.xlu0 %1049
          %1051 = vrot.lane.b32.xlu0 %v1000, 64
          %v1052 = vpop.permute.xlu0 %1051
          %1053 = vrot.lane.b32.xlu0 %v1002, 64
          %v1054 = vpop.permute.xlu0 %1053
          %1059 = vrot.lane.b32.xlu0 %v996, 32
          %v1060 = vpop.permute.xlu0 %1059
          %1061 = vrot.lane.b32.xlu0 %v998, 32
          %v1062 = vpop.permute.xlu0 %1061
          %1063 = vrot.lane.b32.xlu0 %v1000, 32
          %v1064 = vpop.permute.xlu0 %1063
          %1065 = vrot.lane.b32.xlu0 %v1002, 32
          %v1066 = vpop.permute.xlu0 %1065
          %v1071 = vld [vmem:[#allocation2] sm:$0xff]
          %v1072 = vld [vmem:[#allocation2 + $0x8] sm:$0xff]
          %v1073 = vld [vmem:[#allocation2 + $0x10] sm:$0xff]
          %v1074 = vld [vmem:[#allocation2 + $0x18] sm:$0xff]
          %v1075 = vld [vmem:[#allocation2 + $0x20] sm:$0xff]
          %v1076 = vld [vmem:[#allocation2 + $0x28] sm:$0xff]
          %v1077 = vld [vmem:[#allocation2 + $0x30] sm:$0xff]
          %v1078 = vld [vmem:[#allocation2 + $0x38] sm:$0xff]
          %v1079 = vld [vmem:[#allocation2 + $0x40] sm:$0xff]
          %v1080 = vld [vmem:[#allocation2 + $0x48] sm:$0xff]
          %v1081 = vld [vmem:[#allocation2 + $0x50] sm:$0xff]
          %v1082 = vld [vmem:[#allocation2 + $0x58] sm:$0xff]
          %v1083 = vld [vmem:[#allocation2 + $0x60] sm:$0xff]
          %v1084 = vld [vmem:[#allocation2 + $0x68] sm:$0xff]
          %v1085 = vld [vmem:[#allocation2 + $0x70] sm:$0xff]
          %v1086 = vld [vmem:[#allocation2 + $0x78] sm:$0xff]
          %vm1087 = vcmask 261120
          %v1089 = vsel %vm1087, %v1071, 0
          %v1092 = vsel %vm1087, %v1072, 0
          %v1095 = vsel %vm1087, %v1073, 0
          %v1098 = vsel %vm1087, %v1074, 0
          %v1101 = vsel %vm1087, %v995, 0
          %v1104 = vsel %vm1087, %v997, 0
          %v1107 = vsel %vm1087, %v999, 0
          %v1110 = vsel %vm1087, %v1001, 0
          %1112 = vmatprep.subr.bf16.mxu0 0
          %1113 = vmatpush1.bf16.xpose.msra.mxu0 %v1101
          %1114 = vmatprep.subr.bf16.mxu0 0
          %1115 = vmatpush1.bf16.xpose.msra.mxu0 %v1104
          %1116 = vmatprep.subr.bf16.mxu0 0
          %1117 = vmatpush1.bf16.xpose.msra.mxu0 %v1107
          %1118 = vmatprep.subr.bf16.mxu0 0
          %1119 = vmatpush1.bf16.xpose.msra.mxu0 %v1110
          %1120 = vmatprep.subr.bf16.mxu0 0
          %1121 = vmatpush1.bf16.xpose.msra.mxu0 0
          %1122 = vmatprep.subr.bf16.mxu0 0
          %1123 = vmatpush1.bf16.xpose.msra.mxu0 0
          %1124 = vmatprep.subr.bf16.mxu0 0
          %1125 = vmatpush1.bf16.xpose.msra.mxu0 0
          %1126 = vmatprep.subr.bf16.mxu0 0
          %1127 = vmatpush1.bf16.xpose.msra.mxu0 0
          %1128 = vmatprep.subr.bf16.mxu0 0
          %1129 = vmatpush1.bf16.xpose.msra.mxu0 0
          %1130 = vmatprep.subr.bf16.mxu0 0
          %1131 = vmatpush1.bf16.xpose.msra.mxu0 0
          %1132 = vmatprep.subr.bf16.mxu0 0
          %1133 = vmatpush1.bf16.xpose.msra.mxu0 0
          %1134 = vmatprep.subr.bf16.mxu0 0
          %1135 = vmatpush1.bf16.xpose.msra.mxu0 0
          %1136 = vmatprep.subr.bf16.mxu0 0
          %1137 = vmatpush1.bf16.xpose.msra.mxu0 0
          %1138 = vmatprep.subr.bf16.mxu0 0
          %1139 = vmatpush1.bf16.xpose.msra.mxu0 0
          %1140 = vmatprep.subr.bf16.mxu0 0
          %1141 = vmatpush1.bf16.xpose.msra.mxu0 0
          %1142 = vmatprep.subr.bf16.mxu0 0
          %1143 = vmatpush1.bf16.xpose.msra.mxu0 0
          %1144 = vmatprep.mubr.bf16.mxu0 0
          %1145 = vmatmul.mubr.bf16.gmra.mrb[0].mxu0 %v1089
          %v1146 = vpop.f32.mrb[0].mxu0
          %v1147 = vadd.f32 0.0, %v1146
          %v1148 = vpop.f32.mrb[0].mxu0
          %v1149 = vpop.f32.mrb[0].mxu0
          %v1150 = vadd.f32 0.0, %v1149
          %v1151 = vpop.f32.mrb[0].mxu0
          %1152 = vmatprep.mubr.bf16.mxu0 0
          %1153 = vmatmul.mubr.bf16.gmra.mrb[0].mxu0 %v1092
          %v1154 = vpop.f32.mrb[0].mxu0
          %v1155 = vadd.f32 0.0, %v1154
          %v1156 = vpop.f32.mrb[0].mxu0
          %v1157 = vpop.f32.mrb[0].mxu0
          %v1158 = vadd.f32 0.0, %v1157
          %v1159 = vpop.f32.mrb[0].mxu0
          %1160 = vmatprep.mubr.bf16.mxu0 0
          %1161 = vmatmul.mubr.bf16.gmra.mrb[0].mxu0 %v1095
          %v1162 = vpop.f32.mrb[0].mxu0
          %v1163 = vadd.f32 0.0, %v1162
          %v1164 = vpop.f32.mrb[0].mxu0
          %v1165 = vpop.f32.mrb[0].mxu0
          %v1166 = vadd.f32 0.0, %v1165
          %v1167 = vpop.f32.mrb[0].mxu0
          %1168 = vmatprep.mubr.bf16.mxu0 0
          %1169 = vmatmul.mubr.bf16.gmra.mrb[0].mxu0 %v1098
          %v1170 = vpop.f32.mrb[0].mxu0
          %v1171 = vadd.f32 0.0, %v1170
          %v1172 = vpop.f32.mrb[0].mxu0
          %v1173 = vpop.f32.mrb[0].mxu0
          %v1174 = vadd.f32 0.0, %v1173
          %v1175 = vpop.f32.mrb[0].mxu0
          %1176 = vdwg.mxu0
          %v1178 = vsel %vm1087, %v1075, 0
          %v1181 = vsel %vm1087, %v1076, 0
          %v1184 = vsel %vm1087, %v1077, 0
          %v1187 = vsel %vm1087, %v1078, 0
          %v1190 = vsel %vm1087, %v1008, 0
          %v1193 = vsel %vm1087, %v1010, 0
          %v1196 = vsel %vm1087, %v1012, 0
          %v1199 = vsel %vm1087, %v1014, 0
          %1201 = vmatprep.subr.bf16.mxu0 0
          %1202 = vmatpush1.bf16.xpose.msra.mxu0 %v1190
          %1203 = vmatprep.subr.bf16.mxu0 0
          %1204 = vmatpush1.bf16.xpose.msra.mxu0 %v1193
          %1205 = vmatprep.subr.bf16.mxu0 0
          %1206 = vmatpush1.bf16.xpose.msra.mxu0 %v1196
          %1207 = vmatprep.subr.bf16.mxu0 0
          %1208 = vmatpush1.bf16.xpose.msra.mxu0 %v1199
          %1209 = vmatprep.subr.bf16.mxu0 0
          %1210 = vmatpush1.bf16.xpose.msra.mxu0 0
          %1211 = vmatprep.subr.bf16.mxu0 0
          %1212 = vmatpush1.bf16.xpose.msra.mxu0 0
          %1213 = vmatprep.subr.bf16.mxu0 0
          %1214 = vmatpush1.bf16.xpose.msra.mxu0 0
          %1215 = vmatprep.subr.bf16.mxu0 0
          %1216 = vmatpush1.bf16.xpose.msra.mxu0 0
          %1217 = vmatprep.subr.bf16.mxu0 0
          %1218 = vmatpush1.bf16.xpose.msra.mxu0 0
          %1219 = vmatprep.subr.bf16.mxu0 0
          %1220 = vmatpush1.bf16.xpose.msra.mxu0 0
          %1221 = vmatprep.subr.bf16.mxu0 0
          %1222 = vmatpush1.bf16.xpose.msra.mxu0 0
          %1223 = vmatprep.subr.bf16.mxu0 0
          %1224 = vmatpush1.bf16.xpose.msra.mxu0 0
          %1225 = vmatprep.subr.bf16.mxu0 0
          %1226 = vmatpush1.bf16.xpose.msra.mxu0 0
          %1227 = vmatprep.subr.bf16.mxu0 0
          %1228 = vmatpush1.bf16.xpose.msra.mxu0 0
          %1229 = vmatprep.subr.bf16.mxu0 0
          %1230 = vmatpush1.bf16.xpose.msra.mxu0 0
          %1231 = vmatprep.subr.bf16.mxu0 0
          %1232 = vmatpush1.bf16.xpose.msra.mxu0 0
          %1233 = vmatprep.mubr.bf16.mxu0 0
          %1234 = vmatmul.mubr.bf16.gmra.mrb[0].mxu0 %v1178
          %v1235 = vpop.f32.mrb[0].mxu0
          %v1236 = vadd.f32 0.0, %v1235
          %v1237 = vpop.f32.mrb[0].mxu0
          %v1238 = vpop.f32.mrb[0].mxu0
          %v1239 = vadd.f32 0.0, %v1238
          %v1240 = vpop.f32.mrb[0].mxu0
          %1241 = vmatprep.mubr.bf16.mxu0 0
          %1242 = vmatmul.mubr.bf16.gmra.mrb[0].mxu0 %v1181
          %v1243 = vpop.f32.mrb[0].mxu0
          %v1244 = vadd.f32 0.0, %v1243
          %v1245 = vpop.f32.mrb[0].mxu0
          %v1246 = vpop.f32.mrb[0].mxu0
          %v1247 = vadd.f32 0.0, %v1246
          %v1248 = vpop.f32.mrb[0].mxu0
          %1249 = vmatprep.mubr.bf16.mxu0 0
          %1250 = vmatmul.mubr.bf16.gmra.mrb[0].mxu0 %v1184
          %v1251 = vpop.f32.mrb[0].mxu0
          %v1252 = vadd.f32 0.0, %v1251
          %v1253 = vpop.f32.mrb[0].mxu0
          %v1254 = vpop.f32.mrb[0].mxu0
          %v1255 = vadd.f32 0.0, %v1254
          %v1256 = vpop.f32.mrb[0].mxu0
          %1257 = vmatprep.mubr.bf16.mxu0 0
          %1258 = vmatmul.mubr.bf16.gmra.mrb[0].mxu0 %v1187
          %v1259 = vpop.f32.mrb[0].mxu0
          %v1260 = vadd.f32 0.0, %v1259
          %v1261 = vpop.f32.mrb[0].mxu0
          %v1262 = vpop.f32.mrb[0].mxu0
          %v1263 = vadd.f32 0.0, %v1262
          %v1264 = vpop.f32.mrb[0].mxu0
          %1265 = vdwg.mxu0
          %v1267 = vsel %vm1087, %v1079, 0
          %v1270 = vsel %vm1087, %v1080, 0
          %v1273 = vsel %vm1087, %v1081, 0
          %v1276 = vsel %vm1087, %v1082, 0
          %v1279 = vsel %vm1087, %v1016, 0
          %v1282 = vsel %vm1087, %v1018, 0
          %v1285 = vsel %vm1087, %v1020, 0
          %v1288 = vsel %vm1087, %v1022, 0
          %1290 = vmatprep.subr.bf16.mxu0 0
          %1291 = vmatpush1.bf16.xpose.msra.mxu0 %v1279
          %1292 = vmatprep.subr.bf16.mxu0 0
          %1293 = vmatpush1.bf16.xpose.msra.mxu0 %v1282
          %1294 = vmatprep.subr.bf16.mxu0 0
          %1295 = vmatpush1.bf16.xpose.msra.mxu0 %v1285
          %1296 = vmatprep.subr.bf16.mxu0 0
          %1297 = vmatpush1.bf16.xpose.msra.mxu0 %v1288
          %1298 = vmatprep.subr.bf16.mxu0 0
          %1299 = vmatpush1.bf16.xpose.msra.mxu0 0
          %1300 = vmatprep.subr.bf16.mxu0 0
          %1301 = vmatpush1.bf16.xpose.msra.mxu0 0
          %1302 = vmatprep.subr.bf16.mxu0 0
          %1303 = vmatpush1.bf16.xpose.msra.mxu0 0
          %1304 = vmatprep.subr.bf16.mxu0 0
          %1305 = vmatpush1.bf16.xpose.msra.mxu0 0
          %1306 = vmatprep.subr.bf16.mxu0 0
          %1307 = vmatpush1.bf16.xpose.msra.mxu0 0
          %1308 = vmatprep.subr.bf16.mxu0 0
          %1309 = vmatpush1.bf16.xpose.msra.mxu0 0
          %1310 = vmatprep.subr.bf16.mxu0 0
          %1311 = vmatpush1.bf16.xpose.msra.mxu0 0
          %1312 = vmatprep.subr.bf16.mxu0 0
          %1313 = vmatpush1.bf16.xpose.msra.mxu0 0
          %1314 = vmatprep.subr.bf16.mxu0 0
          %1315 = vmatpush1.bf16.xpose.msra.mxu0 0
          %1316 = vmatprep.subr.bf16.mxu0 0
          %1317 = vmatpush1.bf16.xpose.msra.mxu0 0
          %1318 = vmatprep.subr.bf16.mxu0 0
          %1319 = vmatpush1.bf16.xpose.msra.mxu0 0
          %1320 = vmatprep.subr.bf16.mxu0 0
          %1321 = vmatpush1.bf16.xpose.msra.mxu0 0
          %1322 = vmatprep.mubr.bf16.mxu0 0
          %1323 = vmatmul.mubr.bf16.gmra.mrb[0].mxu0 %v1267
          %v1324 = vpop.f32.mrb[0].mxu0
          %v1325 = vadd.f32 0.0, %v1324
          %v1326 = vpop.f32.mrb[0].mxu0
          %v1327 = vpop.f32.mrb[0].mxu0
          %v1328 = vadd.f32 0.0, %v1327
          %v1329 = vpop.f32.mrb[0].mxu0
          %1330 = vmatprep.mubr.bf16.mxu0 0
          %1331 = vmatmul.mubr.bf16.gmra.mrb[0].mxu0 %v1270
          %v1332 = vpop.f32.mrb[0].mxu0
          %v1333 = vadd.f32 0.0, %v1332
          %v1334 = vpop.f32.mrb[0].mxu0
          %v1335 = vpop.f32.mrb[0].mxu0
          %v1336 = vadd.f32 0.0, %v1335
          %v1337 = vpop.f32.mrb[0].mxu0
          %1338 = vmatprep.mubr.bf16.mxu0 0
          %1339 = vmatmul.mubr.bf16.gmra.mrb[0].mxu0 %v1273
          %v1340 = vpop.f32.mrb[0].mxu0
          %v1341 = vadd.f32 0.0, %v1340
          %v1342 = vpop.f32.mrb[0].mxu0
          %v1343 = vpop.f32.mrb[0].mxu0
          %v1344 = vadd.f32 0.0, %v1343
          %v1345 = vpop.f32.mrb[0].mxu0
          %1346 = vmatprep.mubr.bf16.mxu0 0
          %1347 = vmatmul.mubr.bf16.gmra.mrb[0].mxu0 %v1276
          %v1348 = vpop.f32.mrb[0].mxu0
          %v1349 = vadd.f32 0.0, %v1348
          %v1350 = vpop.f32.mrb[0].mxu0
          %v1351 = vpop.f32.mrb[0].mxu0
          %v1352 = vadd.f32 0.0, %v1351
          %v1353 = vpop.f32.mrb[0].mxu0
          %1354 = vdwg.mxu0
          %v1356 = vsel %vm1087, %v1083, 0
          %v1359 = vsel %vm1087, %v1084, 0
          %v1362 = vsel %vm1087, %v1085, 0
          %v1365 = vsel %vm1087, %v1086, 0
          %v1368 = vsel %vm1087, %v1024, 0
          %v1371 = vsel %vm1087, %v1026, 0
          %v1374 = vsel %vm1087, %v1028, 0
          %v1377 = vsel %vm1087, %v1030, 0
          %1379 = vmatprep.subr.bf16.mxu0 0
          %1380 = vmatpush1.bf16.xpose.msra.mxu0 %v1368
          %1381 = vmatprep.subr.bf16.mxu0 0
          %1382 = vmatpush1.bf16.xpose.msra.mxu0 %v1371
          %1383 = vmatprep.subr.bf16.mxu0 0
          %1384 = vmatpush1.bf16.xpose.msra.mxu0 %v1374
          %1385 = vmatprep.subr.bf16.mxu0 0
          %1386 = vmatpush1.bf16.xpose.msra.mxu0 %v1377
          %1387 = vmatprep.subr.bf16.mxu0 0
          %1388 = vmatpush1.bf16.xpose.msra.mxu0 0
          %1389 = vmatprep.subr.bf16.mxu0 0
          %1390 = vmatpush1.bf16.xpose.msra.mxu0 0
          %1391 = vmatprep.subr.bf16.mxu0 0
          %1392 = vmatpush1.bf16.xpose.msra.mxu0 0
          %1393 = vmatprep.subr.bf16.mxu0 0
          %1394 = vmatpush1.bf16.xpose.msra.mxu0 0
          %1395 = vmatprep.subr.bf16.mxu0 0
          %1396 = vmatpush1.bf16.xpose.msra.mxu0 0
          %1397 = vmatprep.subr.bf16.mxu0 0
          %1398 = vmatpush1.bf16.xpose.msra.mxu0 0
          %1399 = vmatprep.subr.bf16.mxu0 0
          %1400 = vmatpush1.bf16.xpose.msra.mxu0 0
          %1401 = vmatprep.subr.bf16.mxu0 0
          %1402 = vmatpush1.bf16.xpose.msra.mxu0 0
          %1403 = vmatprep.subr.bf16.mxu0 0
          %1404 = vmatpush1.bf16.xpose.msra.mxu0 0
          %1405 = vmatprep.subr.bf16.mxu0 0
          %1406 = vmatpush1.bf16.xpose.msra.mxu0 0
          %1407 = vmatprep.subr.bf16.mxu0 0
          %1408 = vmatpush1.bf16.xpose.msra.mxu0 0
          %1409 = vmatprep.subr.bf16.mxu0 0
          %1410 = vmatpush1.bf16.xpose.msra.mxu0 0
          %1411 = vmatprep.mubr.bf16.mxu0 0
          %1412 = vmatmul.mubr.bf16.gmra.mrb[0].mxu0 %v1356
          %v1413 = vpop.f32.mrb[0].mxu0
          %v1414 = vadd.f32 0.0, %v1413
          %v1415 = vpop.f32.mrb[0].mxu0
          %v1416 = vpop.f32.mrb[0].mxu0
          %v1417 = vadd.f32 0.0, %v1416
          %v1418 = vpop.f32.mrb[0].mxu0
          %1419 = vmatprep.mubr.bf16.mxu0 0
          %1420 = vmatmul.mubr.bf16.gmra.mrb[0].mxu0 %v1359
          %v1421 = vpop.f32.mrb[0].mxu0
          %v1422 = vadd.f32 0.0, %v1421
          %v1423 = vpop.f32.mrb[0].mxu0
          %v1424 = vpop.f32.mrb[0].mxu0
          %v1425 = vadd.f32 0.0, %v1424
          %v1426 = vpop.f32.mrb[0].mxu0
          %1427 = vmatprep.mubr.bf16.mxu0 0
          %1428 = vmatmul.mubr.bf16.gmra.mrb[0].mxu0 %v1362
          %v1429 = vpop.f32.mrb[0].mxu0
          %v1430 = vadd.f32 0.0, %v1429
          %v1431 = vpop.f32.mrb[0].mxu0
          %v1432 = vpop.f32.mrb[0].mxu0
          %v1433 = vadd.f32 0.0, %v1432
          %v1434 = vpop.f32.mrb[0].mxu0
          %1435 = vmatprep.mubr.bf16.mxu0 0
          %1436 = vmatmul.mubr.bf16.gmra.mrb[0].mxu0 %v1365
          %v1437 = vpop.f32.mrb[0].mxu0
          %v1438 = vadd.f32 0.0, %v1437
          %v1439 = vpop.f32.mrb[0].mxu0
          %v1440 = vpop.f32.mrb[0].mxu0
          %v1441 = vadd.f32 0.0, %v1440
          %v1442 = vpop.f32.mrb[0].mxu0
          %1443 = vdwg.mxu0
          %s1444 = smul.u32 %s35, 64
          %v1445 = vlaneseq
          %v1446 = vshrl.u32 %v1445, 7
          %v1447 = vadd.s32 %v1446, 8
          %v1448 = vadd.s32 %v1446, 16
          %v1449 = vadd.s32 %v1446, 24
          %v1450 = vadd.s32 %v1446, 32
          %v1451 = vadd.s32 %v1446, 40
          %v1452 = vadd.s32 %v1446, 48
          %v1453 = vadd.s32 %v1446, 56
          %v1454 = vstv %s1444
          %v1455 = vadd.s32 %v1454, %v1446
          %v1456 = vadd.s32 %v1454, %v1447
          %v1457 = vadd.s32 %v1454, %v1448
          %v1458 = vadd.s32 %v1454, %v1449
          %v1459 = vadd.s32 %v1454, %v1450
          %v1460 = vadd.s32 %v1454, %v1451
          %v1461 = vadd.s32 %v1454, %v1452
          %v1462 = vadd.s32 %v1454, %v1453
          %v1463 = vlaneseq
          %v1464 = vand.u32 %v1463, 127
          %v1465 = vstv %s442
          %v1466 = vadd.s32 %v1465, %v1464
          %vm1467 = vcmp.le.s32.totalorder %v1466, %v1455
          %vm1468 = vcmp.le.s32.totalorder %v1466, %v1456
          %vm1469 = vcmp.le.s32.totalorder %v1466, %v1457
          %vm1470 = vcmp.le.s32.totalorder %v1466, %v1458
          %vm1471 = vcmp.le.s32.totalorder %v1466, %v1459
          %vm1472 = vcmp.le.s32.totalorder %v1466, %v1460
          %vm1473 = vcmp.le.s32.totalorder %v1466, %v1461
          %vm1474 = vcmp.le.s32.totalorder %v1466, %v1462
          %v1475 = vsel %vm1467, 1, 0
          %v1476 = vsel %vm1468, 1, 0
          %v1477 = vsel %vm1469, 1, 0
          %v1478 = vsel %vm1470, 1, 0
          %v1479 = vsel %vm1471, 1, 0
          %v1480 = vsel %vm1472, 1, 0
          %v1481 = vsel %vm1473, 1, 0
          %v1482 = vsel %vm1474, 1, 0
          %vm1483 = vcmp.eq.s32.totalorder %v1475, 1
          %vm1484 = vcmp.eq.s32.totalorder %v1476, 1
          %vm1485 = vcmp.eq.s32.totalorder %v1477, 1
          %vm1486 = vcmp.eq.s32.totalorder %v1478, 1
          %vm1487 = vcmp.eq.s32.totalorder %v1479, 1
          %vm1488 = vcmp.eq.s32.totalorder %v1480, 1
          %vm1489 = vcmp.eq.s32.totalorder %v1481, 1
          %vm1490 = vcmp.eq.s32.totalorder %v1482, 1
          %v1491 = vsel %vm1483, %v1147, -1e+30
          %v1492 = vsel %vm1484, %v1150, -1e+30
          %v1493 = vsel %vm1485, %v1155, -1e+30
          %v1494 = vsel %vm1486, %v1158, -1e+30
          %v1495 = vsel %vm1487, %v1163, -1e+30
          %v1496 = vsel %vm1488, %v1166, -1e+30
          %v1497 = vsel %vm1489, %v1171, -1e+30
          %v1498 = vsel %vm1490, %v1174, -1e+30
          %v1499 = vsel %vm1483, %v1236, -1e+30
          %v1500 = vsel %vm1484, %v1239, -1e+30
          %v1501 = vsel %vm1485, %v1244, -1e+30
          %v1502 = vsel %vm1486, %v1247, -1e+30
          %v1503 = vsel %vm1487, %v1252, -1e+30
          %v1504 = vsel %vm1488, %v1255, -1e+30
          %v1505 = vsel %vm1489, %v1260, -1e+30
          %v1506 = vsel %vm1490, %v1263, -1e+30
          %v1507 = vsel %vm1483, %v1325, -1e+30
          %v1508 = vsel %vm1484, %v1328, -1e+30
          %v1509 = vsel %vm1485, %v1333, -1e+30
          %v1510 = vsel %vm1486, %v1336, -1e+30
          %v1511 = vsel %vm1487, %v1341, -1e+30
          %v1512 = vsel %vm1488, %v1344, -1e+30
          %v1513 = vsel %vm1489, %v1349, -1e+30
          %v1514 = vsel %vm1490, %v1352, -1e+30
          %v1515 = vsel %vm1483, %v1414, -1e+30
          %v1516 = vsel %vm1484, %v1417, -1e+30
          %v1517 = vsel %vm1485, %v1422, -1e+30
          %v1518 = vsel %vm1486, %v1425, -1e+30
          %v1519 = vsel %vm1487, %v1430, -1e+30
          %v1520 = vsel %vm1488, %v1433, -1e+30
          %v1521 = vsel %vm1489, %v1438, -1e+30
          %v1522 = vsel %vm1490, %v1441, -1e+30
          %v1523 = vld [vmem:[#allocation3] sm:$0xff]
          %v1524 = vld [vmem:[#allocation3 + $0x8] sm:$0xff]
          %v1525 = vld [vmem:[#allocation3 + $0x10] sm:$0xff]
          %v1526 = vld [vmem:[#allocation3 + $0x18] sm:$0xff]
          %v1527 = vld [vmem:[#allocation3 + $0x20] sm:$0xff]
          %v1528 = vld [vmem:[#allocation3 + $0x28] sm:$0xff]
          %v1529 = vld [vmem:[#allocation3 + $0x30] sm:$0xff]
          %v1530 = vld [vmem:[#allocation3 + $0x38] sm:$0xff]
          %v1531 = vld [vmem:[#allocation3 + $0x40] sm:$0xff]
          %v1532 = vld [vmem:[#allocation3 + $0x48] sm:$0xff]
          %v1533 = vld [vmem:[#allocation3 + $0x50] sm:$0xff]
          %v1534 = vld [vmem:[#allocation3 + $0x58] sm:$0xff]
          %v1535 = vld [vmem:[#allocation3 + $0x60] sm:$0xff]
          %v1536 = vld [vmem:[#allocation3 + $0x68] sm:$0xff]
          %v1537 = vld [vmem:[#allocation3 + $0x70] sm:$0xff]
          %v1538 = vld [vmem:[#allocation3 + $0x78] sm:$0xff]
          %v1539 = vld [vmem:[#allocation3 + $0x80] sm:$0xff]
          %v1540 = vld [vmem:[#allocation3 + $0x88] sm:$0xff]
          %v1541 = vld [vmem:[#allocation3 + $0x90] sm:$0xff]
          %v1542 = vld [vmem:[#allocation3 + $0x98] sm:$0xff]
          %v1543 = vld [vmem:[#allocation3 + $0xa0] sm:$0xff]
          %v1544 = vld [vmem:[#allocation3 + $0xa8] sm:$0xff]
          %v1545 = vld [vmem:[#allocation3 + $0xb0] sm:$0xff]
          %v1546 = vld [vmem:[#allocation3 + $0xb8] sm:$0xff]
          %v1547 = vld [vmem:[#allocation3 + $0xc0] sm:$0xff]
          %v1548 = vld [vmem:[#allocation3 + $0xc8] sm:$0xff]
          %v1549 = vld [vmem:[#allocation3 + $0xd0] sm:$0xff]
          %v1550 = vld [vmem:[#allocation3 + $0xd8] sm:$0xff]
          %v1551 = vld [vmem:[#allocation3 + $0xe0] sm:$0xff]
          %v1552 = vld [vmem:[#allocation3 + $0xe8] sm:$0xff]
          %v1553 = vld [vmem:[#allocation3 + $0xf0] sm:$0xff]
          %v1554 = vld [vmem:[#allocation3 + $0xf8] sm:$0xff]
          %vm1555 = vcmask 523264
          %v1556 = vsel %vm1555, %v1491, -inf
          %1557 = vmax.xlane.f32.xlu0 %v1556
          %v1558 = vpop.xlane.xlu0 %1557
          %v1559 = vsel %vm1555, %v1492, -inf
          %1560 = vmax.xlane.f32.xlu0 %v1559
          %v1561 = vpop.xlane.xlu0 %1560
          %v1562 = vsel %vm1555, %v1493, -inf
          %1563 = vmax.xlane.f32.xlu0 %v1562
          %v1564 = vpop.xlane.xlu0 %1563
          %v1565 = vsel %vm1555, %v1494, -inf
          %1566 = vmax.xlane.f32.xlu0 %v1565
          %v1567 = vpop.xlane.xlu0 %1566
          %v1568 = vsel %vm1555, %v1495, -inf
          %1569 = vmax.xlane.f32.xlu0 %v1568
          %v1570 = vpop.xlane.xlu0 %1569
          %v1571 = vsel %vm1555, %v1496, -inf
          %1572 = vmax.xlane.f32.xlu0 %v1571
          %v1573 = vpop.xlane.xlu0 %1572
          %v1574 = vsel %vm1555, %v1497, -inf
          %1575 = vmax.xlane.f32.xlu0 %v1574
          %v1576 = vpop.xlane.xlu0 %1575
          %v1577 = vsel %vm1555, %v1498, -inf
          %1578 = vmax.xlane.f32.xlu0 %v1577
          %v1579 = vpop.xlane.xlu0 %1578
          %v1580 = vsel %vm1555, %v1499, -inf
          %1581 = vmax.xlane.f32.xlu0 %v1580
          %v1582 = vpop.xlane.xlu0 %1581
          %v1583 = vsel %vm1555, %v1500, -inf
          %1584 = vmax.xlane.f32.xlu0 %v1583
          %v1585 = vpop.xlane.xlu0 %1584
          %v1586 = vsel %vm1555, %v1501, -inf
          %1587 = vmax.xlane.f32.xlu0 %v1586
          %v1588 = vpop.xlane.xlu0 %1587
          %v1589 = vsel %vm1555, %v1502, -inf
          %1590 = vmax.xlane.f32.xlu0 %v1589
          %v1591 = vpop.xlane.xlu0 %1590
          %v1592 = vsel %vm1555, %v1503, -inf
          %1593 = vmax.xlane.f32.xlu0 %v1592
          %v1594 = vpop.xlane.xlu0 %1593
          %v1595 = vsel %vm1555, %v1504, -inf
          %1596 = vmax.xlane.f32.xlu0 %v1595
          %v1597 = vpop.xlane.xlu0 %1596
          %v1598 = vsel %vm1555, %v1505, -inf
          %1599 = vmax.xlane.f32.xlu0 %v1598
          %v1600 = vpop.xlane.xlu0 %1599
          %v1601 = vsel %vm1555, %v1506, -inf
          %1602 = vmax.xlane.f32.xlu0 %v1601
          %v1603 = vpop.xlane.xlu0 %1602
          %v1604 = vsel %vm1555, %v1507, -inf
          %1605 = vmax.xlane.f32.xlu0 %v1604
          %v1606 = vpop.xlane.xlu0 %1605
          %v1607 = vsel %vm1555, %v1508, -inf
          %1608 = vmax.xlane.f32.xlu0 %v1607
          %v1609 = vpop.xlane.xlu0 %1608
          %v1610 = vsel %vm1555, %v1509, -inf
          %1611 = vmax.xlane.f32.xlu0 %v1610
          %v1612 = vpop.xlane.xlu0 %1611
          %v1613 = vsel %vm1555, %v1510, -inf
          %1614 = vmax.xlane.f32.xlu0 %v1613
          %v1615 = vpop.xlane.xlu0 %1614
          %v1616 = vsel %vm1555, %v1511, -inf
          %1617 = vmax.xlane.f32.xlu0 %v1616
          %v1618 = vpop.xlane.xlu0 %1617
          %v1619 = vsel %vm1555, %v1512, -inf
          %1620 = vmax.xlane.f32.xlu0 %v1619
          %v1621 = vpop.xlane.xlu0 %1620
          %v1622 = vsel %vm1555, %v1513, -inf
          %1623 = vmax.xlane.f32.xlu0 %v1622
          %v1624 = vpop.xlane.xlu0 %1623
          %v1625 = vsel %vm1555, %v1514, -inf
          %1626 = vmax.xlane.f32.xlu0 %v1625
          %v1627 = vpop.xlane.xlu0 %1626
          %v1628 = vsel %vm1555, %v1515, -inf
          %1629 = vmax.xlane.f32.xlu0 %v1628
          %v1630 = vpop.xlane.xlu0 %1629
          %v1631 = vsel %vm1555, %v1516, -inf
          %1632 = vmax.xlane.f32.xlu0 %v1631
          %v1633 = vpop.xlane.xlu0 %1632
          %v1634 = vsel %vm1555, %v1517, -inf
          %1635 = vmax.xlane.f32.xlu0 %v1634
          %v1636 = vpop.xlane.xlu0 %1635
          %v1637 = vsel %vm1555, %v1518, -inf
          %1638 = vmax.xlane.f32.xlu0 %v1637
          %v1639 = vpop.xlane.xlu0 %1638
          %v1640 = vsel %vm1555, %v1519, -inf
          %1641 = vmax.xlane.f32.xlu0 %v1640
          %v1642 = vpop.xlane.xlu0 %1641
          %v1643 = vsel %vm1555, %v1520, -inf
          %1644 = vmax.xlane.f32.xlu0 %v1643
          %v1645 = vpop.xlane.xlu0 %1644
          %v1646 = vsel %vm1555, %v1521, -inf
          %1647 = vmax.xlane.f32.xlu0 %v1646
          %v1648 = vpop.xlane.xlu0 %1647
          %v1649 = vsel %vm1555, %v1522, -inf
          %1650 = vmax.xlane.f32.xlu0 %v1649
          %v1651 = vpop.xlane.xlu0 %1650
          %v1652 = vmax.f32 %v1523, %v1558
          %v1653 = vmax.f32 %v1524, %v1561
          %v1654 = vmax.f32 %v1525, %v1564
          %v1655 = vmax.f32 %v1526, %v1567
          %v1656 = vmax.f32 %v1527, %v1570
          %v1657 = vmax.f32 %v1528, %v1573
          %v1658 = vmax.f32 %v1529, %v1576
          %v1659 = vmax.f32 %v1530, %v1579
          %v1660 = vmax.f32 %v1531, %v1582
          %v1661 = vmax.f32 %v1532, %v1585
          %v1662 = vmax.f32 %v1533, %v1588
          %v1663 = vmax.f32 %v1534, %v1591
          %v1664 = vmax.f32 %v1535, %v1594
          %v1665 = vmax.f32 %v1536, %v1597
          %v1666 = vmax.f32 %v1537, %v1600
          %v1667 = vmax.f32 %v1538, %v1603
          %v1668 = vmax.f32 %v1539, %v1606
          %v1669 = vmax.f32 %v1540, %v1609
          %v1670 = vmax.f32 %v1541, %v1612
          %v1671 = vmax.f32 %v1542, %v1615
          %v1672 = vmax.f32 %v1543, %v1618
          %v1673 = vmax.f32 %v1544, %v1621
          %v1674 = vmax.f32 %v1545, %v1624
          %v1675 = vmax.f32 %v1546, %v1627
          %v1676 = vmax.f32 %v1547, %v1630
          %v1677 = vmax.f32 %v1548, %v1633
          %v1678 = vmax.f32 %v1549, %v1636
          %v1679 = vmax.f32 %v1550, %v1639
          %v1680 = vmax.f32 %v1551, %v1642
          %v1681 = vmax.f32 %v1552, %v1645
          %v1682 = vmax.f32 %v1553, %v1648
          %v1683 = vmax.f32 %v1554, %v1651
          %v1684 = vsub.f32 %v1523, %v1652
          %v1685 = vsub.f32 %v1524, %v1653
          %v1686 = vsub.f32 %v1525, %v1654
          %v1687 = vsub.f32 %v1526, %v1655
          %v1688 = vsub.f32 %v1527, %v1656
          %v1689 = vsub.f32 %v1528, %v1657
          %v1690 = vsub.f32 %v1529, %v1658
          %v1691 = vsub.f32 %v1530, %v1659
          %v1692 = vsub.f32 %v1531, %v1660
          %v1693 = vsub.f32 %v1532, %v1661
          %v1694 = vsub.f32 %v1533, %v1662
          %v1695 = vsub.f32 %v1534, %v1663
          %v1696 = vsub.f32 %v1535, %v1664
          %v1697 = vsub.f32 %v1536, %v1665
          %v1698 = vsub.f32 %v1537, %v1666
          %v1699 = vsub.f32 %v1538, %v1667
          %v1700 = vsub.f32 %v1539, %v1668
          %v1701 = vsub.f32 %v1540, %v1669
          %v1702 = vsub.f32 %v1541, %v1670
          %v1703 = vsub.f32 %v1542, %v1671
          %v1704 = vsub.f32 %v1543, %v1672
          %v1705 = vsub.f32 %v1544, %v1673
          %v1706 = vsub.f32 %v1545, %v1674
          %v1707 = vsub.f32 %v1546, %v1675
          %v1708 = vsub.f32 %v1547, %v1676
          %v1709 = vsub.f32 %v1548, %v1677
          %v1710 = vsub.f32 %v1549, %v1678
          %v1711 = vsub.f32 %v1550, %v1679
          %v1712 = vsub.f32 %v1551, %v1680
          %v1713 = vsub.f32 %v1552, %v1681
          %v1714 = vsub.f32 %v1553, %v1682
          %v1715 = vsub.f32 %v1554, %v1683
          %v1716 = vmul.f32 %v1684, 1.442695
          %v1717 = vpow.pop %v1716
          %v1718 = vmul.f32 %v1685, 1.442695
          %v1719 = vpow.pop %v1718
          %v1720 = vmul.f32 %v1686, 1.442695
          %v1721 = vpow.pop %v1720
          %v1722 = vmul.f32 %v1687, 1.442695
          %v1723 = vpow.pop %v1722
          %v1724 = vmul.f32 %v1688, 1.442695
          %v1725 = vpow.pop %v1724
          %v1726 = vmul.f32 %v1689, 1.442695
          %v1727 = vpow.pop %v1726
          %v1728 = vmul.f32 %v1690, 1.442695
          %v1729 = vpow.pop %v1728
          %v1730 = vmul.f32 %v1691, 1.442695
          %v1731 = vpow.pop %v1730
          %v1732 = vmul.f32 %v1692, 1.442695
          %v1733 = vpow.pop %v1732
          %v1734 = vmul.f32 %v1693, 1.442695
          %v1735 = vpow.pop %v1734
          %v1736 = vmul.f32 %v1694, 1.442695
          %v1737 = vpow.pop %v1736
          %v1738 = vmul.f32 %v1695, 1.442695
          %v1739 = vpow.pop %v1738
          %v1740 = vmul.f32 %v1696, 1.442695
          %v1741 = vpow.pop %v1740
          %v1742 = vmul.f32 %v1697, 1.442695
          %v1743 = vpow.pop %v1742
          %v1744 = vmul.f32 %v1698, 1.442695
          %v1745 = vpow.pop %v1744
          %v1746 = vmul.f32 %v1699, 1.442695
          %v1747 = vpow.pop %v1746
          %v1748 = vmul.f32 %v1700, 1.442695
          %v1749 = vpow.pop %v1748
          %v1750 = vmul.f32 %v1701, 1.442695
          %v1751 = vpow.pop %v1750
          %v1752 = vmul.f32 %v1702, 1.442695
          %v1753 = vpow.pop %v1752
          %v1754 = vmul.f32 %v1703, 1.442695
          %v1755 = vpow.pop %v1754
          %v1756 = vmul.f32 %v1704, 1.442695
          %v1757 = vpow.pop %v1756
          %v1758 = vmul.f32 %v1705, 1.442695
          %v1759 = vpow.pop %v1758
          %v1760 = vmul.f32 %v1706, 1.442695
          %v1761 = vpow.pop %v1760
          %v1762 = vmul.f32 %v1707, 1.442695
          %v1763 = vpow.pop %v1762
          %v1764 = vmul.f32 %v1708, 1.442695
          %v1765 = vpow.pop %v1764
          %v1766 = vmul.f32 %v1709, 1.442695
          %v1767 = vpow.pop %v1766
          %v1768 = vmul.f32 %v1710, 1.442695
          %v1769 = vpow.pop %v1768
          %v1770 = vmul.f32 %v1711, 1.442695
          %v1771 = vpow.pop %v1770
          %v1772 = vmul.f32 %v1712, 1.442695
          %v1773 = vpow.pop %v1772
          %v1774 = vmul.f32 %v1713, 1.442695
          %v1775 = vpow.pop %v1774
          %v1776 = vmul.f32 %v1714, 1.442695
          %v1777 = vpow.pop %v1776
          %v1778 = vmul.f32 %v1715, 1.442695
          %v1779 = vpow.pop %v1778
          %1781 = vset.pattern.permute.xlu0 0
          %1782 = vperm.xlu0 %1781, %v1652
          %v1783 = vpop.permute.xlu0 %1782
          %1786 = vset.pattern.permute.xlu0 0
          %1787 = vperm.xlu0 %1786, %v1653
          %v1788 = vpop.permute.xlu0 %1787
          %1791 = vset.pattern.permute.xlu0 0
          %1792 = vperm.xlu0 %1791, %v1654
          %v1793 = vpop.permute.xlu0 %1792
          %1796 = vset.pattern.permute.xlu0 0
          %1797 = vperm.xlu0 %1796, %v1655
          %v1798 = vpop.permute.xlu0 %1797
          %1801 = vset.pattern.permute.xlu0 0
          %1802 = vperm.xlu0 %1801, %v1656
          %v1803 = vpop.permute.xlu0 %1802
          %1806 = vset.pattern.permute.xlu0 0
          %1807 = vperm.xlu0 %1806, %v1657
          %v1808 = vpop.permute.xlu0 %1807
          %1811 = vset.pattern.permute.xlu0 0
          %1812 = vperm.xlu0 %1811, %v1658
          %v1813 = vpop.permute.xlu0 %1812
          %1816 = vset.pattern.permute.xlu0 0
          %1817 = vperm.xlu0 %1816, %v1659
          %v1818 = vpop.permute.xlu0 %1817
          %1821 = vset.pattern.permute.xlu0 0
          %1822 = vperm.xlu0 %1821, %v1660
          %v1823 = vpop.permute.xlu0 %1822
          %1826 = vset.pattern.permute.xlu0 0
          %1827 = vperm.xlu0 %1826, %v1661
          %v1828 = vpop.permute.xlu0 %1827
          %1831 = vset.pattern.permute.xlu0 0
          %1832 = vperm.xlu0 %1831, %v1662
          %v1833 = vpop.permute.xlu0 %1832
          %1836 = vset.pattern.permute.xlu0 0
          %1837 = vperm.xlu0 %1836, %v1663
          %v1838 = vpop.permute.xlu0 %1837
          %1841 = vset.pattern.permute.xlu0 0
          %1842 = vperm.xlu0 %1841, %v1664
          %v1843 = vpop.permute.xlu0 %1842
          %1846 = vset.pattern.permute.xlu0 0
          %1847 = vperm.xlu0 %1846, %v1665
          %v1848 = vpop.permute.xlu0 %1847
          %1851 = vset.pattern.permute.xlu0 0
          %1852 = vperm.xlu0 %1851, %v1666
          %v1853 = vpop.permute.xlu0 %1852
          %1856 = vset.pattern.permute.xlu0 0
          %1857 = vperm.xlu0 %1856, %v1667
          %v1858 = vpop.permute.xlu0 %1857
          %1861 = vset.pattern.permute.xlu0 0
          %1862 = vperm.xlu0 %1861, %v1668
          %v1863 = vpop.permute.xlu0 %1862
          %1866 = vset.pattern.permute.xlu0 0
          %1867 = vperm.xlu0 %1866, %v1669
          %v1868 = vpop.permute.xlu0 %1867
          %1871 = vset.pattern.permute.xlu0 0
          %1872 = vperm.xlu0 %1871, %v1670
          %v1873 = vpop.permute.xlu0 %1872
          %1876 = vset.pattern.permute.xlu0 0
          %1877 = vperm.xlu0 %1876, %v1671
          %v1878 = vpop.permute.xlu0 %1877
          %1881 = vset.pattern.permute.xlu0 0
          %1882 = vperm.xlu0 %1881, %v1672
          %v1883 = vpop.permute.xlu0 %1882
          %1886 = vset.pattern.permute.xlu0 0
          %1887 = vperm.xlu0 %1886, %v1673
          %v1888 = vpop.permute.xlu0 %1887
          %1891 = vset.pattern.permute.xlu0 0
          %1892 = vperm.xlu0 %1891, %v1674
          %v1893 = vpop.permute.xlu0 %1892
          %1896 = vset.pattern.permute.xlu0 0
          %1897 = vperm.xlu0 %1896, %v1675
          %v1898 = vpop.permute.xlu0 %1897
          %1901 = vset.pattern.permute.xlu0 0
          %1902 = vperm.xlu0 %1901, %v1676
          %v1903 = vpop.permute.xlu0 %1902
          %1906 = vset.pattern.permute.xlu0 0
          %1907 = vperm.xlu0 %1906, %v1677
          %v1908 = vpop.permute.xlu0 %1907
          %1911 = vset.pattern.permute.xlu0 0
          %1912 = vperm.xlu0 %1911, %v1678
          %v1913 = vpop.permute.xlu0 %1912
          %1916 = vset.pattern.permute.xlu0 0
          %1917 = vperm.xlu0 %1916, %v1679
          %v1918 = vpop.permute.xlu0 %1917
          %1921 = vset.pattern.permute.xlu0 0
          %1922 = vperm.xlu0 %1921, %v1680
          %v1923 = vpop.permute.xlu0 %1922
          %1926 = vset.pattern.permute.xlu0 0
          %1927 = vperm.xlu0 %1926, %v1681
          %v1928 = vpop.permute.xlu0 %1927
          %1931 = vset.pattern.permute.xlu0 0
          %1932 = vperm.xlu0 %1931, %v1682
          %v1933 = vpop.permute.xlu0 %1932
          %1936 = vset.pattern.permute.xlu0 0
          %1937 = vperm.xlu0 %1936, %v1683
          %v1938 = vpop.permute.xlu0 %1937
          %v1940 = vsub.f32 %v1491, %v1783
          %v1941 = vsub.f32 %v1492, %v1788
          %v1942 = vsub.f32 %v1493, %v1793
          %v1943 = vsub.f32 %v1494, %v1798
          %v1944 = vsub.f32 %v1495, %v1803
          %v1945 = vsub.f32 %v1496, %v1808
          %v1946 = vsub.f32 %v1497, %v1813
          %v1947 = vsub.f32 %v1498, %v1818
          %v1948 = vsub.f32 %v1499, %v1823
          %v1949 = vsub.f32 %v1500, %v1828
          %v1950 = vsub.f32 %v1501, %v1833
          %v1951 = vsub.f32 %v1502, %v1838
          %v1952 = vsub.f32 %v1503, %v1843
          %v1953 = vsub.f32 %v1504, %v1848
          %v1954 = vsub.f32 %v1505, %v1853
          %v1955 = vsub.f32 %v1506, %v1858
          %v1956 = vsub.f32 %v1507, %v1863
          %v1957 = vsub.f32 %v1508, %v1868
          %v1958 = vsub.f32 %v1509, %v1873
          %v1959 = vsub.f32 %v1510, %v1878
          %v1960 = vsub.f32 %v1511, %v1883
          %v1961 = vsub.f32 %v1512, %v1888
          %v1962 = vsub.f32 %v1513, %v1893
          %v1963 = vsub.f32 %v1514, %v1898
          %v1964 = vsub.f32 %v1515, %v1903
          %v1965 = vsub.f32 %v1516, %v1908
          %v1966 = vsub.f32 %v1517, %v1913
          %v1967 = vsub.f32 %v1518, %v1918
          %v1968 = vsub.f32 %v1519, %v1923
          %v1969 = vsub.f32 %v1520, %v1928
          %v1970 = vsub.f32 %v1521, %v1933
          %v1971 = vsub.f32 %v1522, %v1938
          %v1972 = vmul.f32 %v1940, 1.442695
          %v1973 = vpow.pop %v1972
          %v1974 = vmul.f32 %v1941, 1.442695
          %v1975 = vpow.pop %v1974
          %v1976 = vmul.f32 %v1942, 1.442695
          %v1977 = vpow.pop %v1976
          %v1978 = vmul.f32 %v1943, 1.442695
          %v1979 = vpow.pop %v1978
          %v1980 = vmul.f32 %v1944, 1.442695
          %v1981 = vpow.pop %v1980
          %v1982 = vmul.f32 %v1945, 1.442695
          %v1983 = vpow.pop %v1982
          %v1984 = vmul.f32 %v1946, 1.442695
          %v1985 = vpow.pop %v1984
          %v1986 = vmul.f32 %v1947, 1.442695
          %v1987 = vpow.pop %v1986
          %v1988 = vmul.f32 %v1948, 1.442695
          %v1989 = vpow.pop %v1988
          %v1990 = vmul.f32 %v1949, 1.442695
          %v1991 = vpow.pop %v1990
          %v1992 = vmul.f32 %v1950, 1.442695
          %v1993 = vpow.pop %v1992
          %v1994 = vmul.f32 %v1951, 1.442695
          %v1995 = vpow.pop %v1994
          %v1996 = vmul.f32 %v1952, 1.442695
          %v1997 = vpow.pop %v1996
          %v1998 = vmul.f32 %v1953, 1.442695
          %v1999 = vpow.pop %v1998
          %v2000 = vmul.f32 %v1954, 1.442695
          %v2001 = vpow.pop %v2000
          %v2002 = vmul.f32 %v1955, 1.442695
          %v2003 = vpow.pop %v2002
          %v2004 = vmul.f32 %v1956, 1.442695
          %v2005 = vpow.pop %v2004
          %v2006 = vmul.f32 %v1957, 1.442695
          %v2007 = vpow.pop %v2006
          %v2008 = vmul.f32 %v1958, 1.442695
          %v2009 = vpow.pop %v2008
          %v2010 = vmul.f32 %v1959, 1.442695
          %v2011 = vpow.pop %v2010
          %v2012 = vmul.f32 %v1960, 1.442695
          %v2013 = vpow.pop %v2012
          %v2014 = vmul.f32 %v1961, 1.442695
          %v2015 = vpow.pop %v2014
          %v2016 = vmul.f32 %v1962, 1.442695
          %v2017 = vpow.pop %v2016
          %v2018 = vmul.f32 %v1963, 1.442695
          %v2019 = vpow.pop %v2018
          %v2020 = vmul.f32 %v1964, 1.442695
          %v2021 = vpow.pop %v2020
          %v2022 = vmul.f32 %v1965, 1.442695
          %v2023 = vpow.pop %v2022
          %v2024 = vmul.f32 %v1966, 1.442695
          %v2025 = vpow.pop %v2024
          %v2026 = vmul.f32 %v1967, 1.442695
          %v2027 = vpow.pop %v2026
          %v2028 = vmul.f32 %v1968, 1.442695
          %v2029 = vpow.pop %v2028
          %v2030 = vmul.f32 %v1969, 1.442695
          %v2031 = vpow.pop %v2030
          %v2032 = vmul.f32 %v1970, 1.442695
          %v2033 = vpow.pop %v2032
          %v2034 = vmul.f32 %v1971, 1.442695
          %v2035 = vpow.pop %v2034
          %v2036 = vld [vmem:[#allocation4] sm:$0xff]
          %v2037 = vld [vmem:[#allocation4 + $0x8] sm:$0xff]
          %v2038 = vld [vmem:[#allocation4 + $0x10] sm:$0xff]
          %v2039 = vld [vmem:[#allocation4 + $0x18] sm:$0xff]
          %v2040 = vld [vmem:[#allocation4 + $0x20] sm:$0xff]
          %v2041 = vld [vmem:[#allocation4 + $0x28] sm:$0xff]
          %v2042 = vld [vmem:[#allocation4 + $0x30] sm:$0xff]
          %v2043 = vld [vmem:[#allocation4 + $0x38] sm:$0xff]
          %v2044 = vld [vmem:[#allocation4 + $0x40] sm:$0xff]
          %v2045 = vld [vmem:[#allocation4 + $0x48] sm:$0xff]
          %v2046 = vld [vmem:[#allocation4 + $0x50] sm:$0xff]
          %v2047 = vld [vmem:[#allocation4 + $0x58] sm:$0xff]
          %v2048 = vld [vmem:[#allocation4 + $0x60] sm:$0xff]
          %v2049 = vld [vmem:[#allocation4 + $0x68] sm:$0xff]
          %v2050 = vld [vmem:[#allocation4 + $0x70] sm:$0xff]
          %v2051 = vld [vmem:[#allocation4 + $0x78] sm:$0xff]
          %v2052 = vld [vmem:[#allocation4 + $0x80] sm:$0xff]
          %v2053 = vld [vmem:[#allocation4 + $0x88] sm:$0xff]
          %v2054 = vld [vmem:[#allocation4 + $0x90] sm:$0xff]
          %v2055 = vld [vmem:[#allocation4 + $0x98] sm:$0xff]
          %v2056 = vld [vmem:[#allocation4 + $0xa0] sm:$0xff]
          %v2057 = vld [vmem:[#allocation4 + $0xa8] sm:$0xff]
          %v2058 = vld [vmem:[#allocation4 + $0xb0] sm:$0xff]
          %v2059 = vld [vmem:[#allocation4 + $0xb8] sm:$0xff]
          %v2060 = vld [vmem:[#allocation4 + $0xc0] sm:$0xff]
          %v2061 = vld [vmem:[#allocation4 + $0xc8] sm:$0xff]
          %v2062 = vld [vmem:[#allocation4 + $0xd0] sm:$0xff]
          %v2063 = vld [vmem:[#allocation4 + $0xd8] sm:$0xff]
          %v2064 = vld [vmem:[#allocation4 + $0xe0] sm:$0xff]
          %v2065 = vld [vmem:[#allocation4 + $0xe8] sm:$0xff]
          %v2066 = vld [vmem:[#allocation4 + $0xf0] sm:$0xff]
          %v2067 = vld [vmem:[#allocation4 + $0xf8] sm:$0xff]
          %v2068 = vmul.f32 %v1717, %v2036
          %v2069 = vmul.f32 %v1719, %v2037
          %v2070 = vmul.f32 %v1721, %v2038
          %v2071 = vmul.f32 %v1723, %v2039
          %v2072 = vmul.f32 %v1725, %v2040
          %v2073 = vmul.f32 %v1727, %v2041
          %v2074 = vmul.f32 %v1729, %v2042
          %v2075 = vmul.f32 %v1731, %v2043
          %v2076 = vmul.f32 %v1733, %v2044
          %v2077 = vmul.f32 %v1735, %v2045
          %v2078 = vmul.f32 %v1737, %v2046
          %v2079 = vmul.f32 %v1739, %v2047
          %v2080 = vmul.f32 %v1741, %v2048
          %v2081 = vmul.f32 %v1743, %v2049
          %v2082 = vmul.f32 %v1745, %v2050
          %v2083 = vmul.f32 %v1747, %v2051
          %v2084 = vmul.f32 %v1749, %v2052
          %v2085 = vmul.f32 %v1751, %v2053
          %v2086 = vmul.f32 %v1753, %v2054
          %v2087 = vmul.f32 %v1755, %v2055
          %v2088 = vmul.f32 %v1757, %v2056
          %v2089 = vmul.f32 %v1759, %v2057
          %v2090 = vmul.f32 %v1761, %v2058
          %v2091 = vmul.f32 %v1763, %v2059
          %v2092 = vmul.f32 %v1765, %v2060
          %v2093 = vmul.f32 %v1767, %v2061
          %v2094 = vmul.f32 %v1769, %v2062
          %v2095 = vmul.f32 %v1771, %v2063
          %v2096 = vmul.f32 %v1773, %v2064
          %v2097 = vmul.f32 %v1775, %v2065
          %v2098 = vmul.f32 %v1777, %v2066
          %v2099 = vmul.f32 %v1779, %v2067
          %v2100 = vsel %vm1555, %v1973, 0.0
          %2101 = vadd.xlane.f32.xlu0 %v2100
          %v2102 = vpop.xlane.xlu0 %2101
          %v2103 = vsel %vm1555, %v1975, 0.0
          %2104 = vadd.xlane.f32.xlu0 %v2103
          %v2105 = vpop.xlane.xlu0 %2104
          %v2106 = vsel %vm1555, %v1977, 0.0
          %2107 = vadd.xlane.f32.xlu0 %v2106
          %v2108 = vpop.xlane.xlu0 %2107
          %v2109 = vsel %vm1555, %v1979, 0.0
          %2110 = vadd.xlane.f32.xlu0 %v2109
          %v2111 = vpop.xlane.xlu0 %2110
          %v2112 = vsel %vm1555, %v1981, 0.0
          %2113 = vadd.xlane.f32.xlu0 %v2112
          %v2114 = vpop.xlane.xlu0 %2113
          %v2115 = vsel %vm1555, %v1983, 0.0
          %2116 = vadd.xlane.f32.xlu0 %v2115
          %v2117 = vpop.xlane.xlu0 %2116
          %v2118 = vsel %vm1555, %v1985, 0.0
          %2119 = vadd.xlane.f32.xlu0 %v2118
          %v2120 = vpop.xlane.xlu0 %2119
          %v2121 = vsel %vm1555, %v1987, 0.0
          %2122 = vadd.xlane.f32.xlu0 %v2121
          %v2123 = vpop.xlane.xlu0 %2122
          %v2124 = vsel %vm1555, %v1989, 0.0
          %2125 = vadd.xlane.f32.xlu0 %v2124
          %v2126 = vpop.xlane.xlu0 %2125
          %v2127 = vsel %vm1555, %v1991, 0.0
          %2128 = vadd.xlane.f32.xlu0 %v2127
          %v2129 = vpop.xlane.xlu0 %2128
          %v2130 = vsel %vm1555, %v1993, 0.0
          %2131 = vadd.xlane.f32.xlu0 %v2130
          %v2132 = vpop.xlane.xlu0 %2131
          %v2133 = vsel %vm1555, %v1995, 0.0
          %2134 = vadd.xlane.f32.xlu0 %v2133
          %v2135 = vpop.xlane.xlu0 %2134
          %v2136 = vsel %vm1555, %v1997, 0.0
          %2137 = vadd.xlane.f32.xlu0 %v2136
          %v2138 = vpop.xlane.xlu0 %2137
          %v2139 = vsel %vm1555, %v1999, 0.0
          %2140 = vadd.xlane.f32.xlu0 %v2139
          %v2141 = vpop.xlane.xlu0 %2140
          %v2142 = vsel %vm1555, %v2001, 0.0
          %2143 = vadd.xlane.f32.xlu0 %v2142
          %v2144 = vpop.xlane.xlu0 %2143
          %v2145 = vsel %vm1555, %v2003, 0.0
          %2146 = vadd.xlane.f32.xlu0 %v2145
          %v2147 = vpop.xlane.xlu0 %2146
          %v2148 = vsel %vm1555, %v2005, 0.0
          %2149 = vadd.xlane.f32.xlu0 %v2148
          %v2150 = vpop.xlane.xlu0 %2149
          %v2151 = vsel %vm1555, %v2007, 0.0
          %2152 = vadd.xlane.f32.xlu0 %v2151
          %v2153 = vpop.xlane.xlu0 %2152
          %v2154 = vsel %vm1555, %v2009, 0.0
          %2155 = vadd.xlane.f32.xlu0 %v2154
          %v2156 = vpop.xlane.xlu0 %2155
          %v2157 = vsel %vm1555, %v2011, 0.0
          %2158 = vadd.xlane.f32.xlu0 %v2157
          %v2159 = vpop.xlane.xlu0 %2158
          %v2160 = vsel %vm1555, %v2013, 0.0
          %2161 = vadd.xlane.f32.xlu0 %v2160
          %v2162 = vpop.xlane.xlu0 %2161
          %v2163 = vsel %vm1555, %v2015, 0.0
          %2164 = vadd.xlane.f32.xlu0 %v2163
          %v2165 = vpop.xlane.xlu0 %2164
          %v2166 = vsel %vm1555, %v2017, 0.0
          %2167 = vadd.xlane.f32.xlu0 %v2166
          %v2168 = vpop.xlane.xlu0 %2167
          %v2169 = vsel %vm1555, %v2019, 0.0
          %2170 = vadd.xlane.f32.xlu0 %v2169
          %v2171 = vpop.xlane.xlu0 %2170
          %v2172 = vsel %vm1555, %v2021, 0.0
          %2173 = vadd.xlane.f32.xlu0 %v2172
          %v2174 = vpop.xlane.xlu0 %2173
          %v2175 = vsel %vm1555, %v2023, 0.0
          %2176 = vadd.xlane.f32.xlu0 %v2175
          %v2177 = vpop.xlane.xlu0 %2176
          %v2178 = vsel %vm1555, %v2025, 0.0
          %2179 = vadd.xlane.f32.xlu0 %v2178
          %v2180 = vpop.xlane.xlu0 %2179
          %v2181 = vsel %vm1555, %v2027, 0.0
          %2182 = vadd.xlane.f32.xlu0 %v2181
          %v2183 = vpop.xlane.xlu0 %2182
          %v2184 = vsel %vm1555, %v2029, 0.0
          %2185 = vadd.xlane.f32.xlu0 %v2184
          %v2186 = vpop.xlane.xlu0 %2185
          %v2187 = vsel %vm1555, %v2031, 0.0
          %2188 = vadd.xlane.f32.xlu0 %v2187
          %v2189 = vpop.xlane.xlu0 %2188
          %v2190 = vsel %vm1555, %v2033, 0.0
          %2191 = vadd.xlane.f32.xlu0 %v2190
          %v2192 = vpop.xlane.xlu0 %2191
          %v2193 = vsel %vm1555, %v2035, 0.0
          %2194 = vadd.xlane.f32.xlu0 %v2193
          %v2195 = vpop.xlane.xlu0 %2194
          %v2196 = vadd.f32 %v2068, %v2102
          %v2197 = vadd.f32 %v2069, %v2105
          %v2198 = vadd.f32 %v2070, %v2108
          %v2199 = vadd.f32 %v2071, %v2111
          %v2200 = vadd.f32 %v2072, %v2114
          %v2201 = vadd.f32 %v2073, %v2117
          %v2202 = vadd.f32 %v2074, %v2120
          %v2203 = vadd.f32 %v2075, %v2123
          %v2204 = vadd.f32 %v2076, %v2126
          %v2205 = vadd.f32 %v2077, %v2129
          %v2206 = vadd.f32 %v2078, %v2132
          %v2207 = vadd.f32 %v2079, %v2135
          %v2208 = vadd.f32 %v2080, %v2138
          %v2209 = vadd.f32 %v2081, %v2141
          %v2210 = vadd.f32 %v2082, %v2144
          %v2211 = vadd.f32 %v2083, %v2147
          %v2212 = vadd.f32 %v2084, %v2150
          %v2213 = vadd.f32 %v2085, %v2153
          %v2214 = vadd.f32 %v2086, %v2156
          %v2215 = vadd.f32 %v2087, %v2159
          %v2216 = vadd.f32 %v2088, %v2162
          %v2217 = vadd.f32 %v2089, %v2165
          %v2218 = vadd.f32 %v2090, %v2168
          %v2219 = vadd.f32 %v2091, %v2171
          %v2220 = vadd.f32 %v2092, %v2174
          %v2221 = vadd.f32 %v2093, %v2177
          %v2222 = vadd.f32 %v2094, %v2180
          %v2223 = vadd.f32 %v2095, %v2183
          %v2224 = vadd.f32 %v2096, %v2186
          %v2225 = vadd.f32 %v2097, %v2189
          %v2226 = vadd.f32 %v2098, %v2192
          %v2227 = vadd.f32 %v2099, %v2195
          %vm2228 = vcmask 7168
          %2229 = vst.msk [vmem:[#allocation4] sm:$0xff] %vm2228, %v2196
          %2230 = vst.msk [vmem:[#allocation4 + $0x8] sm:$0xff] %vm2228, %v2197
          %2231 = vst.msk [vmem:[#allocation4 + $0x10] sm:$0xff] %vm2228, %v2198
          %2232 = vst.msk [vmem:[#allocation4 + $0x18] sm:$0xff] %vm2228, %v2199
          %2233 = vst.msk [vmem:[#allocation4 + $0x20] sm:$0xff] %vm2228, %v2200
          %2234 = vst.msk [vmem:[#allocation4 + $0x28] sm:$0xff] %vm2228, %v2201
          %2235 = vst.msk [vmem:[#allocation4 + $0x30] sm:$0xff] %vm2228, %v2202
          %2236 = vst.msk [vmem:[#allocation4 + $0x38] sm:$0xff] %vm2228, %v2203
          %2237 = vst.msk [vmem:[#allocation4 + $0x40] sm:$0xff] %vm2228, %v2204
          %2238 = vst.msk [vmem:[#allocation4 + $0x48] sm:$0xff] %vm2228, %v2205
          %2239 = vst.msk [vmem:[#allocation4 + $0x50] sm:$0xff] %vm2228, %v2206
          %2240 = vst.msk [vmem:[#allocation4 + $0x58] sm:$0xff] %vm2228, %v2207
          %2241 = vst.msk [vmem:[#allocation4 + $0x60] sm:$0xff] %vm2228, %v2208
          %2242 = vst.msk [vmem:[#allocation4 + $0x68] sm:$0xff] %vm2228, %v2209
          %2243 = vst.msk [vmem:[#allocation4 + $0x70] sm:$0xff] %vm2228, %v2210
          %2244 = vst.msk [vmem:[#allocation4 + $0x78] sm:$0xff] %vm2228, %v2211
          %2245 = vst.msk [vmem:[#allocation4 + $0x80] sm:$0xff] %vm2228, %v2212
          %2246 = vst.msk [vmem:[#allocation4 + $0x88] sm:$0xff] %vm2228, %v2213
          %2247 = vst.msk [vmem:[#allocation4 + $0x90] sm:$0xff] %vm2228, %v2214
          %2248 = vst.msk [vmem:[#allocation4 + $0x98] sm:$0xff] %vm2228, %v2215
          %2249 = vst.msk [vmem:[#allocation4 + $0xa0] sm:$0xff] %vm2228, %v2216
          %2250 = vst.msk [vmem:[#allocation4 + $0xa8] sm:$0xff] %vm2228, %v2217
          %2251 = vst.msk [vmem:[#allocation4 + $0xb0] sm:$0xff] %vm2228, %v2218
          %2252 = vst.msk [vmem:[#allocation4 + $0xb8] sm:$0xff] %vm2228, %v2219
          %2253 = vst.msk [vmem:[#allocation4 + $0xc0] sm:$0xff] %vm2228, %v2220
          %2254 = vst.msk [vmem:[#allocation4 + $0xc8] sm:$0xff] %vm2228, %v2221
          %2255 = vst.msk [vmem:[#allocation4 + $0xd0] sm:$0xff] %vm2228, %v2222
          %2256 = vst.msk [vmem:[#allocation4 + $0xd8] sm:$0xff] %vm2228, %v2223
          %2257 = vst.msk [vmem:[#allocation4 + $0xe0] sm:$0xff] %vm2228, %v2224
          %2258 = vst.msk [vmem:[#allocation4 + $0xe8] sm:$0xff] %vm2228, %v2225
          %2259 = vst.msk [vmem:[#allocation4 + $0xf0] sm:$0xff] %vm2228, %v2226
          %2260 = vst.msk [vmem:[#allocation4 + $0xf8] sm:$0xff] %vm2228, %v2227
          %v2261 = vld [vmem:[#allocation5] sm:$0xff]
          %v2262 = vld [vmem:[#allocation5 + $0x8] sm:$0xff]
          %v2263 = vld [vmem:[#allocation5 + $0x10] sm:$0xff]
          %v2264 = vld [vmem:[#allocation5 + $0x18] sm:$0xff]
          %v2265 = vld [vmem:[#allocation5 + $0x20] sm:$0xff]
          %v2266 = vld [vmem:[#allocation5 + $0x28] sm:$0xff]
          %v2267 = vld [vmem:[#allocation5 + $0x30] sm:$0xff]
          %v2268 = vld [vmem:[#allocation5 + $0x38] sm:$0xff]
          %v2269 = vld [vmem:[#allocation5 + $0x40] sm:$0xff]
          %v2270 = vld [vmem:[#allocation5 + $0x48] sm:$0xff]
          %v2271 = vld [vmem:[#allocation5 + $0x50] sm:$0xff]
          %v2272 = vld [vmem:[#allocation5 + $0x58] sm:$0xff]
          %v2273 = vld [vmem:[#allocation5 + $0x60] sm:$0xff]
          %v2274 = vld [vmem:[#allocation5 + $0x68] sm:$0xff]
          %v2275 = vld [vmem:[#allocation5 + $0x70] sm:$0xff]
          %v2276 = vld [vmem:[#allocation5 + $0x78] sm:$0xff]
          %v2277 = vld [vmem:[#allocation5 + $0x80] sm:$0xff]
          %v2278 = vld [vmem:[#allocation5 + $0x88] sm:$0xff]
          %v2279 = vld [vmem:[#allocation5 + $0x90] sm:$0xff]
          %v2280 = vld [vmem:[#allocation5 + $0x98] sm:$0xff]
          %v2281 = vld [vmem:[#allocation5 + $0xa0] sm:$0xff]
          %v2282 = vld [vmem:[#allocation5 + $0xa8] sm:$0xff]
          %v2283 = vld [vmem:[#allocation5 + $0xb0] sm:$0xff]
          %v2284 = vld [vmem:[#allocation5 + $0xb8] sm:$0xff]
          %v2285 = vld [vmem:[#allocation5 + $0xc0] sm:$0xff]
          %v2286 = vld [vmem:[#allocation5 + $0xc8] sm:$0xff]
          %v2287 = vld [vmem:[#allocation5 + $0xd0] sm:$0xff]
          %v2288 = vld [vmem:[#allocation5 + $0xd8] sm:$0xff]
          %v2289 = vld [vmem:[#allocation5 + $0xe0] sm:$0xff]
          %v2290 = vld [vmem:[#allocation5 + $0xe8] sm:$0xff]
          %v2291 = vld [vmem:[#allocation5 + $0xf0] sm:$0xff]
          %v2292 = vld [vmem:[#allocation5 + $0xf8] sm:$0xff]
          %2294 = vset.pattern.permute.xlu0 0
          %2295 = vperm.xlu0 %2294, %v1717
          %v2296 = vpop.permute.xlu0 %2295
          %2299 = vset.pattern.permute.xlu0 0
          %2300 = vperm.xlu0 %2299, %v1719
          %v2301 = vpop.permute.xlu0 %2300
          %2304 = vset.pattern.permute.xlu0 0
          %2305 = vperm.xlu0 %2304, %v1721
          %v2306 = vpop.permute.xlu0 %2305
          %2309 = vset.pattern.permute.xlu0 0
          %2310 = vperm.xlu0 %2309, %v1723
          %v2311 = vpop.permute.xlu0 %2310
          %2314 = vset.pattern.permute.xlu0 0
          %2315 = vperm.xlu0 %2314, %v1725
          %v2316 = vpop.permute.xlu0 %2315
          %2319 = vset.pattern.permute.xlu0 0
          %2320 = vperm.xlu0 %2319, %v1727
          %v2321 = vpop.permute.xlu0 %2320
          %2324 = vset.pattern.permute.xlu0 0
          %2325 = vperm.xlu0 %2324, %v1729
          %v2326 = vpop.permute.xlu0 %2325
          %2329 = vset.pattern.permute.xlu0 0
          %2330 = vperm.xlu0 %2329, %v1731
          %v2331 = vpop.permute.xlu0 %2330
          %2334 = vset.pattern.permute.xlu0 0
          %2335 = vperm.xlu0 %2334, %v1733
          %v2336 = vpop.permute.xlu0 %2335
          %2339 = vset.pattern.permute.xlu0 0
          %2340 = vperm.xlu0 %2339, %v1735
          %v2341 = vpop.permute.xlu0 %2340
          %2344 = vset.pattern.permute.xlu0 0
          %2345 = vperm.xlu0 %2344, %v1737
          %v2346 = vpop.permute.xlu0 %2345
          %2349 = vset.pattern.permute.xlu0 0
          %2350 = vperm.xlu0 %2349, %v1739
          %v2351 = vpop.permute.xlu0 %2350
          %2354 = vset.pattern.permute.xlu0 0
          %2355 = vperm.xlu0 %2354, %v1741
          %v2356 = vpop.permute.xlu0 %2355
          %2359 = vset.pattern.permute.xlu0 0
          %2360 = vperm.xlu0 %2359, %v1743
          %v2361 = vpop.permute.xlu0 %2360
          %2364 = vset.pattern.permute.xlu0 0
          %2365 = vperm.xlu0 %2364, %v1745
          %v2366 = vpop.permute.xlu0 %2365
          %2369 = vset.pattern.permute.xlu0 0
          %2370 = vperm.xlu0 %2369, %v1747
          %v2371 = vpop.permute.xlu0 %2370
          %2374 = vset.pattern.permute.xlu0 0
          %2375 = vperm.xlu0 %2374, %v1749
          %v2376 = vpop.permute.xlu0 %2375
          %2379 = vset.pattern.permute.xlu0 0
          %2380 = vperm.xlu0 %2379, %v1751
          %v2381 = vpop.permute.xlu0 %2380
          %2384 = vset.pattern.permute.xlu0 0
          %2385 = vperm.xlu0 %2384, %v1753
          %v2386 = vpop.permute.xlu0 %2385
          %2389 = vset.pattern.permute.xlu0 0
          %2390 = vperm.xlu0 %2389, %v1755
          %v2391 = vpop.permute.xlu0 %2390
          %2394 = vset.pattern.permute.xlu0 0
          %2395 = vperm.xlu0 %2394, %v1757
          %v2396 = vpop.permute.xlu0 %2395
          %2399 = vset.pattern.permute.xlu0 0
          %2400 = vperm.xlu0 %2399, %v1759
          %v2401 = vpop.permute.xlu0 %2400
          %2404 = vset.pattern.permute.xlu0 0
          %2405 = vperm.xlu0 %2404, %v1761
          %v2406 = vpop.permute.xlu0 %2405
          %2409 = vset.pattern.permute.xlu0 0
          %2410 = vperm.xlu0 %2409, %v1763
          %v2411 = vpop.permute.xlu0 %2410
          %2414 = vset.pattern.permute.xlu0 0
          %2415 = vperm.xlu0 %2414, %v1765
          %v2416 = vpop.permute.xlu0 %2415
          %2419 = vset.pattern.permute.xlu0 0
          %2420 = vperm.xlu0 %2419, %v1767
          %v2421 = vpop.permute.xlu0 %2420
          %2424 = vset.pattern.permute.xlu0 0
          %2425 = vperm.xlu0 %2424, %v1769
          %v2426 = vpop.permute.xlu0 %2425
          %2429 = vset.pattern.permute.xlu0 0
          %2430 = vperm.xlu0 %2429, %v1771
          %v2431 = vpop.permute.xlu0 %2430
          %2434 = vset.pattern.permute.xlu0 0
          %2435 = vperm.xlu0 %2434, %v1773
          %v2436 = vpop.permute.xlu0 %2435
          %2439 = vset.pattern.permute.xlu0 0
          %2440 = vperm.xlu0 %2439, %v1775
          %v2441 = vpop.permute.xlu0 %2440
          %2444 = vset.pattern.permute.xlu0 0
          %2445 = vperm.xlu0 %2444, %v1777
          %v2446 = vpop.permute.xlu0 %2445
          %2449 = vset.pattern.permute.xlu0 0
          %2450 = vperm.xlu0 %2449, %v1779
          %v2451 = vpop.permute.xlu0 %2450
          %v2453 = vmul.f32 %v2296, %v2261
          %v2454 = vmul.f32 %v2301, %v2262
          %v2455 = vmul.f32 %v2306, %v2263
          %v2456 = vmul.f32 %v2311, %v2264
          %v2457 = vmul.f32 %v2316, %v2265
          %v2458 = vmul.f32 %v2321, %v2266
          %v2459 = vmul.f32 %v2326, %v2267
          %v2460 = vmul.f32 %v2331, %v2268
          %v2461 = vmul.f32 %v2336, %v2269
          %v2462 = vmul.f32 %v2341, %v2270
          %v2463 = vmul.f32 %v2346, %v2271
          %v2464 = vmul.f32 %v2351, %v2272
          %v2465 = vmul.f32 %v2356, %v2273
          %v2466 = vmul.f32 %v2361, %v2274
          %v2467 = vmul.f32 %v2366, %v2275
          %v2468 = vmul.f32 %v2371, %v2276
          %v2469 = vmul.f32 %v2376, %v2277
          %v2470 = vmul.f32 %v2381, %v2278
          %v2471 = vmul.f32 %v2386, %v2279
          %v2472 = vmul.f32 %v2391, %v2280
          %v2473 = vmul.f32 %v2396, %v2281
          %v2474 = vmul.f32 %v2401, %v2282
          %v2475 = vmul.f32 %v2406, %v2283
          %v2476 = vmul.f32 %v2411, %v2284
          %v2477 = vmul.f32 %v2416, %v2285
          %v2478 = vmul.f32 %v2421, %v2286
          %v2479 = vmul.f32 %v2426, %v2287
          %v2480 = vmul.f32 %v2431, %v2288
          %v2481 = vmul.f32 %v2436, %v2289
          %v2482 = vmul.f32 %v2441, %v2290
          %v2483 = vmul.f32 %v2446, %v2291
          %v2484 = vmul.f32 %v2451, %v2292
          %v2485 = vpack.c.bf16 %v1975, %v1973
          %v2486 = vpack.c.bf16 %v1979, %v1977
          %v2487 = vpack.c.bf16 %v1983, %v1981
          %v2488 = vpack.c.bf16 %v1987, %v1985
          %v2489 = vpack.c.bf16 %v1991, %v1989
          %v2490 = vpack.c.bf16 %v1995, %v1993
          %v2491 = vpack.c.bf16 %v1999, %v1997
          %v2492 = vpack.c.bf16 %v2003, %v2001
          %v2493 = vpack.c.bf16 %v2007, %v2005
          %v2494 = vpack.c.bf16 %v2011, %v2009
          %v2495 = vpack.c.bf16 %v2015, %v2013
          %v2496 = vpack.c.bf16 %v2019, %v2017
          %v2497 = vpack.c.bf16 %v2023, %v2021
          %v2498 = vpack.c.bf16 %v2027, %v2025
          %v2499 = vpack.c.bf16 %v2031, %v2029
          %v2500 = vpack.c.bf16 %v2035, %v2033
          %v2502 = vsel %vm1555, %v2485, 0
          %v2505 = vsel %vm1555, %v2486, 0
          %v2508 = vsel %vm1555, %v2487, 0
          %v2511 = vsel %vm1555, %v2488, 0
          %2513 = vmatprep.subr.bf16.mxu0 0
          %2514 = vmatpush1.bf16.msra.mxu0 %v996
          %2515 = vmatprep.subr.bf16.mxu0 0
          %2516 = vmatpush1.bf16.msra.mxu0 %v998
          %2517 = vmatprep.subr.bf16.mxu0 0
          %2518 = vmatpush1.bf16.msra.mxu0 %v1000
          %2519 = vmatprep.subr.bf16.mxu0 0
          %2520 = vmatpush1.bf16.msra.mxu0 %v1002
          %2521 = vmatprep.subr.bf16.mxu0 0
          %2522 = vmatpush1.bf16.msra.mxu0 0
          %2523 = vmatprep.subr.bf16.mxu0 0
          %2524 = vmatpush1.bf16.msra.mxu0 0
          %2525 = vmatprep.subr.bf16.mxu0 0
          %2526 = vmatpush1.bf16.msra.mxu0 0
          %2527 = vmatprep.subr.bf16.mxu0 0
          %2528 = vmatpush1.bf16.msra.mxu0 0
          %2529 = vmatprep.subr.bf16.mxu0 0
          %2530 = vmatpush1.bf16.msra.mxu0 0
          %2531 = vmatprep.subr.bf16.mxu0 0
          %2532 = vmatpush1.bf16.msra.mxu0 0
          %2533 = vmatprep.subr.bf16.mxu0 0
          %2534 = vmatpush1.bf16.msra.mxu0 0
          %2535 = vmatprep.subr.bf16.mxu0 0
          %2536 = vmatpush1.bf16.msra.mxu0 0
          %2537 = vmatprep.subr.bf16.mxu0 0
          %2538 = vmatpush1.bf16.msra.mxu0 0
          %2539 = vmatprep.subr.bf16.mxu0 0
          %2540 = vmatpush1.bf16.msra.mxu0 0
          %2541 = vmatprep.subr.bf16.mxu0 0
          %2542 = vmatpush1.bf16.msra.mxu0 0
          %2543 = vmatprep.subr.bf16.mxu0 0
          %2544 = vmatpush1.bf16.msra.mxu0 0
          %2545 = vmatprep.mubr.bf16.mxu0 0
          %2546 = vmatmul.mubr.bf16.gmra.mrb[0].mxu0 %v2502
          %v2547 = vpop.f32.mrb[0].mxu0
          %v2548 = vadd.f32 0.0, %v2547
          %v2549 = vpop.f32.mrb[0].mxu0
          %v2550 = vpop.f32.mrb[0].mxu0
          %v2551 = vadd.f32 0.0, %v2550
          %v2552 = vpop.f32.mrb[0].mxu0
          %2553 = vmatprep.mubr.bf16.mxu0 0
          %2554 = vmatmul.mubr.bf16.gmra.mrb[0].mxu0 %v2505
          %v2555 = vpop.f32.mrb[0].mxu0
          %v2556 = vadd.f32 0.0, %v2555
          %v2557 = vpop.f32.mrb[0].mxu0
          %v2558 = vpop.f32.mrb[0].mxu0
          %v2559 = vadd.f32 0.0, %v2558
          %v2560 = vpop.f32.mrb[0].mxu0
          %2561 = vmatprep.mubr.bf16.mxu0 0
          %2562 = vmatmul.mubr.bf16.gmra.mrb[0].mxu0 %v2508
          %v2563 = vpop.f32.mrb[0].mxu0
          %v2564 = vadd.f32 0.0, %v2563
          %v2565 = vpop.f32.mrb[0].mxu0
          %v2566 = vpop.f32.mrb[0].mxu0
          %v2567 = vadd.f32 0.0, %v2566
          %v2568 = vpop.f32.mrb[0].mxu0
          %2569 = vmatprep.mubr.bf16.mxu0 0
          %2570 = vmatmul.mubr.bf16.gmra.mrb[0].mxu0 %v2511
          %v2571 = vpop.f32.mrb[0].mxu0
          %v2572 = vadd.f32 0.0, %v2571
          %v2573 = vpop.f32.mrb[0].mxu0
          %v2574 = vpop.f32.mrb[0].mxu0
          %v2575 = vadd.f32 0.0, %v2574
          %v2576 = vpop.f32.mrb[0].mxu0
          %2577 = vdwg.mxu0
          %v2579 = vsel %vm1555, %v2489, 0
          %v2582 = vsel %vm1555, %v2490, 0
          %v2585 = vsel %vm1555, %v2491, 0
          %v2588 = vsel %vm1555, %v2492, 0
          %2590 = vmatprep.subr.bf16.mxu0 0
          %2591 = vmatpush1.bf16.msra.mxu0 %v1036
          %2592 = vmatprep.subr.bf16.mxu0 0
          %2593 = vmatpush1.bf16.msra.mxu0 %v1038
          %2594 = vmatprep.subr.bf16.mxu0 0
          %2595 = vmatpush1.bf16.msra.mxu0 %v1040
          %2596 = vmatprep.subr.bf16.mxu0 0
          %2597 = vmatpush1.bf16.msra.mxu0 %v1042
          %2598 = vmatprep.subr.bf16.mxu0 0
          %2599 = vmatpush1.bf16.msra.mxu0 0
          %2600 = vmatprep.subr.bf16.mxu0 0
          %2601 = vmatpush1.bf16.msra.mxu0 0
          %2602 = vmatprep.subr.bf16.mxu0 0
          %2603 = vmatpush1.bf16.msra.mxu0 0
          %2604 = vmatprep.subr.bf16.mxu0 0
          %2605 = vmatpush1.bf16.msra.mxu0 0
          %2606 = vmatprep.subr.bf16.mxu0 0
          %2607 = vmatpush1.bf16.msra.mxu0 0
          %2608 = vmatprep.subr.bf16.mxu0 0
          %2609 = vmatpush1.bf16.msra.mxu0 0
          %2610 = vmatprep.subr.bf16.mxu0 0
          %2611 = vmatpush1.bf16.msra.mxu0 0
          %2612 = vmatprep.subr.bf16.mxu0 0
          %2613 = vmatpush1.bf16.msra.mxu0 0
          %2614 = vmatprep.subr.bf16.mxu0 0
          %2615 = vmatpush1.bf16.msra.mxu0 0
          %2616 = vmatprep.subr.bf16.mxu0 0
          %2617 = vmatpush1.bf16.msra.mxu0 0
          %2618 = vmatprep.subr.bf16.mxu0 0
          %2619 = vmatpush1.bf16.msra.mxu0 0
          %2620 = vmatprep.subr.bf16.mxu0 0
          %2621 = vmatpush1.bf16.msra.mxu0 0
          %2622 = vmatprep.mubr.bf16.mxu0 0
          %2623 = vmatmul.mubr.bf16.gmra.mrb[0].mxu0 %v2579
          %v2624 = vpop.f32.mrb[0].mxu0
          %v2625 = vadd.f32 0.0, %v2624
          %v2626 = vpop.f32.mrb[0].mxu0
          %v2627 = vpop.f32.mrb[0].mxu0
          %v2628 = vadd.f32 0.0, %v2627
          %v2629 = vpop.f32.mrb[0].mxu0
          %2630 = vmatprep.mubr.bf16.mxu0 0
          %2631 = vmatmul.mubr.bf16.gmra.mrb[0].mxu0 %v2582
          %v2632 = vpop.f32.mrb[0].mxu0
          %v2633 = vadd.f32 0.0, %v2632
          %v2634 = vpop.f32.mrb[0].mxu0
          %v2635 = vpop.f32.mrb[0].mxu0
          %v2636 = vadd.f32 0.0, %v2635
          %v2637 = vpop.f32.mrb[0].mxu0
          %2638 = vmatprep.mubr.bf16.mxu0 0
          %2639 = vmatmul.mubr.bf16.gmra.mrb[0].mxu0 %v2585
          %v2640 = vpop.f32.mrb[0].mxu0
          %v2641 = vadd.f32 0.0, %v2640
          %v2642 = vpop.f32.mrb[0].mxu0
          %v2643 = vpop.f32.mrb[0].mxu0
          %v2644 = vadd.f32 0.0, %v2643
          %v2645 = vpop.f32.mrb[0].mxu0
          %2646 = vmatprep.mubr.bf16.mxu0 0
          %2647 = vmatmul.mubr.bf16.gmra.mrb[0].mxu0 %v2588
          %v2648 = vpop.f32.mrb[0].mxu0
          %v2649 = vadd.f32 0.0, %v2648
          %v2650 = vpop.f32.mrb[0].mxu0
          %v2651 = vpop.f32.mrb[0].mxu0
          %v2652 = vadd.f32 0.0, %v2651
          %v2653 = vpop.f32.mrb[0].mxu0
          %2654 = vdwg.mxu0
          %v2656 = vsel %vm1555, %v2493, 0
          %v2659 = vsel %vm1555, %v2494, 0
          %v2662 = vsel %vm1555, %v2495, 0
          %v2665 = vsel %vm1555, %v2496, 0
          %2667 = vmatprep.subr.bf16.mxu0 0
          %2668 = vmatpush1.bf16.msra.mxu0 %v1048
          %2669 = vmatprep.subr.bf16.mxu0 0
          %2670 = vmatpush1.bf16.msra.mxu0 %v1050
          %2671 = vmatprep.subr.bf16.mxu0 0
          %2672 = vmatpush1.bf16.msra.mxu0 %v1052
          %2673 = vmatprep.subr.bf16.mxu0 0
          %2674 = vmatpush1.bf16.msra.mxu0 %v1054
          %2675 = vmatprep.subr.bf16.mxu0 0
          %2676 = vmatpush1.bf16.msra.mxu0 0
          %2677 = vmatprep.subr.bf16.mxu0 0
          %2678 = vmatpush1.bf16.msra.mxu0 0
          %2679 = vmatprep.subr.bf16.mxu0 0
          %2680 = vmatpush1.bf16.msra.mxu0 0
          %2681 = vmatprep.subr.bf16.mxu0 0
          %2682 = vmatpush1.bf16.msra.mxu0 0
          %2683 = vmatprep.subr.bf16.mxu0 0
          %2684 = vmatpush1.bf16.msra.mxu0 0
          %2685 = vmatprep.subr.bf16.mxu0 0
          %2686 = vmatpush1.bf16.msra.mxu0 0
          %2687 = vmatprep.subr.bf16.mxu0 0
          %2688 = vmatpush1.bf16.msra.mxu0 0
          %2689 = vmatprep.subr.bf16.mxu0 0
          %2690 = vmatpush1.bf16.msra.mxu0 0
          %2691 = vmatprep.subr.bf16.mxu0 0
          %2692 = vmatpush1.bf16.msra.mxu0 0
          %2693 = vmatprep.subr.bf16.mxu0 0
          %2694 = vmatpush1.bf16.msra.mxu0 0
          %2695 = vmatprep.subr.bf16.mxu0 0
          %2696 = vmatpush1.bf16.msra.mxu0 0
          %2697 = vmatprep.subr.bf16.mxu0 0
          %2698 = vmatpush1.bf16.msra.mxu0 0
          %2699 = vmatprep.mubr.bf16.mxu0 0
          %2700 = vmatmul.mubr.bf16.gmra.mrb[0].mxu0 %v2656
          %v2701 = vpop.f32.mrb[0].mxu0
          %v2702 = vadd.f32 0.0, %v2701
          %v2703 = vpop.f32.mrb[0].mxu0
          %v2704 = vpop.f32.mrb[0].mxu0
          %v2705 = vadd.f32 0.0, %v2704
          %v2706 = vpop.f32.mrb[0].mxu0
          %2707 = vmatprep.mubr.bf16.mxu0 0
          %2708 = vmatmul.mubr.bf16.gmra.mrb[0].mxu0 %v2659
          %v2709 = vpop.f32.mrb[0].mxu0
          %v2710 = vadd.f32 0.0, %v2709
          %v2711 = vpop.f32.mrb[0].mxu0
          %v2712 = vpop.f32.mrb[0].mxu0
          %v2713 = vadd.f32 0.0, %v2712
          %v2714 = vpop.f32.mrb[0].mxu0
          %2715 = vmatprep.mubr.bf16.mxu0 0
          %2716 = vmatmul.mubr.bf16.gmra.mrb[0].mxu0 %v2662
          %v2717 = vpop.f32.mrb[0].mxu0
          %v2718 = vadd.f32 0.0, %v2717
          %v2719 = vpop.f32.mrb[0].mxu0
          %v2720 = vpop.f32.mrb[0].mxu0
          %v2721 = vadd.f32 0.0, %v2720
          %v2722 = vpop.f32.mrb[0].mxu0
          %2723 = vmatprep.mubr.bf16.mxu0 0
          %2724 = vmatmul.mubr.bf16.gmra.mrb[0].mxu0 %v2665
          %v2725 = vpop.f32.mrb[0].mxu0
          %v2726 = vadd.f32 0.0, %v2725
          %v2727 = vpop.f32.mrb[0].mxu0
          %v2728 = vpop.f32.mrb[0].mxu0
          %v2729 = vadd.f32 0.0, %v2728
          %v2730 = vpop.f32.mrb[0].mxu0
          %2731 = vdwg.mxu0
          %v2733 = vsel %vm1555, %v2497, 0
          %v2736 = vsel %vm1555, %v2498, 0
          %v2739 = vsel %vm1555, %v2499, 0
          %v2742 = vsel %vm1555, %v2500, 0
          %2744 = vmatprep.subr.bf16.mxu0 0
          %2745 = vmatpush1.bf16.msra.mxu0 %v1060
          %2746 = vmatprep.subr.bf16.mxu0 0
          %2747 = vmatpush1.bf16.msra.mxu0 %v1062
          %2748 = vmatprep.subr.bf16.mxu0 0
          %2749 = vmatpush1.bf16.msra.mxu0 %v1064
          %2750 = vmatprep.subr.bf16.mxu0 0
          %2751 = vmatpush1.bf16.msra.mxu0 %v1066
          %2752 = vmatprep.subr.bf16.mxu0 0
          %2753 = vmatpush1.bf16.msra.mxu0 0
          %2754 = vmatprep.subr.bf16.mxu0 0
          %2755 = vmatpush1.bf16.msra.mxu0 0
          %2756 = vmatprep.subr.bf16.mxu0 0
          %2757 = vmatpush1.bf16.msra.mxu0 0
          %2758 = vmatprep.subr.bf16.mxu0 0
          %2759 = vmatpush1.bf16.msra.mxu0 0
          %2760 = vmatprep.subr.bf16.mxu0 0
          %2761 = vmatpush1.bf16.msra.mxu0 0
          %2762 = vmatprep.subr.bf16.mxu0 0
          %2763 = vmatpush1.bf16.msra.mxu0 0
          %2764 = vmatprep.subr.bf16.mxu0 0
          %2765 = vmatpush1.bf16.msra.mxu0 0
          %2766 = vmatprep.subr.bf16.mxu0 0
          %2767 = vmatpush1.bf16.msra.mxu0 0
          %2768 = vmatprep.subr.bf16.mxu0 0
          %2769 = vmatpush1.bf16.msra.mxu0 0
          %2770 = vmatprep.subr.bf16.mxu0 0
          %2771 = vmatpush1.bf16.msra.mxu0 0
          %2772 = vmatprep.subr.bf16.mxu0 0
          %2773 = vmatpush1.bf16.msra.mxu0 0
          %2774 = vmatprep.subr.bf16.mxu0 0
          %2775 = vmatpush1.bf16.msra.mxu0 0
          %2776 = vmatprep.mubr.bf16.mxu0 0
          %2777 = vmatmul.mubr.bf16.gmra.mrb[0].mxu0 %v2733
          %v2778 = vpop.f32.mrb[0].mxu0
          %v2779 = vadd.f32 0.0, %v2778
          %v2780 = vpop.f32.mrb[0].mxu0
          %v2781 = vpop.f32.mrb[0].mxu0
          %v2782 = vadd.f32 0.0, %v2781
          %v2783 = vpop.f32.mrb[0].mxu0
          %2784 = vmatprep.mubr.bf16.mxu0 0
          %2785 = vmatmul.mubr.bf16.gmra.mrb[0].mxu0 %v2736
          %v2786 = vpop.f32.mrb[0].mxu0
          %v2787 = vadd.f32 0.0, %v2786
          %v2788 = vpop.f32.mrb[0].mxu0
          %v2789 = vpop.f32.mrb[0].mxu0
          %v2790 = vadd.f32 0.0, %v2789
          %v2791 = vpop.f32.mrb[0].mxu0
          %2792 = vmatprep.mubr.bf16.mxu0 0
          %2793 = vmatmul.mubr.bf16.gmra.mrb[0].mxu0 %v2739
          %v2794 = vpop.f32.mrb[0].mxu0
          %v2795 = vadd.f32 0.0, %v2794
          %v2796 = vpop.f32.mrb[0].mxu0
          %v2797 = vpop.f32.mrb[0].mxu0
          %v2798 = vadd.f32 0.0, %v2797
          %v2799 = vpop.f32.mrb[0].mxu0
          %2800 = vmatprep.mubr.bf16.mxu0 0
          %2801 = vmatmul.mubr.bf16.gmra.mrb[0].mxu0 %v2742
          %v2802 = vpop.f32.mrb[0].mxu0
          %v2803 = vadd.f32 0.0, %v2802
          %v2804 = vpop.f32.mrb[0].mxu0
          %v2805 = vpop.f32.mrb[0].mxu0
          %v2806 = vadd.f32 0.0, %v2805
          %v2807 = vpop.f32.mrb[0].mxu0
          %2808 = vdwg.mxu0
          %v2809 = vadd.f32 %v2453, %v2548
          %v2810 = vadd.f32 %v2454, %v2551
          %v2811 = vadd.f32 %v2455, %v2556
          %v2812 = vadd.f32 %v2456, %v2559
          %v2813 = vadd.f32 %v2457, %v2564
          %v2814 = vadd.f32 %v2458, %v2567
          %v2815 = vadd.f32 %v2459, %v2572
          %v2816 = vadd.f32 %v2460, %v2575
          %v2817 = vadd.f32 %v2461, %v2625
          %v2818 = vadd.f32 %v2462, %v2628
          %v2819 = vadd.f32 %v2463, %v2633
          %v2820 = vadd.f32 %v2464, %v2636
          %v2821 = vadd.f32 %v2465, %v2641
          %v2822 = vadd.f32 %v2466, %v2644
          %v2823 = vadd.f32 %v2467, %v2649
          %v2824 = vadd.f32 %v2468, %v2652
          %v2825 = vadd.f32 %v2469, %v2702
          %v2826 = vadd.f32 %v2470, %v2705
          %v2827 = vadd.f32 %v2471, %v2710
          %v2828 = vadd.f32 %v2472, %v2713
          %v2829 = vadd.f32 %v2473, %v2718
          %v2830 = vadd.f32 %v2474, %v2721
          %v2831 = vadd.f32 %v2475, %v2726
          %v2832 = vadd.f32 %v2476, %v2729
          %v2833 = vadd.f32 %v2477, %v2779
          %v2834 = vadd.f32 %v2478, %v2782
          %v2835 = vadd.f32 %v2479, %v2787
          %v2836 = vadd.f32 %v2480, %v2790
          %v2837 = vadd.f32 %v2481, %v2795
          %v2838 = vadd.f32 %v2482, %v2798
          %v2839 = vadd.f32 %v2483, %v2803
          %v2840 = vadd.f32 %v2484, %v2806
          %2841 = vst.msk [vmem:[#allocation5] sm:$0xff] %vm1087, %v2809
          %2842 = vst.msk [vmem:[#allocation5 + $0x8] sm:$0xff] %vm1087, %v2810
          %2843 = vst.msk [vmem:[#allocation5 + $0x10] sm:$0xff] %vm1087, %v2811
          %2844 = vst.msk [vmem:[#allocation5 + $0x18] sm:$0xff] %vm1087, %v2812
          %2845 = vst.msk [vmem:[#allocation5 + $0x20] sm:$0xff] %vm1087, %v2813
          %2846 = vst.msk [vmem:[#allocation5 + $0x28] sm:$0xff] %vm1087, %v2814
          %2847 = vst.msk [vmem:[#allocation5 + $0x30] sm:$0xff] %vm1087, %v2815
          %2848 = vst.msk [vmem:[#allocation5 + $0x38] sm:$0xff] %vm1087, %v2816
          %2849 = vst.msk [vmem:[#allocation5 + $0x40] sm:$0xff] %vm1087, %v2817
          %2850 = vst.msk [vmem:[#allocation5 + $0x48] sm:$0xff] %vm1087, %v2818
          %2851 = vst.msk [vmem:[#allocation5 + $0x50] sm:$0xff] %vm1087, %v2819
          %2852 = vst.msk [vmem:[#allocation5 + $0x58] sm:$0xff] %vm1087, %v2820
          %2853 = vst.msk [vmem:[#allocation5 + $0x60] sm:$0xff] %vm1087, %v2821
          %2854 = vst.msk [vmem:[#allocation5 + $0x68] sm:$0xff] %vm1087, %v2822
          %2855 = vst.msk [vmem:[#allocation5 + $0x70] sm:$0xff] %vm1087, %v2823
          %2856 = vst.msk [vmem:[#allocation5 + $0x78] sm:$0xff] %vm1087, %v2824
          %2857 = vst.msk [vmem:[#allocation5 + $0x80] sm:$0xff] %vm1087, %v2825
          %2858 = vst.msk [vmem:[#allocation5 + $0x88] sm:$0xff] %vm1087, %v2826
          %2859 = vst.msk [vmem:[#allocation5 + $0x90] sm:$0xff] %vm1087, %v2827
          %2860 = vst.msk [vmem:[#allocation5 + $0x98] sm:$0xff] %vm1087, %v2828
          %2861 = vst.msk [vmem:[#allocation5 + $0xa0] sm:$0xff] %vm1087, %v2829
          %2862 = vst.msk [vmem:[#allocation5 + $0xa8] sm:$0xff] %vm1087, %v2830
          %2863 = vst.msk [vmem:[#allocation5 + $0xb0] sm:$0xff] %vm1087, %v2831
          %2864 = vst.msk [vmem:[#allocation5 + $0xb8] sm:$0xff] %vm1087, %v2832
          %2865 = vst.msk [vmem:[#allocation5 + $0xc0] sm:$0xff] %vm1087, %v2833
          %2866 = vst.msk [vmem:[#allocation5 + $0xc8] sm:$0xff] %vm1087, %v2834
          %2867 = vst.msk [vmem:[#allocation5 + $0xd0] sm:$0xff] %vm1087, %v2835
          %2868 = vst.msk [vmem:[#allocation5 + $0xd8] sm:$0xff] %vm1087, %v2836
          %2869 = vst.msk [vmem:[#allocation5 + $0xe0] sm:$0xff] %vm1087, %v2837
          %2870 = vst.msk [vmem:[#allocation5 + $0xe8] sm:$0xff] %vm1087, %v2838
          %2871 = vst.msk [vmem:[#allocation5 + $0xf0] sm:$0xff] %vm1087, %v2839
          %2872 = vst.msk [vmem:[#allocation5 + $0xf8] sm:$0xff] %vm1087, %v2840
          %2873 = vst.msk [vmem:[#allocation3] sm:$0xff] %vm2228, %v1652
          %2874 = vst.msk [vmem:[#allocation3 + $0x8] sm:$0xff] %vm2228, %v1653
          %2875 = vst.msk [vmem:[#allocation3 + $0x10] sm:$0xff] %vm2228, %v1654
          %2876 = vst.msk [vmem:[#allocation3 + $0x18] sm:$0xff] %vm2228, %v1655
          %2877 = vst.msk [vmem:[#allocation3 + $0x20] sm:$0xff] %vm2228, %v1656
          %2878 = vst.msk [vmem:[#allocation3 + $0x28] sm:$0xff] %vm2228, %v1657
          %2879 = vst.msk [vmem:[#allocation3 + $0x30] sm:$0xff] %vm2228, %v1658
          %2880 = vst.msk [vmem:[#allocation3 + $0x38] sm:$0xff] %vm2228, %v1659
          %2881 = vst.msk [vmem:[#allocation3 + $0x40] sm:$0xff] %vm2228, %v1660
          %2882 = vst.msk [vmem:[#allocation3 + $0x48] sm:$0xff] %vm2228, %v1661
          %2883 = vst.msk [vmem:[#allocation3 + $0x50] sm:$0xff] %vm2228, %v1662
          %2884 = vst.msk [vmem:[#allocation3 + $0x58] sm:$0xff] %vm2228, %v1663
          %2885 = vst.msk [vmem:[#allocation3 + $0x60] sm:$0xff] %vm2228, %v1664
          %2886 = vst.msk [vmem:[#allocation3 + $0x68] sm:$0xff] %vm2228, %v1665
          %2887 = vst.msk [vmem:[#allocation3 + $0x70] sm:$0xff] %vm2228, %v1666
          %2888 = vst.msk [vmem:[#allocation3 + $0x78] sm:$0xff] %vm2228, %v1667
          %2889 = vst.msk [vmem:[#allocation3 + $0x80] sm:$0xff] %vm2228, %v1668
          %2890 = vst.msk [vmem:[#allocation3 + $0x88] sm:$0xff] %vm2228, %v1669
          %2891 = vst.msk [vmem:[#allocation3 + $0x90] sm:$0xff] %vm2228, %v1670
          %2892 = vst.msk [vmem:[#allocation3 + $0x98] sm:$0xff] %vm2228, %v1671
          %2893 = vst.msk [vmem:[#allocation3 + $0xa0] sm:$0xff] %vm2228, %v1672
          %2894 = vst.msk [vmem:[#allocation3 + $0xa8] sm:$0xff] %vm2228, %v1673
          %2895 = vst.msk [vmem:[#allocation3 + $0xb0] sm:$0xff] %vm2228, %v1674
          %2896 = vst.msk [vmem:[#allocation3 + $0xb8] sm:$0xff] %vm2228, %v1675
          %2897 = vst.msk [vmem:[#allocation3 + $0xc0] sm:$0xff] %vm2228, %v1676
          %2898 = vst.msk [vmem:[#allocation3 + $0xc8] sm:$0xff] %vm2228, %v1677
          %2899 = vst.msk [vmem:[#allocation3 + $0xd0] sm:$0xff] %vm2228, %v1678
          %2900 = vst.msk [vmem:[#allocation3 + $0xd8] sm:$0xff] %vm2228, %v1679
          %2901 = vst.msk [vmem:[#allocation3 + $0xe0] sm:$0xff] %vm2228, %v1680
          %2902 = vst.msk [vmem:[#allocation3 + $0xe8] sm:$0xff] %vm2228, %v1681
          %2903 = vst.msk [vmem:[#allocation3 + $0xf0] sm:$0xff] %vm2228, %v1682
          %2904 = vst.msk [vmem:[#allocation3 + $0xf8] sm:$0xff] %vm2228, %v1683
        $region80: #{tpu_custom_call.1} parent=51 // pred_fallthru
          _
        // Predicated region
        $region81: #{tpu_custom_call.1} parent=51 // pred_check
          _
        $region82: #{tpu_custom_call.1} parent=51 // pred_check_branch
          %2906 = sbr.rel (%p447) target = $region84
        $region83: #{tpu_custom_call.1} parent=51 // pred_region
          %v2907 = vld [vmem:[#allocation4] sm:$0xff]
          %v2908 = vld [vmem:[#allocation4 + $0x8] sm:$0xff]
          %v2909 = vld [vmem:[#allocation4 + $0x10] sm:$0xff]
          %v2910 = vld [vmem:[#allocation4 + $0x18] sm:$0xff]
          %v2911 = vld [vmem:[#allocation4 + $0x20] sm:$0xff]
          %v2912 = vld [vmem:[#allocation4 + $0x28] sm:$0xff]
          %v2913 = vld [vmem:[#allocation4 + $0x30] sm:$0xff]
          %v2914 = vld [vmem:[#allocation4 + $0x38] sm:$0xff]
          %v2915 = vld [vmem:[#allocation4 + $0x40] sm:$0xff]
          %v2916 = vld [vmem:[#allocation4 + $0x48] sm:$0xff]
          %v2917 = vld [vmem:[#allocation4 + $0x50] sm:$0xff]
          %v2918 = vld [vmem:[#allocation4 + $0x58] sm:$0xff]
          %v2919 = vld [vmem:[#allocation4 + $0x60] sm:$0xff]
          %v2920 = vld [vmem:[#allocation4 + $0x68] sm:$0xff]
          %v2921 = vld [vmem:[#allocation4 + $0x70] sm:$0xff]
          %v2922 = vld [vmem:[#allocation4 + $0x78] sm:$0xff]
          %v2923 = vld [vmem:[#allocation4 + $0x80] sm:$0xff]
          %v2924 = vld [vmem:[#allocation4 + $0x88] sm:$0xff]
          %v2925 = vld [vmem:[#allocation4 + $0x90] sm:$0xff]
          %v2926 = vld [vmem:[#allocation4 + $0x98] sm:$0xff]
          %v2927 = vld [vmem:[#allocation4 + $0xa0] sm:$0xff]
          %v2928 = vld [vmem:[#allocation4 + $0xa8] sm:$0xff]
          %v2929 = vld [vmem:[#allocation4 + $0xb0] sm:$0xff]
          %v2930 = vld [vmem:[#allocation4 + $0xb8] sm:$0xff]
          %v2931 = vld [vmem:[#allocation4 + $0xc0] sm:$0xff]
          %v2932 = vld [vmem:[#allocation4 + $0xc8] sm:$0xff]
          %v2933 = vld [vmem:[#allocation4 + $0xd0] sm:$0xff]
          %v2934 = vld [vmem:[#allocation4 + $0xd8] sm:$0xff]
          %v2935 = vld [vmem:[#allocation4 + $0xe0] sm:$0xff]
          %v2936 = vld [vmem:[#allocation4 + $0xe8] sm:$0xff]
          %v2937 = vld [vmem:[#allocation4 + $0xf0] sm:$0xff]
          %v2938 = vld [vmem:[#allocation4 + $0xf8] sm:$0xff]
          %v2939 = vrcp.pop %v2907
          %v2940 = vrcp.pop %v2908
          %v2941 = vrcp.pop %v2909
          %v2942 = vrcp.pop %v2910
          %v2943 = vrcp.pop %v2911
          %v2944 = vrcp.pop %v2912
          %v2945 = vrcp.pop %v2913
          %v2946 = vrcp.pop %v2914
          %v2947 = vrcp.pop %v2915
          %v2948 = vrcp.pop %v2916
          %v2949 = vrcp.pop %v2917
          %v2950 = vrcp.pop %v2918
          %v2951 = vrcp.pop %v2919
          %v2952 = vrcp.pop %v2920
          %v2953 = vrcp.pop %v2921
          %v2954 = vrcp.pop %v2922
          %v2955 = vrcp.pop %v2923
          %v2956 = vrcp.pop %v2924
          %v2957 = vrcp.pop %v2925
          %v2958 = vrcp.pop %v2926
          %v2959 = vrcp.pop %v2927
          %v2960 = vrcp.pop %v2928
          %v2961 = vrcp.pop %v2929
          %v2962 = vrcp.pop %v2930
          %v2963 = vrcp.pop %v2931
          %v2964 = vrcp.pop %v2932
          %v2965 = vrcp.pop %v2933
          %v2966 = vrcp.pop %v2934
          %v2967 = vrcp.pop %v2935
          %v2968 = vrcp.pop %v2936
          %v2969 = vrcp.pop %v2937
          %v2970 = vrcp.pop %v2938
          %v2971 = vld [vmem:[#allocation5] sm:$0xff]
          %v2972 = vld [vmem:[#allocation5 + $0x8] sm:$0xff]
          %v2973 = vld [vmem:[#allocation5 + $0x10] sm:$0xff]
          %v2974 = vld [vmem:[#allocation5 + $0x18] sm:$0xff]
          %v2975 = vld [vmem:[#allocation5 + $0x20] sm:$0xff]
          %v2976 = vld [vmem:[#allocation5 + $0x28] sm:$0xff]
          %v2977 = vld [vmem:[#allocation5 + $0x30] sm:$0xff]
          %v2978 = vld [vmem:[#allocation5 + $0x38] sm:$0xff]
          %v2979 = vld [vmem:[#allocation5 + $0x40] sm:$0xff]
          %v2980 = vld [vmem:[#allocation5 + $0x48] sm:$0xff]
          %v2981 = vld [vmem:[#allocation5 + $0x50] sm:$0xff]
          %v2982 = vld [vmem:[#allocation5 + $0x58] sm:$0xff]
          %v2983 = vld [vmem:[#allocation5 + $0x60] sm:$0xff]
          %v2984 = vld [vmem:[#allocation5 + $0x68] sm:$0xff]
          %v2985 = vld [vmem:[#allocation5 + $0x70] sm:$0xff]
          %v2986 = vld [vmem:[#allocation5 + $0x78] sm:$0xff]
          %v2987 = vld [vmem:[#allocation5 + $0x80] sm:$0xff]
          %v2988 = vld [vmem:[#allocation5 + $0x88] sm:$0xff]
          %v2989 = vld [vmem:[#allocation5 + $0x90] sm:$0xff]
          %v2990 = vld [vmem:[#allocation5 + $0x98] sm:$0xff]
          %v2991 = vld [vmem:[#allocation5 + $0xa0] sm:$0xff]
          %v2992 = vld [vmem:[#allocation5 + $0xa8] sm:$0xff]
          %v2993 = vld [vmem:[#allocation5 + $0xb0] sm:$0xff]
          %v2994 = vld [vmem:[#allocation5 + $0xb8] sm:$0xff]
          %v2995 = vld [vmem:[#allocation5 + $0xc0] sm:$0xff]
          %v2996 = vld [vmem:[#allocation5 + $0xc8] sm:$0xff]
          %v2997 = vld [vmem:[#allocation5 + $0xd0] sm:$0xff]
          %v2998 = vld [vmem:[#allocation5 + $0xd8] sm:$0xff]
          %v2999 = vld [vmem:[#allocation5 + $0xe0] sm:$0xff]
          %v3000 = vld [vmem:[#allocation5 + $0xe8] sm:$0xff]
          %v3001 = vld [vmem:[#allocation5 + $0xf0] sm:$0xff]
          %v3002 = vld [vmem:[#allocation5 + $0xf8] sm:$0xff]
          %3004 = vset.pattern.permute.xlu0 0
          %3005 = vperm.xlu0 %3004, %v2939
          %v3006 = vpop.permute.xlu0 %3005
          %3009 = vset.pattern.permute.xlu0 0
          %3010 = vperm.xlu0 %3009, %v2940
          %v3011 = vpop.permute.xlu0 %3010
          %3014 = vset.pattern.permute.xlu0 0
          %3015 = vperm.xlu0 %3014, %v2941
          %v3016 = vpop.permute.xlu0 %3015
          %3019 = vset.pattern.permute.xlu0 0
          %3020 = vperm.xlu0 %3019, %v2942
          %v3021 = vpop.permute.xlu0 %3020
          %3024 = vset.pattern.permute.xlu0 0
          %3025 = vperm.xlu0 %3024, %v2943
          %v3026 = vpop.permute.xlu0 %3025
          %3029 = vset.pattern.permute.xlu0 0
          %3030 = vperm.xlu0 %3029, %v2944
          %v3031 = vpop.permute.xlu0 %3030
          %3034 = vset.pattern.permute.xlu0 0
          %3035 = vperm.xlu0 %3034, %v2945
          %v3036 = vpop.permute.xlu0 %3035
          %3039 = vset.pattern.permute.xlu0 0
          %3040 = vperm.xlu0 %3039, %v2946
          %v3041 = vpop.permute.xlu0 %3040
          %3044 = vset.pattern.permute.xlu0 0
          %3045 = vperm.xlu0 %3044, %v2947
          %v3046 = vpop.permute.xlu0 %3045
          %3049 = vset.pattern.permute.xlu0 0
          %3050 = vperm.xlu0 %3049, %v2948
          %v3051 = vpop.permute.xlu0 %3050
          %3054 = vset.pattern.permute.xlu0 0
          %3055 = vperm.xlu0 %3054, %v2949
          %v3056 = vpop.permute.xlu0 %3055
          %3059 = vset.pattern.permute.xlu0 0
          %3060 = vperm.xlu0 %3059, %v2950
          %v3061 = vpop.permute.xlu0 %3060
          %3064 = vset.pattern.permute.xlu0 0
          %3065 = vperm.xlu0 %3064, %v2951
          %v3066 = vpop.permute.xlu0 %3065
          %3069 = vset.pattern.permute.xlu0 0
          %3070 = vperm.xlu0 %3069, %v2952
          %v3071 = vpop.permute.xlu0 %3070
          %3074 = vset.pattern.permute.xlu0 0
          %3075 = vperm.xlu0 %3074, %v2953
          %v3076 = vpop.permute.xlu0 %3075
          %3079 = vset.pattern.permute.xlu0 0
          %3080 = vperm.xlu0 %3079, %v2954
          %v3081 = vpop.permute.xlu0 %3080
          %3084 = vset.pattern.permute.xlu0 0
          %3085 = vperm.xlu0 %3084, %v2955
          %v3086 = vpop.permute.xlu0 %3085
          %3089 = vset.pattern.permute.xlu0 0
          %3090 = vperm.xlu0 %3089, %v2956
          %v3091 = vpop.permute.xlu0 %3090
          %3094 = vset.pattern.permute.xlu0 0
          %3095 = vperm.xlu0 %3094, %v2957
          %v3096 = vpop.permute.xlu0 %3095
          %3099 = vset.pattern.permute.xlu0 0
          %3100 = vperm.xlu0 %3099, %v2958
          %v3101 = vpop.permute.xlu0 %3100
          %3104 = vset.pattern.permute.xlu0 0
          %3105 = vperm.xlu0 %3104, %v2959
          %v3106 = vpop.permute.xlu0 %3105
          %3109 = vset.pattern.permute.xlu0 0
          %3110 = vperm.xlu0 %3109, %v2960
          %v3111 = vpop.permute.xlu0 %3110
          %3114 = vset.pattern.permute.xlu0 0
          %3115 = vperm.xlu0 %3114, %v2961
          %v3116 = vpop.permute.xlu0 %3115
          %3119 = vset.pattern.permute.xlu0 0
          %3120 = vperm.xlu0 %3119, %v2962
          %v3121 = vpop.permute.xlu0 %3120
          %3124 = vset.pattern.permute.xlu0 0
          %3125 = vperm.xlu0 %3124, %v2963
          %v3126 = vpop.permute.xlu0 %3125
          %3129 = vset.pattern.permute.xlu0 0
          %3130 = vperm.xlu0 %3129, %v2964
          %v3131 = vpop.permute.xlu0 %3130
          %3134 = vset.pattern.permute.xlu0 0
          %3135 = vperm.xlu0 %3134, %v2965
          %v3136 = vpop.permute.xlu0 %3135
          %3139 = vset.pattern.permute.xlu0 0
          %3140 = vperm.xlu0 %3139, %v2966
          %v3141 = vpop.permute.xlu0 %3140
          %3144 = vset.pattern.permute.xlu0 0
          %3145 = vperm.xlu0 %3144, %v2967
          %v3146 = vpop.permute.xlu0 %3145
          %3149 = vset.pattern.permute.xlu0 0
          %3150 = vperm.xlu0 %3149, %v2968
          %v3151 = vpop.permute.xlu0 %3150
          %3154 = vset.pattern.permute.xlu0 0
          %3155 = vperm.xlu0 %3154, %v2969
          %v3156 = vpop.permute.xlu0 %3155
          %3159 = vset.pattern.permute.xlu0 0
          %3160 = vperm.xlu0 %3159, %v2970
          %v3161 = vpop.permute.xlu0 %3160
          %v3163 = vmul.f32 %v2971, %v3006
          %v3164 = vmul.f32 %v2972, %v3011
          %v3165 = vmul.f32 %v2973, %v3016
          %v3166 = vmul.f32 %v2974, %v3021
          %v3167 = vmul.f32 %v2975, %v3026
          %v3168 = vmul.f32 %v2976, %v3031
          %v3169 = vmul.f32 %v2977, %v3036
          %v3170 = vmul.f32 %v2978, %v3041
          %v3171 = vmul.f32 %v2979, %v3046
          %v3172 = vmul.f32 %v2980, %v3051
          %v3173 = vmul.f32 %v2981, %v3056
          %v3174 = vmul.f32 %v2982, %v3061
          %v3175 = vmul.f32 %v2983, %v3066
          %v3176 = vmul.f32 %v2984, %v3071
          %v3177 = vmul.f32 %v2985, %v3076
          %v3178 = vmul.f32 %v2986, %v3081
          %v3179 = vmul.f32 %v2987, %v3086
          %v3180 = vmul.f32 %v2988, %v3091
          %v3181 = vmul.f32 %v2989, %v3096
          %v3182 = vmul.f32 %v2990, %v3101
          %v3183 = vmul.f32 %v2991, %v3106
          %v3184 = vmul.f32 %v2992, %v3111
          %v3185 = vmul.f32 %v2993, %v3116
          %v3186 = vmul.f32 %v2994, %v3121
          %v3187 = vmul.f32 %v2995, %v3126
          %v3188 = vmul.f32 %v2996, %v3131
          %v3189 = vmul.f32 %v2997, %v3136
          %v3190 = vmul.f32 %v2998, %v3141
          %v3191 = vmul.f32 %v2999, %v3146
          %v3192 = vmul.f32 %v3000, %v3151
          %v3193 = vmul.f32 %v3001, %v3156
          %v3194 = vmul.f32 %v3002, %v3161
          %3203 = vrot.lane.b32.xlu0 %v3171, 32
          %v3204 = vpop.permute.xlu0 %3203
          %3205 = vrot.lane.b32.xlu0 %v3172, 32
          %v3206 = vpop.permute.xlu0 %3205
          %3207 = vrot.lane.b32.xlu0 %v3173, 32
          %v3208 = vpop.permute.xlu0 %3207
          %3209 = vrot.lane.b32.xlu0 %v3174, 32
          %v3210 = vpop.permute.xlu0 %3209
          %3211 = vrot.lane.b32.xlu0 %v3175, 32
          %v3212 = vpop.permute.xlu0 %3211
          %3213 = vrot.lane.b32.xlu0 %v3176, 32
          %v3214 = vpop.permute.xlu0 %3213
          %3215 = vrot.lane.b32.xlu0 %v3177, 32
          %v3216 = vpop.permute.xlu0 %3215
          %3217 = vrot.lane.b32.xlu0 %v3178, 32
          %v3218 = vpop.permute.xlu0 %3217
          %3235 = vrot.lane.b32.xlu0 %v3179, 64
          %v3236 = vpop.permute.xlu0 %3235
          %3237 = vrot.lane.b32.xlu0 %v3180, 64
          %v3238 = vpop.permute.xlu0 %3237
          %3239 = vrot.lane.b32.xlu0 %v3181, 64
          %v3240 = vpop.permute.xlu0 %3239
          %3241 = vrot.lane.b32.xlu0 %v3182, 64
          %v3242 = vpop.permute.xlu0 %3241
          %3243 = vrot.lane.b32.xlu0 %v3183, 64
          %v3244 = vpop.permute.xlu0 %3243
          %3245 = vrot.lane.b32.xlu0 %v3184, 64
          %v3246 = vpop.permute.xlu0 %3245
          %3247 = vrot.lane.b32.xlu0 %v3185, 64
          %v3248 = vpop.permute.xlu0 %3247
          %3249 = vrot.lane.b32.xlu0 %v3186, 64
          %v3250 = vpop.permute.xlu0 %3249
          %3267 = vrot.lane.b32.xlu0 %v3187, 96
          %v3268 = vpop.permute.xlu0 %3267
          %3269 = vrot.lane.b32.xlu0 %v3188, 96
          %v3270 = vpop.permute.xlu0 %3269
          %3271 = vrot.lane.b32.xlu0 %v3189, 96
          %v3272 = vpop.permute.xlu0 %3271
          %3273 = vrot.lane.b32.xlu0 %v3190, 96
          %v3274 = vpop.permute.xlu0 %3273
          %3275 = vrot.lane.b32.xlu0 %v3191, 96
          %v3276 = vpop.permute.xlu0 %3275
          %3277 = vrot.lane.b32.xlu0 %v3192, 96
          %v3278 = vpop.permute.xlu0 %3277
          %3279 = vrot.lane.b32.xlu0 %v3193, 96
          %v3280 = vpop.permute.xlu0 %3279
          %3281 = vrot.lane.b32.xlu0 %v3194, 96
          %v3282 = vpop.permute.xlu0 %3281
          %vm3291 = vcmask 261120
          %v3292 = vsel %vm3291, %v3163, %v3204
          %v3293 = vsel %vm3291, %v3164, %v3206
          %v3294 = vsel %vm3291, %v3165, %v3208
          %v3295 = vsel %vm3291, %v3166, %v3210
          %v3296 = vsel %vm3291, %v3167, %v3212
          %v3297 = vsel %vm3291, %v3168, %v3214
          %v3298 = vsel %vm3291, %v3169, %v3216
          %v3299 = vsel %vm3291, %v3170, %v3218
          %vm3300 = vcmask 523264
          %v3301 = vsel %vm3300, %v3292, %v3236
          %v3302 = vsel %vm3300, %v3293, %v3238
          %v3303 = vsel %vm3300, %v3294, %v3240
          %v3304 = vsel %vm3300, %v3295, %v3242
          %v3305 = vsel %vm3300, %v3296, %v3244
          %v3306 = vsel %vm3300, %v3297, %v3246
          %v3307 = vsel %vm3300, %v3298, %v3248
          %v3308 = vsel %vm3300, %v3299, %v3250
          %vm3309 = vcmask 785408
          %v3310 = vsel %vm3309, %v3301, %v3268
          %v3311 = vsel %vm3309, %v3302, %v3270
          %v3312 = vsel %vm3309, %v3303, %v3272
          %v3313 = vsel %vm3309, %v3304, %v3274
          %v3314 = vsel %vm3309, %v3305, %v3276
          %v3315 = vsel %vm3309, %v3306, %v3278
          %v3316 = vsel %vm3309, %v3307, %v3280
          %v3317 = vsel %vm3309, %v3308, %v3282
          %v3318 = vpack.c.bf16 %v3311, %v3310
          %v3319 = vpack.c.bf16 %v3313, %v3312
          %v3320 = vpack.c.bf16 %v3315, %v3314
          %v3321 = vpack.c.bf16 %v3317, %v3316
          %v3322 = vld [vmem:[#allocation14] sm:$0xf]
          %v3323 = vld [vmem:[#allocation14 + $0x4] sm:$0xf]
          %v3324 = vld [vmem:[#allocation14 + $0x8] sm:$0xf]
          %v3325 = vld [vmem:[#allocation14 + $0xc] sm:$0xf]
          %v3326 = vld [vmem:[#allocation14 + $0x10] sm:$0xf]
          %v3327 = vld [vmem:[#allocation14 + $0x14] sm:$0xf]
          %v3328 = vld [vmem:[#allocation14 + $0x18] sm:$0xf]
          %v3329 = vld [vmem:[#allocation14 + $0x1c] sm:$0xf]
          %v3330 = vld [vmem:[#allocation14 + $0x20] sm:$0xf]
          %v3331 = vld [vmem:[#allocation14 + $0x24] sm:$0xf]
          %v3332 = vld [vmem:[#allocation14 + $0x28] sm:$0xf]
          %v3333 = vld [vmem:[#allocation14 + $0x2c] sm:$0xf]
          %v3334 = vld [vmem:[#allocation14 + $0x30] sm:$0xf]
          %v3335 = vld [vmem:[#allocation14 + $0x34] sm:$0xf]
          %v3336 = vld [vmem:[#allocation14 + $0x38] sm:$0xf]
          %v3337 = vld [vmem:[#allocation14 + $0x3c] sm:$0xf]
          %v3338 = vld [vmem:[%s7] sm:$0x1]
          %v3340 = vlaneseq
          %v3341 = vshrl.u32 %v3340, 7
          %v3342 = vsub.s32 0, %v3341
          %v3343 = vrot.slane %v3338, %v3342
          %v3361 = vunpack.c.l.b16 %v3322
          %v3362 = vunpack.c.l.b16 %v3323
          %v3363 = vunpack.c.l.b16 %v3324
          %v3364 = vunpack.c.l.b16 %v3325
          %v3365 = vunpack.c.l.b16 %v3326
          %v3366 = vunpack.c.l.b16 %v3327
          %v3367 = vunpack.c.l.b16 %v3328
          %v3368 = vunpack.c.l.b16 %v3329
          %v3369 = vunpack.c.l.b16 %v3330
          %v3370 = vunpack.c.l.b16 %v3331
          %v3371 = vunpack.c.l.b16 %v3332
          %v3372 = vunpack.c.l.b16 %v3333
          %v3373 = vunpack.c.l.b16 %v3334
          %v3374 = vunpack.c.l.b16 %v3335
          %v3375 = vunpack.c.l.b16 %v3336
          %v3376 = vunpack.c.l.b16 %v3337
          %v3377 = vpack.c.b16 %v3362, %v3361
          %v3378 = vpack.c.b16 %v3364, %v3363
          %v3379 = vpack.c.b16 %v3366, %v3365
          %v3380 = vpack.c.b16 %v3368, %v3367
          %v3381 = vpack.c.b16 %v3370, %v3369
          %v3382 = vpack.c.b16 %v3372, %v3371
          %v3383 = vpack.c.b16 %v3374, %v3373
          %v3384 = vpack.c.b16 %v3376, %v3375
          %3393 = vmatprep.subr.bf16.mxu0 0
          %3394 = vmatpush1.bf16.msra.mxu0 %v3377
          %3395 = vmatprep.subr.bf16.mxu0 0
          %3396 = vmatpush1.bf16.msra.mxu0 %v3378
          %3397 = vmatprep.subr.bf16.mxu0 0
          %3398 = vmatpush1.bf16.msra.mxu0 %v3379
          %3399 = vmatprep.subr.bf16.mxu0 0
          %3400 = vmatpush1.bf16.msra.mxu0 %v3380
          %3401 = vmatprep.subr.bf16.mxu0 0
          %3402 = vmatpush1.bf16.msra.mxu0 %v3381
          %3403 = vmatprep.subr.bf16.mxu0 0
          %3404 = vmatpush1.bf16.msra.mxu0 %v3382
          %3405 = vmatprep.subr.bf16.mxu0 0
          %3406 = vmatpush1.bf16.msra.mxu0 %v3383
          %3407 = vmatprep.subr.bf16.mxu0 0
          %3408 = vmatpush1.bf16.msra.mxu0 %v3384
          %3409 = vmatprep.subr.bf16.mxu0 0
          %3410 = vmatpush1.bf16.msra.mxu0 0
          %3411 = vmatprep.subr.bf16.mxu0 0
          %3412 = vmatpush1.bf16.msra.mxu0 0
          %3413 = vmatprep.subr.bf16.mxu0 0
          %3414 = vmatpush1.bf16.msra.mxu0 0
          %3415 = vmatprep.subr.bf16.mxu0 0
          %3416 = vmatpush1.bf16.msra.mxu0 0
          %3417 = vmatprep.subr.bf16.mxu0 0
          %3418 = vmatpush1.bf16.msra.mxu0 0
          %3419 = vmatprep.subr.bf16.mxu0 0
          %3420 = vmatpush1.bf16.msra.mxu0 0
          %3421 = vmatprep.subr.bf16.mxu0 0
          %3422 = vmatpush1.bf16.msra.mxu0 0
          %3423 = vmatprep.subr.bf16.mxu0 0
          %3424 = vmatpush1.bf16.msra.mxu0 0
          %3425 = vmatprep.mubr.bf16.mxu0 0
          %3426 = vmatmul.mubr.bf16.gmra.mrb[0].mxu0 %v3318
          %v3427 = vpop.f32.mrb[0].mxu0
          %v3428 = vadd.f32 %v3343, %v3427
          %v3429 = vpop.f32.mrb[0].mxu0
          %v3430 = vpop.f32.mrb[0].mxu0
          %v3431 = vadd.f32 %v3343, %v3430
          %v3432 = vpop.f32.mrb[0].mxu0
          %3433 = vmatprep.mubr.bf16.mxu0 0
          %3434 = vmatmul.mubr.bf16.gmra.mrb[0].mxu0 %v3319
          %v3435 = vpop.f32.mrb[0].mxu0
          %v3436 = vadd.f32 %v3343, %v3435
          %v3437 = vpop.f32.mrb[0].mxu0
          %v3438 = vpop.f32.mrb[0].mxu0
          %v3439 = vadd.f32 %v3343, %v3438
          %v3440 = vpop.f32.mrb[0].mxu0
          %3441 = vmatprep.mubr.bf16.mxu0 0
          %3442 = vmatmul.mubr.bf16.gmra.mrb[0].mxu0 %v3320
          %v3443 = vpop.f32.mrb[0].mxu0
          %v3444 = vadd.f32 %v3343, %v3443
          %v3445 = vpop.f32.mrb[0].mxu0
          %v3446 = vpop.f32.mrb[0].mxu0
          %v3447 = vadd.f32 %v3343, %v3446
          %v3448 = vpop.f32.mrb[0].mxu0
          %3449 = vmatprep.mubr.bf16.mxu0 0
          %3450 = vmatmul.mubr.bf16.gmra.mrb[0].mxu0 %v3321
          %v3451 = vpop.f32.mrb[0].mxu0
          %v3452 = vadd.f32 %v3343, %v3451
          %v3453 = vpop.f32.mrb[0].mxu0
          %v3454 = vpop.f32.mrb[0].mxu0
          %v3455 = vadd.f32 %v3343, %v3454
          %v3456 = vpop.f32.mrb[0].mxu0
          %3457 = vdwg.mxu0
          %3458 = vst [vmem:[%s435] sm:$0xff] %v3428
          %3459 = vst [vmem:[%s435 + $0x8] sm:$0xff] %v3431
          %3460 = vst [vmem:[%s435 + $0x10] sm:$0xff] %v3436
          %3461 = vst [vmem:[%s435 + $0x18] sm:$0xff] %v3439
          %3462 = vst [vmem:[%s435 + $0x20] sm:$0xff] %v3444
          %3463 = vst [vmem:[%s435 + $0x28] sm:$0xff] %v3447
          %3464 = vst [vmem:[%s435 + $0x30] sm:$0xff] %v3452
          %3465 = vst [vmem:[%s435 + $0x38] sm:$0xff] %v3455
        $region84: #{tpu_custom_call.1} parent=51 // pred_fallthru
          _
        %s3466 = sand.u32 %s240, 1
        %s3467 = scalar_lea.sflag [#allocation8], %s3466
        %s3468 = sand.u32 %s240, 1
        %s3469 = smul.addr %s3468, 64
        %s3470 = scalar_lea.vmem [#allocation15], %s3469
        // Predicated region
        $region85: #{tpu_custom_call.1} parent=51 // pred_check
          %p3471 = pneg %p250
        $region86: #{tpu_custom_call.1} parent=51 // pred_check_branch
          %3473 = sbr.rel (%p3471) target = $region88
        $region87: #{tpu_custom_call.1} parent=51 // pred_region
          %s3474 = smul.u32 8, %s35
          %s3476 = ssub.s32 1024, 1024
          %3477 = vsyncadd %s3467, %s3476
          %s3478 = smul.addr %s34, 16
          %s3479 = sadd.s32 %s3474, %s3478
          %s3480 = smul.addr %s3479, 128
          %s3481 = scalar_lea.hbm %s8, %s3480
          %s3482 = sshll.u32 %s3470, 4
          %s3483 = int_to_ptr.vmem [resolvable:$true] %s3482
          %3488 = dma.vmem_to_hbm [thread:$0]  %s3483, 1024, %s3481, %s3467, 128, 128, 8
        $region88: #{tpu_custom_call.1} parent=51 // pred_fallthru
          _
      $region52: #{tpu_custom_call.1} parent=5 // pred_fallthru
        _
      %p3489 = scmp.le.s32.totalorder 2, %s24
      // Predicated region
      $region89: #{tpu_custom_call.1} parent=5 // pred_check
        %p3490 = pneg %p3489
      $region90: #{tpu_custom_call.1} parent=5 // pred_check_branch
        %3492 = sbr.rel (%p3490) target = $region92
      $region91: #{tpu_custom_call.1} parent=5 // pred_region
        %s3493 = ssub.s32 %s24, 2
        // Predicated region
        $region93: #{tpu_custom_call.1} parent=91 // pred_check
          %p3494 = pneg %p256
        $region94: #{tpu_custom_call.1} parent=91 // pred_check_branch
          %3496 = sbr.rel (%p3494) target = $region96
        $region95: #{tpu_custom_call.1} parent=91 // pred_region
          %s3497 = sand.u32 %s241, 1
          %s3498 = scalar_lea.sflag [#allocation8], %s3497
          %s3499 = sand.u32 %s241, 1
          %s3500 = smul.addr %s3499, 64
          %s3501 = scalar_lea.vmem [#allocation15], %s3500
          %3502 = dma.done %s3498, 1024
        $region96: #{tpu_custom_call.1} parent=91 // pred_fallthru
          _
      $region92: #{tpu_custom_call.1} parent=5 // pred_fallthru
        _
    $region6: #{tpu_custom_call.1} parent=1 // loop_footer
      %s28 = sadd.s32 1, %s24
    $region7: #{tpu_custom_call.1} parent=1 // loop_footer_branch
      %23 = sbr.rel target = $region3
    $region8: #{tpu_custom_call.1} parent=1 // loop_exit
      _
    %3503 = vsyncpa [#allocation7], 1
    %s3504 = scalar_lea.sflag [#allocation7], 1
    %3505 = vsyncpa %s3504, 1
    %3506 = vsyncpa [#allocation10], 1
    %s3507 = scalar_lea.sflag [#allocation10], 1
    %3508 = vsyncpa %s3507, 1
    %3509 = vsyncpa [#allocation13], 1
    %3510 = vsyncpa [#allocation8], 1
    %s3511 = scalar_lea.sflag [#allocation8], 1
    %3512 = vsyncpa %s3511, 1

</llo_original>
